<compile_context>
chip_gen: v7x
topology: tpu7x:2x2x1
jax: 0.10.0
libtpu: 0.0.40
codegen_flags: <defaults>
</compile_context>

<pallas_src>
import jax
import jax.numpy as jnp
from jax.experimental import pallas as pl
from jax.experimental.pallas import tpu as pltpu


def _xception_eflow_kernel(
    x_ref,        # (bt, H,  W,  Cin)   f32   input block
    wm1_ref,      # (9, Cin, Cout)      bf16  merged dw1*pw1 weights, one per 3x3 tap
    wm2_ref,      # (9, Cout, Cout)     bf16  merged dw2*pw2 weights
    sk_ref,       # (Cin, Cout)         bf16  skip 1x1 weights
    bn_ref,       # (6, Cout)           f32   rows = [s1, t1, s2, t2, s3, t3]
    out_ref,      # (bt, Ho, Wo, Cout)  f32
    pad_in_ref,   # scratch (bt, H+2, W+2, Cin)  f32
    pad_mid_ref,  # scratch (bt, H+2, W+2, Cout) f32
    cm_ref,       # scratch (bt, H, Wo, Cout)    f32  (pool column-max)
):
    bt, H, W, Cin = x_ref.shape
    _, Ho, Wo, Cout = out_ref.shape
    m = bt * H * W

    bn = bn_ref[...]
    wm1 = wm1_ref[...]
    wm2 = wm2_ref[...]

    # ---- zero borders (re-done every step: scratch is per-core when the grid
    #      axis is "parallel", so a program_id==0 one-shot init is unsafe) ----
    pad_in_ref[:, 0:1, :, :] = jnp.zeros((bt, 1, W + 2, Cin), jnp.float32)
    pad_in_ref[:, H + 1:H + 2, :, :] = jnp.zeros((bt, 1, W + 2, Cin), jnp.float32)
    pad_in_ref[:, 1:H + 1, 0:1, :] = jnp.zeros((bt, H, 1, Cin), jnp.float32)
    pad_in_ref[:, 1:H + 1, W + 1:W + 2, :] = jnp.zeros((bt, H, 1, Cin), jnp.float32)
    pad_mid_ref[:, 0:1, :, :] = jnp.zeros((bt, 1, W + 2, Cout), jnp.float32)
    pad_mid_ref[:, H + 1:H + 2, :, :] = jnp.zeros((bt, 1, W + 2, Cout), jnp.float32)
    pad_mid_ref[:, 1:H + 1, 0:1, :] = jnp.zeros((bt, H, 1, Cout), jnp.float32)
    pad_mid_ref[:, 1:H + 1, W + 1:W + 2, :] = jnp.zeros((bt, H, 1, Cout), jnp.float32)

    # ---- sepconv #1: 3x3 depthwise + 1x1 pointwise fused into 9 MXU matmuls.
    #      Per dx only ONE sublane-misaligned load; dy shift is a free dim-1 slice.
    pad_in_ref[:, 1:H + 1, 1:W + 1, :] = x_ref[...]
    acc = jnp.zeros((m, Cout), jnp.float32)
    for dx in range(3):
        col = pad_in_ref[:, :, dx:dx + W, :].astype(jnp.bfloat16)      # (bt, H+2, W, Cin)
        for dy in range(3):
            tap = col[:, dy:dy + H, :, :].reshape(m, Cin)
            acc = acc + jnp.dot(tap, wm1[3 * dy + dx],
                                preferred_element_type=jnp.float32)

    # ---- skip branch: 1x1 conv stride 2 (+folded BN).  pad_in is free after the
    #      dw1 reads; reuse its interior as a staging slab so both stride-2
    #      subsamplings are plain single-dim strided ref reads (no HBM xs input).
    xh = x_ref[:, pl.ds(0, Ho, 2), :, :]                               # rows 0,2,...
    pad_in_ref[:, 1:Ho + 1, 1:W + 1, :] = xh
    xs = pad_in_ref[:, 1:Ho + 1, pl.ds(1, Wo, 2), :]                   # cols 0,2,...
    skip = jnp.dot(xs.reshape(bt * Ho * Wo, Cin).astype(jnp.bfloat16), sk_ref[...],
                   preferred_element_type=jnp.float32)
    skip = (skip * bn[4:5, :] + bn[5:6, :]).reshape(bt, Ho, Wo, Cout)

    # ---- BN1 + ReLU, stage for sepconv #2 ----
    h = jnp.maximum(acc * bn[0:1, :] + bn[1:2, :], 0.0)
    pad_mid_ref[:, 1:H + 1, 1:W + 1, :] = h.reshape(bt, H, W, Cout)

    # ---- sepconv #2 (same fused scheme) + BN2 (no ReLU) ----
    acc2 = jnp.zeros((m, Cout), jnp.float32)
    for dx in range(3):
        col = pad_mid_ref[:, :, dx:dx + W, :].astype(jnp.bfloat16)
        for dy in range(3):
            tap = col[:, dy:dy + H, :, :].reshape(m, Cout)
            acc2 = acc2 + jnp.dot(tap, wm2[3 * dy + dx],
                                  preferred_element_type=jnp.float32)
    h2 = acc2 * bn[2:3, :] + bn[3:4, :]

    # ---- MaxPool 3x3 / stride 2 / pad 1: separable, windows clipped at the edge
    #      (no NEG_BIG border rewrite, half-width colmax scratch, no writeback of
    #      the colmax into the padded buffer). Requires even H, W. ----
    pad_mid_ref[:, 1:H + 1, 1:W + 1, :] = h2.reshape(bt, H, W, Cout)
    c0 = pad_mid_ref[:, 1:H + 1, pl.ds(1, Wo, 2), :]                   # cols 2j
    c1 = pad_mid_ref[:, 1:H + 1, pl.ds(2, Wo, 2), :]                   # cols 2j+1
    cm01 = jnp.maximum(c0, c1)
    cm_ref[:, :, 0:1, :] = cm01[:, :, 0:1, :]
    if Wo > 1:  # col 2j-1 (= previous odd col) for j >= 1
        cm_ref[:, :, 1:Wo, :] = jnp.maximum(cm01[:, :, 1:Wo, :], c1[:, :, 0:Wo - 1, :])

    r0 = cm_ref[:, pl.ds(0, Ho, 2), :, :]                              # rows 2i
    r1 = cm_ref[:, pl.ds(1, Ho, 2), :, :]                              # rows 2i+1
    p01 = jnp.maximum(r0, r1)
    out_ref[:, 0:1, :, :] = (p01[:, 0:1, :, :] + skip[:, 0:1, :, :]).astype(out_ref.dtype)
    if Ho > 1:  # row 2i-1 (= previous odd row) for i >= 1
        out_ref[:, 1:Ho, :, :] = (jnp.maximum(p01[:, 1:Ho, :, :], r1[:, 0:Ho - 1, :, :])
                                  + skip[:, 1:Ho, :, :]).astype(out_ref.dtype)


def _fold_params(params, eps=1e-5):
    """Fold conv biases + BN into scale/shift and merge dw*pw per-tap weights."""
    def bn_fold(g, b, m, v):
        s = g / jnp.sqrt(v + eps)
        return s, b - m * s

    Cin = params["dw1_w"].shape[0]
    Cout = params["pw1_w"].shape[0]

    dw1 = jnp.transpose(params["dw1_w"][:, 0], (1, 2, 0)).reshape(9, Cin)   # (9, Cin)
    pw1 = params["pw1_w"][:, :, 0, 0].T                                     # (Cin, Cout)
    s1, t1 = bn_fold(params["bn1_g"], params["bn1_b"], params["bn1_m"], params["bn1_v"])
    t1 = s1 * (params["dw1_b"] @ pw1 + params["pw1_b"]) + t1
    wm1 = (dw1[:, :, None] * pw1[None, :, :]).astype(jnp.bfloat16)          # (9, Cin, Cout)

    dw2 = jnp.transpose(params["dw2_w"][:, 0], (1, 2, 0)).reshape(9, Cout)
    pw2 = params["pw2_w"][:, :, 0, 0].T                                     # (Cout, Cout)
    s2, t2 = bn_fold(params["bn2_g"], params["bn2_b"], params["bn2_m"], params["bn2_v"])
    t2 = s2 * (params["dw2_b"] @ pw2 + params["pw2_b"]) + t2
    wm2 = (dw2[:, :, None] * pw2[None, :, :]).astype(jnp.bfloat16)

    sk = params["sk_w"][:, :, 0, 0].T                                       # (Cin, Cout)
    s3, t3 = bn_fold(params["bn3_g"], params["bn3_b"], params["bn3_m"], params["bn3_v"])
    t3 = s3 * params["sk_b"] + t3

    bn = jnp.stack([s1, t1, s2, t2, s3, t3], axis=0).astype(jnp.float32)    # (6, Cout)
    return dict(wm1=wm1, wm2=wm2, sk_w=sk.astype(jnp.bfloat16), bn=bn)


def _full_spec(a):
    nd = a.ndim
    return pl.BlockSpec(a.shape, lambda g, _nd=nd: (0,) * _nd)


def xception_eflow_block_nhwc(x_nhwc, params, *, batch_tile=None):
    """x_nhwc: (B, H, W, Cin) float32 -> (B, Ho, Wo, Cout) float32 (NHWC)."""
    B, H, W, Cin = x_nhwc.shape
    assert H % 2 == 0 and W % 2 == 0, "kernel assumes even spatial dims"
    Cout = params["pw1_w"].shape[0]
    Ho, Wo = H // 2, W // 2

    x_nhwc = x_nhwc.astype(jnp.float32)
    p = _fold_params(params)
    param_args = [p["wm1"], p["wm2"], p["sk_w"], p["bn"]]
    param_bytes = sum(int(a.size) * a.dtype.itemsize for a in param_args)

    def per_step_bytes(bt):
        scratch = 4 * bt * ((H + 2) * (W + 2) * (Cin + Cout) + H * Wo * Cout)
        blocks = 4 * bt * (2 * H * W * Cin + 2 * Ho * Wo * Cout)   # double-buffered x / out
        return scratch + blocks + 2 * param_bytes

    # Generation-aware VMEM budget.
    try:
        cap = int(getattr(pltpu.get_tpu_info(), "vmem_capacity_bytes", 64 << 20))
    except Exception:
        cap = 64 << 20
    budget = min(cap // 2, 48 << 20)

    if batch_tile is None:
        # Keep >= 2 grid steps so the "parallel" axis can feed both TensorCores
        # on 2-core parts; within that, take the biggest batch divisor that fits.
        cap_bt = B if B < 2 else B // 2
        batch_tile = 1
        for d in range(1, cap_bt + 1):
            if B % d == 0 and per_step_bytes(d) <= budget:
                batch_tile = d
    bt = batch_tile
    assert B % bt == 0, (B, bt)

    vmem_limit = int(min(cap * 3 // 4, max(32 << 20, 2 * per_step_bytes(bt))))

    in_specs = [pl.BlockSpec((bt, H, W, Cin), lambda g: (g, 0, 0, 0))] + \
               [_full_spec(a) for a in param_args]

    out = pl.pallas_call(
        _xception_eflow_kernel,
        out_shape=jax.ShapeDtypeStruct((B, Ho, Wo, Cout), jnp.float32),
        grid=(B // bt,),
        in_specs=in_specs,
        out_specs=pl.BlockSpec((bt, Ho, Wo, Cout), lambda g: (g, 0, 0, 0)),
        scratch_shapes=[
            pltpu.VMEM((bt, H + 2, W + 2, Cin), jnp.float32),
            pltpu.VMEM((bt, H + 2, W + 2, Cout), jnp.float32),
            pltpu.VMEM((bt, H, Wo, Cout), jnp.float32),
        ],
        compiler_params=pltpu.CompilerParams(
            dimension_semantics=("parallel",),
            vmem_limit_bytes=vmem_limit,
        ),
    )(x_nhwc, *param_args)
    return out


def xception_eflow_block(x_nchw, params, **kw):
    """NCHW adapter matching the PyTorch module layout: (B, Cin, H, W) -> (B, Cout, Ho, Wo)."""
    x_nhwc = jnp.transpose(x_nchw, (0, 2, 3, 1))
    out = xception_eflow_block_nhwc(x_nhwc, params, **kw)
    return jnp.transpose(out, (0, 3, 1, 2))


def init_params(key, Cin, Cout):
    ks = jax.random.split(key, 24)
    n, u = jax.random.normal, jax.random.uniform
    p = {}
    p["dw1_w"] = 0.3 * n(ks[0], (Cin, 1, 3, 3), jnp.float32)
    p["dw1_b"] = 0.1 * n(ks[1], (Cin,), jnp.float32)
    p["pw1_w"] = 0.3 * n(ks[2], (Cout, Cin, 1, 1), jnp.float32)
    p["pw1_b"] = 0.1 * n(ks[3], (Cout,), jnp.float32)
    p["bn1_g"] = 1.0 + 0.1 * n(ks[4], (Cout,), jnp.float32)
    p["bn1_b"] = 0.1 * n(ks[5], (Cout,), jnp.float32)
    p["bn1_m"] = 0.1 * n(ks[6], (Cout,), jnp.float32)
    p["bn1_v"] = u(ks[7], (Cout,), jnp.float32, 0.5, 1.5)
    p["dw2_w"] = 0.3 * n(ks[8], (Cout, 1, 3, 3), jnp.float32)
    p["dw2_b"] = 0.1 * n(ks[9], (Cout,), jnp.float32)
    p["pw2_w"] = 0.3 * n(ks[10], (Cout, Cout, 1, 1), jnp.float32)
    p["pw2_b"] = 0.1 * n(ks[11], (Cout,), jnp.float32)
    p["bn2_g"] = 1.0 + 0.1 * n(ks[12], (Cout,), jnp.float32)
    p["bn2_b"] = 0.1 * n(ks[13], (Cout,), jnp.float32)
    p["bn2_m"] = 0.1 * n(ks[14], (Cout,), jnp.float32)
    p["bn2_v"] = u(ks[15], (Cout,), jnp.float32, 0.5, 1.5)
    p["sk_w"] = 0.3 * n(ks[16], (Cout, Cin, 1, 1), jnp.float32)
    p["sk_b"] = 0.1 * n(ks[17], (Cout,), jnp.float32)
    p["bn3_g"] = 1.0 + 0.1 * n(ks[18], (Cout,), jnp.float32)
    p["bn3_b"] = 0.1 * n(ks[19], (Cout,), jnp.float32)
    p["bn3_m"] = 0.1 * n(ks[20], (Cout,), jnp.float32)
    p["bn3_v"] = u(ks[21], (Cout,), jnp.float32, 0.5, 1.5)
    return p


def reference_forward(x, p):
    """Pure-JAX (XLA) reference of the PyTorch forward, NCHW, eval-mode BN."""
    eps = 1e-5

    def bn(h, g, b, m, v):
        s = g / jnp.sqrt(v + eps)
        return h * s[None, :, None, None] + (b - m * s)[None, :, None, None]

    def conv(h, w, b, stride, pad, groups=1):
        o = jax.lax.conv_general_dilated(
            h, w, (stride, stride), pad,
            dimension_numbers=("NCHW", "OIHW", "NCHW"),
            feature_group_count=groups)
        return o + b[None, :, None, None]

    Cin = x.shape[1]
    Cout = p["pw1_w"].shape[0]
    h = conv(x, p["dw1_w"], p["dw1_b"], 1, [(1, 1), (1, 1)], groups=Cin)
    h = conv(h, p["pw1_w"], p["pw1_b"], 1, [(0, 0), (0, 0)])
    h = jnp.maximum(bn(h, p["bn1_g"], p["bn1_b"], p["bn1_m"], p["bn1_v"]), 0.0)
    h = conv(h, p["dw2_w"], p["dw2_b"], 1, [(1, 1), (1, 1)], groups=Cout)
    h = conv(h, p["pw2_w"], p["pw2_b"], 1, [(0, 0), (0, 0)])
    h = bn(h, p["bn2_g"], p["bn2_b"], p["bn2_m"], p["bn2_v"])
    h = jax.lax.reduce_window(h, -jnp.inf, jax.lax.max,
                              (1, 1, 3, 3), (1, 1, 2, 2),
                              [(0, 0), (0, 0), (1, 1), (1, 1)])
    s = conv(x, p["sk_w"], p["sk_b"], 2, [(0, 0), (0, 0)])
    s = bn(s, p["bn3_g"], p["bn3_b"], p["bn3_m"], p["bn3_v"])
    return h + s


if __name__ == "__main__":
    key = jax.random.PRNGKey(0)
    kx, kp = jax.random.split(key)
    B, Cin, Cout, H, W = 2, 4, 8, 16, 16

    x = jax.random.normal(kx, (B, Cin, H, W), jnp.float32)
    params = init_params(kp, Cin, Cout)

    out = jax.block_until_ready(xception_eflow_block(x, params))
    ref = reference_forward(x, params)

    assert out.shape == ref.shape, (out.shape, ref.shape)
    # tolerance accounts for bf16 MXU operands (merged sepconv taps + pointwise/skip),
    # all accumulated in f32
    err = float(jnp.max(jnp.abs(out - ref)))
    assert bool(jnp.allclose(out, ref, rtol=2.5e-2, atol=2.5e-2)), err

    print("KERNEL_OK")
</pallas_src>

<mosaic_0001>
module attributes {stable_mosaic.version = 11 : i64} {
  func.func @_xception_eflow_kernel(%arg0: i32, %arg1: memref<1x16x16x4xf32, #tpu.memory_space<vmem>>, %arg2: memref<9x4x8xbf16, #tpu.memory_space<vmem>>, %arg3: memref<9x8x8xbf16, #tpu.memory_space<vmem>>, %arg4: memref<4x8xbf16, #tpu.memory_space<vmem>>, %arg5: memref<6x8xf32, #tpu.memory_space<vmem>>, %arg6: memref<1x8x8x8xf32, #tpu.memory_space<vmem>>, %arg7: memref<1x18x18x4xf32, #tpu.memory_space<vmem>>, %arg8: memref<1x18x18x8xf32, #tpu.memory_space<vmem>>, %arg9: memref<1x16x8x8xf32, #tpu.memory_space<vmem>>) attributes {dimension_semantics = [#tpu.dimension_semantics<parallel>], iteration_bounds = array<i64: 2>, scalar_prefetch = 0 : i64, scratch_operands = 3 : i64, tpu.core_type = #tpu.core_type<tc>, window_params = [{transform_indices = @transform_0, window_bounds = array<i64: 1, 16, 16, 4>}, {pipeline_mode = #tpu.pipeline_mode<synchronous>, transform_indices = @transform_1, window_bounds = array<i64: 9, 4, 8>}, {pipeline_mode = #tpu.pipeline_mode<synchronous>, transform_indices = @transform_2, window_bounds = array<i64: 9, 8, 8>}, {pipeline_mode = #tpu.pipeline_mode<synchronous>, transform_indices = @transform_3, window_bounds = array<i64: 4, 8>}, {pipeline_mode = #tpu.pipeline_mode<synchronous>, transform_indices = @transform_4, window_bounds = array<i64: 6, 8>}, {transform_indices = @transform_5, window_bounds = array<i64: 1, 8, 8, 8>}]} {
    %c0 = arith.constant 0 : index
    %c0_0 = arith.constant 0 : index
    %0 = vector.load %arg5[%c0, %c0_0] : memref<6x8xf32, #tpu.memory_space<vmem>>, vector<6x8xf32>
    %c0_1 = arith.constant 0 : index
    %c0_2 = arith.constant 0 : index
    %c0_3 = arith.constant 0 : index
    %1 = vector.load %arg2[%c0_1, %c0_2, %c0_3] : memref<9x4x8xbf16, #tpu.memory_space<vmem>>, vector<9x4x8xbf16>
    %c0_4 = arith.constant 0 : index
    %c0_5 = arith.constant 0 : index
    %c0_6 = arith.constant 0 : index
    %2 = vector.load %arg3[%c0_4, %c0_5, %c0_6] : memref<9x8x8xbf16, #tpu.memory_space<vmem>>, vector<9x8x8xbf16>
    %cst = arith.constant 0.000000e+00 : f32
    %3 = vector.broadcast %cst : f32 to vector<1x1x18x4xf32>
    %c0_7 = arith.constant 0 : index
    %c0_8 = arith.constant 0 : index
    %c0_9 = arith.constant 0 : index
    %c0_10 = arith.constant 0 : index
    %4 = vector.load %arg7[%c0_7, %c0_8, %c0_9, %c0_10] : memref<1x18x18x4xf32, #tpu.memory_space<vmem>>, vector<1x1x18x4xf32>
    tpu.vector_store %arg7[%c0_7, %c0_8, %c0_9, %c0_10], %3 {strides = array<i32>} : memref<1x18x18x4xf32, #tpu.memory_space<vmem>>, vector<1x1x18x4xf32>,
    %cst_11 = arith.constant 0.000000e+00 : f32
    %5 = vector.broadcast %cst_11 : f32 to vector<1x1x18x4xf32>
    %c0_12 = arith.constant 0 : index
    %c17 = arith.constant 17 : index
    %c0_13 = arith.constant 0 : index
    %c0_14 = arith.constant 0 : index
    %6 = vector.load %arg7[%c0_12, %c17, %c0_13, %c0_14] : memref<1x18x18x4xf32, #tpu.memory_space<vmem>>, vector<1x1x18x4xf32>
    tpu.vector_store %arg7[%c0_12, %c17, %c0_13, %c0_14], %5 {strides = array<i32>} : memref<1x18x18x4xf32, #tpu.memory_space<vmem>>, vector<1x1x18x4xf32>,
    %cst_15 = arith.constant 0.000000e+00 : f32
    %7 = vector.broadcast %cst_15 : f32 to vector<1x16x1x4xf32>
    %c0_16 = arith.constant 0 : index
    %c1 = arith.constant 1 : index
    %c0_17 = arith.constant 0 : index
    %c0_18 = arith.constant 0 : index
    %8 = vector.load %arg7[%c0_16, %c1, %c0_17, %c0_18] : memref<1x18x18x4xf32, #tpu.memory_space<vmem>>, vector<1x16x1x4xf32>
    tpu.vector_store %arg7[%c0_16, %c1, %c0_17, %c0_18], %7 {strides = array<i32>} : memref<1x18x18x4xf32, #tpu.memory_space<vmem>>, vector<1x16x1x4xf32>,
    %cst_19 = arith.constant 0.000000e+00 : f32
    %9 = vector.broadcast %cst_19 : f32 to vector<1x16x1x4xf32>
    %c0_20 = arith.constant 0 : index
    %c1_21 = arith.constant 1 : index
    %c17_22 = arith.constant 17 : index
    %c0_23 = arith.constant 0 : index
    %10 = vector.load %arg7[%c0_20, %c1_21, %c17_22, %c0_23] : memref<1x18x18x4xf32, #tpu.memory_space<vmem>>, vector<1x16x1x4xf32>
    tpu.vector_store %arg7[%c0_20, %c1_21, %c17_22, %c0_23], %9 {strides = array<i32>} : memref<1x18x18x4xf32, #tpu.memory_space<vmem>>, vector<1x16x1x4xf32>,
    %cst_24 = arith.constant 0.000000e+00 : f32
    %11 = vector.broadcast %cst_24 : f32 to vector<1x1x18x8xf32>
    %c0_25 = arith.constant 0 : index
    %c0_26 = arith.constant 0 : index
    %c0_27 = arith.constant 0 : index
    %c0_28 = arith.constant 0 : index
    %12 = vector.load %arg8[%c0_25, %c0_26, %c0_27, %c0_28] : memref<1x18x18x8xf32, #tpu.memory_space<vmem>>, vector<1x1x18x8xf32>
    tpu.vector_store %arg8[%c0_25, %c0_26, %c0_27, %c0_28], %11 {strides = array<i32>} : memref<1x18x18x8xf32, #tpu.memory_space<vmem>>, vector<1x1x18x8xf32>,
    %cst_29 = arith.constant 0.000000e+00 : f32
    %13 = vector.broadcast %cst_29 : f32 to vector<1x1x18x8xf32>
    %c0_30 = arith.constant 0 : index
    %c17_31 = arith.constant 17 : index
    %c0_32 = arith.constant 0 : index
    %c0_33 = arith.constant 0 : index
    %14 = vector.load %arg8[%c0_30, %c17_31, %c0_32, %c0_33] : memref<1x18x18x8xf32, #tpu.memory_space<vmem>>, vector<1x1x18x8xf32>
    tpu.vector_store %arg8[%c0_30, %c17_31, %c0_32, %c0_33], %13 {strides = array<i32>} : memref<1x18x18x8xf32, #tpu.memory_space<vmem>>, vector<1x1x18x8xf32>,
    %cst_34 = arith.constant 0.000000e+00 : f32
    %15 = vector.broadcast %cst_34 : f32 to vector<1x16x1x8xf32>
    %c0_35 = arith.constant 0 : index
    %c1_36 = arith.constant 1 : index
    %c0_37 = arith.constant 0 : index
    %c0_38 = arith.constant 0 : index
    %16 = vector.load %arg8[%c0_35, %c1_36, %c0_37, %c0_38] : memref<1x18x18x8xf32, #tpu.memory_space<vmem>>, vector<1x16x1x8xf32>
    tpu.vector_store %arg8[%c0_35, %c1_36, %c0_37, %c0_38], %15 {strides = array<i32>} : memref<1x18x18x8xf32, #tpu.memory_space<vmem>>, vector<1x16x1x8xf32>,
    %cst_39 = arith.constant 0.000000e+00 : f32
    %17 = vector.broadcast %cst_39 : f32 to vector<1x16x1x8xf32>
    %c0_40 = arith.constant 0 : index
    %c1_41 = arith.constant 1 : index
    %c17_42 = arith.constant 17 : index
    %c0_43 = arith.constant 0 : index
    %18 = vector.load %arg8[%c0_40, %c1_41, %c17_42, %c0_43] : memref<1x18x18x8xf32, #tpu.memory_space<vmem>>, vector<1x16x1x8xf32>
    tpu.vector_store %arg8[%c0_40, %c1_41, %c17_42, %c0_43], %17 {strides = array<i32>} : memref<1x18x18x8xf32, #tpu.memory_space<vmem>>, vector<1x16x1x8xf32>,
    %c0_44 = arith.constant 0 : index
    %c0_45 = arith.constant 0 : index
    %c0_46 = arith.constant 0 : index
    %c0_47 = arith.constant 0 : index
    %19 = vector.load %arg1[%c0_44, %c0_45, %c0_46, %c0_47] : memref<1x16x16x4xf32, #tpu.memory_space<vmem>>, vector<1x16x16x4xf32>
    %c0_48 = arith.constant 0 : index
    %c1_49 = arith.constant 1 : index
    %c1_50 = arith.constant 1 : index
    %c0_51 = arith.constant 0 : index
    %20 = vector.load %arg7[%c0_48, %c1_49, %c1_50, %c0_51] : memref<1x18x18x4xf32, #tpu.memory_space<vmem>>, vector<1x16x16x4xf32>
    tpu.vector_store %arg7[%c0_48, %c1_49, %c1_50, %c0_51], %19 {strides = array<i32>} : memref<1x18x18x4xf32, #tpu.memory_space<vmem>>, vector<1x16x16x4xf32>,
    %cst_52 = arith.constant 0.000000e+00 : f32
    %21 = vector.broadcast %cst_52 : f32 to vector<256x8xf32>
    %c0_53 = arith.constant 0 : index
    %c0_54 = arith.constant 0 : index
    %c0_55 = arith.constant 0 : index
    %c0_56 = arith.constant 0 : index
    %22 = vector.load %arg7[%c0_53, %c0_54, %c0_55, %c0_56] : memref<1x18x18x4xf32, #tpu.memory_space<vmem>>, vector<1x18x16x4xf32>
    %23 = arith.truncf %22 : vector<1x18x16x4xf32> to vector<1x18x16x4xbf16>
    %24 = vector.extract_strided_slice %23 {offsets = [0, 0, 0, 0], sizes = [1, 16, 16, 4], strides = [1, 1, 1, 1]} : vector<1x18x16x4xbf16> to vector<1x16x16x4xbf16>
    %25 = vector.shape_cast %24 : vector<1x16x16x4xbf16> to vector<256x4xbf16>
    %26 = vector.extract_strided_slice %1 {offsets = [0, 0, 0], sizes = [1, 4, 8], strides = [1, 1, 1]} : vector<9x4x8xbf16> to vector<1x4x8xbf16>
    %27 = vector.shape_cast %26 : vector<1x4x8xbf16> to vector<4x8xbf16>
    %cst_57 = arith.constant dense<0.000000e+00> : vector<256x8xf32>
    %28 = tpu.matmul %25, %27, %cst_57 {dimension_numbers = #tpu.dot_dimension_numbers<[1], [0], [0], [1], [0, 0, 1, 1], [], []>} : vector<256x4xbf16>, vector<4x8xbf16>, vector<256x8xf32> -> vector<256x8xf32>
    %29 = arith.addf %21, %28 : vector<256x8xf32>
    %30 = vector.extract_strided_slice %23 {offsets = [0, 1, 0, 0], sizes = [1, 16, 16, 4], strides = [1, 1, 1, 1]} : vector<1x18x16x4xbf16> to vector<1x16x16x4xbf16>
    %31 = vector.shape_cast %30 : vector<1x16x16x4xbf16> to vector<256x4xbf16>
    %32 = vector.extract_strided_slice %1 {offsets = [3, 0, 0], sizes = [1, 4, 8], strides = [1, 1, 1]} : vector<9x4x8xbf16> to vector<1x4x8xbf16>
    %33 = vector.shape_cast %32 : vector<1x4x8xbf16> to vector<4x8xbf16>
    %cst_58 = arith.constant dense<0.000000e+00> : vector<256x8xf32>
    %34 = tpu.matmul %31, %33, %cst_58 {dimension_numbers = #tpu.dot_dimension_numbers<[1], [0], [0], [1], [0, 0, 1, 1], [], []>} : vector<256x4xbf16>, vector<4x8xbf16>, vector<256x8xf32> -> vector<256x8xf32>
    %35 = arith.addf %29, %34 : vector<256x8xf32>
    %36 = vector.extract_strided_slice %23 {offsets = [0, 2, 0, 0], sizes = [1, 16, 16, 4], strides = [1, 1, 1, 1]} : vector<1x18x16x4xbf16> to vector<1x16x16x4xbf16>
    %37 = vector.shape_cast %36 : vector<1x16x16x4xbf16> to vector<256x4xbf16>
    %38 = vector.extract_strided_slice %1 {offsets = [6, 0, 0], sizes = [1, 4, 8], strides = [1, 1, 1]} : vector<9x4x8xbf16> to vector<1x4x8xbf16>
    %39 = vector.shape_cast %38 : vector<1x4x8xbf16> to vector<4x8xbf16>
    %cst_59 = arith.constant dense<0.000000e+00> : vector<256x8xf32>
    %40 = tpu.matmul %37, %39, %cst_59 {dimension_numbers = #tpu.dot_dimension_numbers<[1], [0], [0], [1], [0, 0, 1, 1], [], []>} : vector<256x4xbf16>, vector<4x8xbf16>, vector<256x8xf32> -> vector<256x8xf32>
    %41 = arith.addf %35, %40 : vector<256x8xf32>
    %c0_60 = arith.constant 0 : index
    %c0_61 = arith.constant 0 : index
    %c1_62 = arith.constant 1 : index
    %c0_63 = arith.constant 0 : index
    %42 = vector.load %arg7[%c0_60, %c0_61, %c1_62, %c0_63] : memref<1x18x18x4xf32, #tpu.memory_space<vmem>>, vector<1x18x16x4xf32>
    %43 = arith.truncf %42 : vector<1x18x16x4xf32> to vector<1x18x16x4xbf16>
    %44 = vector.extract_strided_slice %43 {offsets = [0, 0, 0, 0], sizes = [1, 16, 16, 4], strides = [1, 1, 1, 1]} : vector<1x18x16x4xbf16> to vector<1x16x16x4xbf16>
    %45 = vector.shape_cast %44 : vector<1x16x16x4xbf16> to vector<256x4xbf16>
    %46 = vector.extract_strided_slice %1 {offsets = [1, 0, 0], sizes = [1, 4, 8], strides = [1, 1, 1]} : vector<9x4x8xbf16> to vector<1x4x8xbf16>
    %47 = vector.shape_cast %46 : vector<1x4x8xbf16> to vector<4x8xbf16>
    %cst_64 = arith.constant dense<0.000000e+00> : vector<256x8xf32>
    %48 = tpu.matmul %45, %47, %cst_64 {dimension_numbers = #tpu.dot_dimension_numbers<[1], [0], [0], [1], [0, 0, 1, 1], [], []>} : vector<256x4xbf16>, vector<4x8xbf16>, vector<256x8xf32> -> vector<256x8xf32>
    %49 = arith.addf %41, %48 : vector<256x8xf32>
    %50 = vector.extract_strided_slice %43 {offsets = [0, 1, 0, 0], sizes = [1, 16, 16, 4], strides = [1, 1, 1, 1]} : vector<1x18x16x4xbf16> to vector<1x16x16x4xbf16>
    %51 = vector.shape_cast %50 : vector<1x16x16x4xbf16> to vector<256x4xbf16>
    %52 = vector.extract_strided_slice %1 {offsets = [4, 0, 0], sizes = [1, 4, 8], strides = [1, 1, 1]} : vector<9x4x8xbf16> to vector<1x4x8xbf16>
    %53 = vector.shape_cast %52 : vector<1x4x8xbf16> to vector<4x8xbf16>
    %cst_65 = arith.constant dense<0.000000e+00> : vector<256x8xf32>
    %54 = tpu.matmul %51, %53, %cst_65 {dimension_numbers = #tpu.dot_dimension_numbers<[1], [0], [0], [1], [0, 0, 1, 1], [], []>} : vector<256x4xbf16>, vector<4x8xbf16>, vector<256x8xf32> -> vector<256x8xf32>
    %55 = arith.addf %49, %54 : vector<256x8xf32>
    %56 = vector.extract_strided_slice %43 {offsets = [0, 2, 0, 0], sizes = [1, 16, 16, 4], strides = [1, 1, 1, 1]} : vector<1x18x16x4xbf16> to vector<1x16x16x4xbf16>
    %57 = vector.shape_cast %56 : vector<1x16x16x4xbf16> to vector<256x4xbf16>
    %58 = vector.extract_strided_slice %1 {offsets = [7, 0, 0], sizes = [1, 4, 8], strides = [1, 1, 1]} : vector<9x4x8xbf16> to vector<1x4x8xbf16>
    %59 = vector.shape_cast %58 : vector<1x4x8xbf16> to vector<4x8xbf16>
    %cst_66 = arith.constant dense<0.000000e+00> : vector<256x8xf32>
    %60 = tpu.matmul %57, %59, %cst_66 {dimension_numbers = #tpu.dot_dimension_numbers<[1], [0], [0], [1], [0, 0, 1, 1], [], []>} : vector<256x4xbf16>, vector<4x8xbf16>, vector<256x8xf32> -> vector<256x8xf32>
    %61 = arith.addf %55, %60 : vector<256x8xf32>
    %c0_67 = arith.constant 0 : index
    %c0_68 = arith.constant 0 : index
    %c2 = arith.constant 2 : index
    %c0_69 = arith.constant 0 : index
    %62 = vector.load %arg7[%c0_67, %c0_68, %c2, %c0_69] : memref<1x18x18x4xf32, #tpu.memory_space<vmem>>, vector<1x18x16x4xf32>
    %63 = arith.truncf %62 : vector<1x18x16x4xf32> to vector<1x18x16x4xbf16>
    %64 = vector.extract_strided_slice %63 {offsets = [0, 0, 0, 0], sizes = [1, 16, 16, 4], strides = [1, 1, 1, 1]} : vector<1x18x16x4xbf16> to vector<1x16x16x4xbf16>
    %65 = vector.shape_cast %64 : vector<1x16x16x4xbf16> to vector<256x4xbf16>
    %66 = vector.extract_strided_slice %1 {offsets = [2, 0, 0], sizes = [1, 4, 8], strides = [1, 1, 1]} : vector<9x4x8xbf16> to vector<1x4x8xbf16>
    %67 = vector.shape_cast %66 : vector<1x4x8xbf16> to vector<4x8xbf16>
    %cst_70 = arith.constant dense<0.000000e+00> : vector<256x8xf32>
    %68 = tpu.matmul %65, %67, %cst_70 {dimension_numbers = #tpu.dot_dimension_numbers<[1], [0], [0], [1], [0, 0, 1, 1], [], []>} : vector<256x4xbf16>, vector<4x8xbf16>, vector<256x8xf32> -> vector<256x8xf32>
    %69 = arith.addf %61, %68 : vector<256x8xf32>
    %70 = vector.extract_strided_slice %63 {offsets = [0, 1, 0, 0], sizes = [1, 16, 16, 4], strides = [1, 1, 1, 1]} : vector<1x18x16x4xbf16> to vector<1x16x16x4xbf16>
    %71 = vector.shape_cast %70 : vector<1x16x16x4xbf16> to vector<256x4xbf16>
    %72 = vector.extract_strided_slice %1 {offsets = [5, 0, 0], sizes = [1, 4, 8], strides = [1, 1, 1]} : vector<9x4x8xbf16> to vector<1x4x8xbf16>
    %73 = vector.shape_cast %72 : vector<1x4x8xbf16> to vector<4x8xbf16>
    %cst_71 = arith.constant dense<0.000000e+00> : vector<256x8xf32>
    %74 = tpu.matmul %71, %73, %cst_71 {dimension_numbers = #tpu.dot_dimension_numbers<[1], [0], [0], [1], [0, 0, 1, 1], [], []>} : vector<256x4xbf16>, vector<4x8xbf16>, vector<256x8xf32> -> vector<256x8xf32>
    %75 = arith.addf %69, %74 : vector<256x8xf32>
    %76 = vector.extract_strided_slice %63 {offsets = [0, 2, 0, 0], sizes = [1, 16, 16, 4], strides = [1, 1, 1, 1]} : vector<1x18x16x4xbf16> to vector<1x16x16x4xbf16>
    %77 = vector.shape_cast %76 : vector<1x16x16x4xbf16> to vector<256x4xbf16>
    %78 = vector.extract_strided_slice %1 {offsets = [8, 0, 0], sizes = [1, 4, 8], strides = [1, 1, 1]} : vector<9x4x8xbf16> to vector<1x4x8xbf16>
    %79 = vector.shape_cast %78 : vector<1x4x8xbf16> to vector<4x8xbf16>
    %cst_72 = arith.constant dense<0.000000e+00> : vector<256x8xf32>
    %80 = tpu.matmul %77, %79, %cst_72 {dimension_numbers = #tpu.dot_dimension_numbers<[1], [0], [0], [1], [0, 0, 1, 1], [], []>} : vector<256x4xbf16>, vector<4x8xbf16>, vector<256x8xf32> -> vector<256x8xf32>
    %81 = arith.addf %75, %80 : vector<256x8xf32>
    %c0_73 = arith.constant 0 : index
    %c0_74 = arith.constant 0 : index
    %c0_75 = arith.constant 0 : index
    %c0_76 = arith.constant 0 : index
    %82 = tpu.strided_load %arg1[%c0_73, %c0_74, %c0_75, %c0_76] {strides = array<i32: 1, 2, 1, 1>} : memref<1x16x16x4xf32, #tpu.memory_space<vmem>>, vector<1x8x16x4xf32>
    %c0_77 = arith.constant 0 : index
    %c1_78 = arith.constant 1 : index
    %c1_79 = arith.constant 1 : index
    %c0_80 = arith.constant 0 : index
    %83 = vector.load %arg7[%c0_77, %c1_78, %c1_79, %c0_80] : memref<1x18x18x4xf32, #tpu.memory_space<vmem>>, vector<1x8x16x4xf32>
    tpu.vector_store %arg7[%c0_77, %c1_78, %c1_79, %c0_80], %82 {strides = array<i32>} : memref<1x18x18x4xf32, #tpu.memory_space<vmem>>, vector<1x8x16x4xf32>,
    %c0_81 = arith.constant 0 : index
    %c1_82 = arith.constant 1 : index
    %c1_83 = arith.constant 1 : index
    %c0_84 = arith.constant 0 : index
    %84 = tpu.strided_load %arg7[%c0_81, %c1_82, %c1_83, %c0_84] {strides = array<i32: 1, 1, 2, 1>} : memref<1x18x18x4xf32, #tpu.memory_space<vmem>>, vector<1x8x8x4xf32>
    %85 = vector.shape_cast %84 : vector<1x8x8x4xf32> to vector<64x4xf32>
    %86 = arith.truncf %85 : vector<64x4xf32> to vector<64x4xbf16>
    %c0_85 = arith.constant 0 : index
    %c0_86 = arith.constant 0 : index
    %87 = vector.load %arg4[%c0_85, %c0_86] : memref<4x8xbf16, #tpu.memory_space<vmem>>, vector<4x8xbf16>
    %cst_87 = arith.constant dense<0.000000e+00> : vector<64x8xf32>
    %88 = tpu.matmul %86, %87, %cst_87 {dimension_numbers = #tpu.dot_dimension_numbers<[1], [0], [0], [1], [0, 0, 1, 1], [], []>} : vector<64x4xbf16>, vector<4x8xbf16>, vector<64x8xf32> -> vector<64x8xf32>
    %89 = vector.extract_strided_slice %0 {offsets = [4, 0], sizes = [1, 8], strides = [1, 1]} : vector<6x8xf32> to vector<1x8xf32>
    %90 = vector.broadcast %89 : vector<1x8xf32> to vector<64x8xf32>
    %91 = arith.mulf %88, %90 : vector<64x8xf32>
    %92 = vector.extract_strided_slice %0 {offsets = [5, 0], sizes = [1, 8], strides = [1, 1]} : vector<6x8xf32> to vector<1x8xf32>
    %93 = vector.broadcast %92 : vector<1x8xf32> to vector<64x8xf32>
    %94 = arith.addf %91, %93 : vector<64x8xf32>
    %95 = vector.shape_cast %94 : vector<64x8xf32> to vector<1x8x8x8xf32>
    %96 = vector.extract_strided_slice %0 {offsets = [0, 0], sizes = [1, 8], strides = [1, 1]} : vector<6x8xf32> to vector<1x8xf32>
    %97 = vector.broadcast %96 : vector<1x8xf32> to vector<256x8xf32>
    %98 = arith.mulf %81, %97 : vector<256x8xf32>
    %99 = vector.extract_strided_slice %0 {offsets = [1, 0], sizes = [1, 8], strides = [1, 1]} : vector<6x8xf32> to vector<1x8xf32>
    %100 = vector.broadcast %99 : vector<1x8xf32> to vector<256x8xf32>
    %101 = arith.addf %98, %100 : vector<256x8xf32>
    %cst_88 = arith.constant 0.000000e+00 : f32
    %102 = vector.broadcast %cst_88 : f32 to vector<256x8xf32>
    %103 = arith.maximumf %101, %102 : vector<256x8xf32>
    %104 = vector.shape_cast %103 : vector<256x8xf32> to vector<1x16x16x8xf32>
    %c0_89 = arith.constant 0 : index
    %c1_90 = arith.constant 1 : index
    %c1_91 = arith.constant 1 : index
    %c0_92 = arith.constant 0 : index
    %105 = vector.load %arg8[%c0_89, %c1_90, %c1_91, %c0_92] : memref<1x18x18x8xf32, #tpu.memory_space<vmem>>, vector<1x16x16x8xf32>
    tpu.vector_store %arg8[%c0_89, %c1_90, %c1_91, %c0_92], %104 {strides = array<i32>} : memref<1x18x18x8xf32, #tpu.memory_space<vmem>>, vector<1x16x16x8xf32>,
    %cst_93 = arith.constant 0.000000e+00 : f32
    %106 = vector.broadcast %cst_93 : f32 to vector<256x8xf32>
    %c0_94 = arith.constant 0 : index
    %c0_95 = arith.constant 0 : index
    %c0_96 = arith.constant 0 : index
    %c0_97 = arith.constant 0 : index
    %107 = vector.load %arg8[%c0_94, %c0_95, %c0_96, %c0_97] : memref<1x18x18x8xf32, #tpu.memory_space<vmem>>, vector<1x18x16x8xf32>
    %108 = arith.truncf %107 : vector<1x18x16x8xf32> to vector<1x18x16x8xbf16>
    %109 = vector.extract_strided_slice %108 {offsets = [0, 0, 0, 0], sizes = [1, 16, 16, 8], strides = [1, 1, 1, 1]} : vector<1x18x16x8xbf16> to vector<1x16x16x8xbf16>
    %110 = vector.shape_cast %109 : vector<1x16x16x8xbf16> to vector<256x8xbf16>
    %111 = vector.extract_strided_slice %2 {offsets = [0, 0, 0], sizes = [1, 8, 8], strides = [1, 1, 1]} : vector<9x8x8xbf16> to vector<1x8x8xbf16>
    %112 = vector.shape_cast %111 : vector<1x8x8xbf16> to vector<8x8xbf16>
    %cst_98 = arith.constant dense<0.000000e+00> : vector<256x8xf32>
    %113 = tpu.matmul %110, %112, %cst_98 {dimension_numbers = #tpu.dot_dimension_numbers<[1], [0], [0], [1], [0, 0, 1, 1], [], []>} : vector<256x8xbf16>, vector<8x8xbf16>, vector<256x8xf32> -> vector<256x8xf32>
    %114 = arith.addf %106, %113 : vector<256x8xf32>
    %115 = vector.extract_strided_slice %108 {offsets = [0, 1, 0, 0], sizes = [1, 16, 16, 8], strides = [1, 1, 1, 1]} : vector<1x18x16x8xbf16> to vector<1x16x16x8xbf16>
    %116 = vector.shape_cast %115 : vector<1x16x16x8xbf16> to vector<256x8xbf16>
    %117 = vector.extract_strided_slice %2 {offsets = [3, 0, 0], sizes = [1, 8, 8], strides = [1, 1, 1]} : vector<9x8x8xbf16> to vector<1x8x8xbf16>
    %118 = vector.shape_cast %117 : vector<1x8x8xbf16> to vector<8x8xbf16>
    %cst_99 = arith.constant dense<0.000000e+00> : vector<256x8xf32>
    %119 = tpu.matmul %116, %118, %cst_99 {dimension_numbers = #tpu.dot_dimension_numbers<[1], [0], [0], [1], [0, 0, 1, 1], [], []>} : vector<256x8xbf16>, vector<8x8xbf16>, vector<256x8xf32> -> vector<256x8xf32>
    %120 = arith.addf %114, %119 : vector<256x8xf32>
    %121 = vector.extract_strided_slice %108 {offsets = [0, 2, 0, 0], sizes = [1, 16, 16, 8], strides = [1, 1, 1, 1]} : vector<1x18x16x8xbf16> to vector<1x16x16x8xbf16>
    %122 = vector.shape_cast %121 : vector<1x16x16x8xbf16> to vector<256x8xbf16>
    %123 = vector.extract_strided_slice %2 {offsets = [6, 0, 0], sizes = [1, 8, 8], strides = [1, 1, 1]} : vector<9x8x8xbf16> to vector<1x8x8xbf16>
    %124 = vector.shape_cast %123 : vector<1x8x8xbf16> to vector<8x8xbf16>
    %cst_100 = arith.constant dense<0.000000e+00> : vector<256x8xf32>
    %125 = tpu.matmul %122, %124, %cst_100 {dimension_numbers = #tpu.dot_dimension_numbers<[1], [0], [0], [1], [0, 0, 1, 1], [], []>} : vector<256x8xbf16>, vector<8x8xbf16>, vector<256x8xf32> -> vector<256x8xf32>
    %126 = arith.addf %120, %125 : vector<256x8xf32>
    %c0_101 = arith.constant 0 : index
    %c0_102 = arith.constant 0 : index
    %c1_103 = arith.constant 1 : index
    %c0_104 = arith.constant 0 : index
    %127 = vector.load %arg8[%c0_101, %c0_102, %c1_103, %c0_104] : memref<1x18x18x8xf32, #tpu.memory_space<vmem>>, vector<1x18x16x8xf32>
    %128 = arith.truncf %127 : vector<1x18x16x8xf32> to vector<1x18x16x8xbf16>
    %129 = vector.extract_strided_slice %128 {offsets = [0, 0, 0, 0], sizes = [1, 16, 16, 8], strides = [1, 1, 1, 1]} : vector<1x18x16x8xbf16> to vector<1x16x16x8xbf16>
    %130 = vector.shape_cast %129 : vector<1x16x16x8xbf16> to vector<256x8xbf16>
    %131 = vector.extract_strided_slice %2 {offsets = [1, 0, 0], sizes = [1, 8, 8], strides = [1, 1, 1]} : vector<9x8x8xbf16> to vector<1x8x8xbf16>
    %132 = vector.shape_cast %131 : vector<1x8x8xbf16> to vector<8x8xbf16>
    %cst_105 = arith.constant dense<0.000000e+00> : vector<256x8xf32>
    %133 = tpu.matmul %130, %132, %cst_105 {dimension_numbers = #tpu.dot_dimension_numbers<[1], [0], [0], [1], [0, 0, 1, 1], [], []>} : vector<256x8xbf16>, vector<8x8xbf16>, vector<256x8xf32> -> vector<256x8xf32>
    %134 = arith.addf %126, %133 : vector<256x8xf32>
    %135 = vector.extract_strided_slice %128 {offsets = [0, 1, 0, 0], sizes = [1, 16, 16, 8], strides = [1, 1, 1, 1]} : vector<1x18x16x8xbf16> to vector<1x16x16x8xbf16>
    %136 = vector.shape_cast %135 : vector<1x16x16x8xbf16> to vector<256x8xbf16>
    %137 = vector.extract_strided_slice %2 {offsets = [4, 0, 0], sizes = [1, 8, 8], strides = [1, 1, 1]} : vector<9x8x8xbf16> to vector<1x8x8xbf16>
    %138 = vector.shape_cast %137 : vector<1x8x8xbf16> to vector<8x8xbf16>
    %cst_106 = arith.constant dense<0.000000e+00> : vector<256x8xf32>
    %139 = tpu.matmul %136, %138, %cst_106 {dimension_numbers = #tpu.dot_dimension_numbers<[1], [0], [0], [1], [0, 0, 1, 1], [], []>} : vector<256x8xbf16>, vector<8x8xbf16>, vector<256x8xf32> -> vector<256x8xf32>
    %140 = arith.addf %134, %139 : vector<256x8xf32>
    %141 = vector.extract_strided_slice %128 {offsets = [0, 2, 0, 0], sizes = [1, 16, 16, 8], strides = [1, 1, 1, 1]} : vector<1x18x16x8xbf16> to vector<1x16x16x8xbf16>
    %142 = vector.shape_cast %141 : vector<1x16x16x8xbf16> to vector<256x8xbf16>
    %143 = vector.extract_strided_slice %2 {offsets = [7, 0, 0], sizes = [1, 8, 8], strides = [1, 1, 1]} : vector<9x8x8xbf16> to vector<1x8x8xbf16>
    %144 = vector.shape_cast %143 : vector<1x8x8xbf16> to vector<8x8xbf16>
    %cst_107 = arith.constant dense<0.000000e+00> : vector<256x8xf32>
    %145 = tpu.matmul %142, %144, %cst_107 {dimension_numbers = #tpu.dot_dimension_numbers<[1], [0], [0], [1], [0, 0, 1, 1], [], []>} : vector<256x8xbf16>, vector<8x8xbf16>, vector<256x8xf32> -> vector<256x8xf32>
    %146 = arith.addf %140, %145 : vector<256x8xf32>
    %c0_108 = arith.constant 0 : index
    %c0_109 = arith.constant 0 : index
    %c2_110 = arith.constant 2 : index
    %c0_111 = arith.constant 0 : index
    %147 = vector.load %arg8[%c0_108, %c0_109, %c2_110, %c0_111] : memref<1x18x18x8xf32, #tpu.memory_space<vmem>>, vector<1x18x16x8xf32>
    %148 = arith.truncf %147 : vector<1x18x16x8xf32> to vector<1x18x16x8xbf16>
    %149 = vector.extract_strided_slice %148 {offsets = [0, 0, 0, 0], sizes = [1, 16, 16, 8], strides = [1, 1, 1, 1]} : vector<1x18x16x8xbf16> to vector<1x16x16x8xbf16>
    %150 = vector.shape_cast %149 : vector<1x16x16x8xbf16> to vector<256x8xbf16>
    %151 = vector.extract_strided_slice %2 {offsets = [2, 0, 0], sizes = [1, 8, 8], strides = [1, 1, 1]} : vector<9x8x8xbf16> to vector<1x8x8xbf16>
    %152 = vector.shape_cast %151 : vector<1x8x8xbf16> to vector<8x8xbf16>
    %cst_112 = arith.constant dense<0.000000e+00> : vector<256x8xf32>
    %153 = tpu.matmul %150, %152, %cst_112 {dimension_numbers = #tpu.dot_dimension_numbers<[1], [0], [0], [1], [0, 0, 1, 1], [], []>} : vector<256x8xbf16>, vector<8x8xbf16>, vector<256x8xf32> -> vector<256x8xf32>
    %154 = arith.addf %146, %153 : vector<256x8xf32>
    %155 = vector.extract_strided_slice %148 {offsets = [0, 1, 0, 0], sizes = [1, 16, 16, 8], strides = [1, 1, 1, 1]} : vector<1x18x16x8xbf16> to vector<1x16x16x8xbf16>
    %156 = vector.shape_cast %155 : vector<1x16x16x8xbf16> to vector<256x8xbf16>
    %157 = vector.extract_strided_slice %2 {offsets = [5, 0, 0], sizes = [1, 8, 8], strides = [1, 1, 1]} : vector<9x8x8xbf16> to vector<1x8x8xbf16>
    %158 = vector.shape_cast %157 : vector<1x8x8xbf16> to vector<8x8xbf16>
    %cst_113 = arith.constant dense<0.000000e+00> : vector<256x8xf32>
    %159 = tpu.matmul %156, %158, %cst_113 {dimension_numbers = #tpu.dot_dimension_numbers<[1], [0], [0], [1], [0, 0, 1, 1], [], []>} : vector<256x8xbf16>, vector<8x8xbf16>, vector<256x8xf32> -> vector<256x8xf32>
    %160 = arith.addf %154, %159 : vector<256x8xf32>
    %161 = vector.extract_strided_slice %148 {offsets = [0, 2, 0, 0], sizes = [1, 16, 16, 8], strides = [1, 1, 1, 1]} : vector<1x18x16x8xbf16> to vector<1x16x16x8xbf16>
    %162 = vector.shape_cast %161 : vector<1x16x16x8xbf16> to vector<256x8xbf16>
    %163 = vector.extract_strided_slice %2 {offsets = [8, 0, 0], sizes = [1, 8, 8], strides = [1, 1, 1]} : vector<9x8x8xbf16> to vector<1x8x8xbf16>
    %164 = vector.shape_cast %163 : vector<1x8x8xbf16> to vector<8x8xbf16>
    %cst_114 = arith.constant dense<0.000000e+00> : vector<256x8xf32>
    %165 = tpu.matmul %162, %164, %cst_114 {dimension_numbers = #tpu.dot_dimension_numbers<[1], [0], [0], [1], [0, 0, 1, 1], [], []>} : vector<256x8xbf16>, vector<8x8xbf16>, vector<256x8xf32> -> vector<256x8xf32>
    %166 = arith.addf %160, %165 : vector<256x8xf32>
    %167 = vector.extract_strided_slice %0 {offsets = [2, 0], sizes = [1, 8], strides = [1, 1]} : vector<6x8xf32> to vector<1x8xf32>
    %168 = vector.broadcast %167 : vector<1x8xf32> to vector<256x8xf32>
    %169 = arith.mulf %166, %168 : vector<256x8xf32>
    %170 = vector.extract_strided_slice %0 {offsets = [3, 0], sizes = [1, 8], strides = [1, 1]} : vector<6x8xf32> to vector<1x8xf32>
    %171 = vector.broadcast %170 : vector<1x8xf32> to vector<256x8xf32>
    %172 = arith.addf %169, %171 : vector<256x8xf32>
    %173 = vector.shape_cast %172 : vector<256x8xf32> to vector<1x16x16x8xf32>
    %c0_115 = arith.constant 0 : index
    %c1_116 = arith.constant 1 : index
    %c1_117 = arith.constant 1 : index
    %c0_118 = arith.constant 0 : index
    %174 = vector.load %arg8[%c0_115, %c1_116, %c1_117, %c0_118] : memref<1x18x18x8xf32, #tpu.memory_space<vmem>>, vector<1x16x16x8xf32>
    tpu.vector_store %arg8[%c0_115, %c1_116, %c1_117, %c0_118], %173 {strides = array<i32>} : memref<1x18x18x8xf32, #tpu.memory_space<vmem>>, vector<1x16x16x8xf32>,
    %c0_119 = arith.constant 0 : index
    %c1_120 = arith.constant 1 : index
    %c1_121 = arith.constant 1 : index
    %c0_122 = arith.constant 0 : index
    %175 = tpu.strided_load %arg8[%c0_119, %c1_120, %c1_121, %c0_122] {strides = array<i32: 1, 1, 2, 1>} : memref<1x18x18x8xf32, #tpu.memory_space<vmem>>, vector<1x16x8x8xf32>
    %c0_123 = arith.constant 0 : index
    %c1_124 = arith.constant 1 : index
    %c2_125 = arith.constant 2 : index
    %c0_126 = arith.constant 0 : index
    %176 = tpu.strided_load %arg8[%c0_123, %c1_124, %c2_125, %c0_126] {strides = array<i32: 1, 1, 2, 1>} : memref<1x18x18x8xf32, #tpu.memory_space<vmem>>, vector<1x16x8x8xf32>
    %177 = arith.maximumf %175, %176 : vector<1x16x8x8xf32>
    %178 = vector.extract_strided_slice %177 {offsets = [0, 0, 0, 0], sizes = [1, 16, 1, 8], strides = [1, 1, 1, 1]} : vector<1x16x8x8xf32> to vector<1x16x1x8xf32>
    %c0_127 = arith.constant 0 : index
    %c0_128 = arith.constant 0 : index
    %c0_129 = arith.constant 0 : index
    %c0_130 = arith.constant 0 : index
    %179 = vector.load %arg9[%c0_127, %c0_128, %c0_129, %c0_130] : memref<1x16x8x8xf32, #tpu.memory_space<vmem>>, vector<1x16x1x8xf32>
    tpu.vector_store %arg9[%c0_127, %c0_128, %c0_129, %c0_130], %178 {strides = array<i32>} : memref<1x16x8x8xf32, #tpu.memory_space<vmem>>, vector<1x16x1x8xf32>,
    %180 = vector.extract_strided_slice %177 {offsets = [0, 0, 1, 0], sizes = [1, 16, 7, 8], strides = [1, 1, 1, 1]} : vector<1x16x8x8xf32> to vector<1x16x7x8xf32>
    %181 = vector.extract_strided_slice %176 {offsets = [0, 0, 0, 0], sizes = [1, 16, 7, 8], strides = [1, 1, 1, 1]} : vector<1x16x8x8xf32> to vector<1x16x7x8xf32>
    %182 = arith.maximumf %180, %181 : vector<1x16x7x8xf32>
    %c0_131 = arith.constant 0 : index
    %c0_132 = arith.constant 0 : index
    %c1_133 = arith.constant 1 : index
    %c0_134 = arith.constant 0 : index
    %183 = vector.load %arg9[%c0_131, %c0_132, %c1_133, %c0_134] : memref<1x16x8x8xf32, #tpu.memory_space<vmem>>, vector<1x16x7x8xf32>
    tpu.vector_store %arg9[%c0_131, %c0_132, %c1_133, %c0_134], %182 {strides = array<i32>} : memref<1x16x8x8xf32, #tpu.memory_space<vmem>>, vector<1x16x7x8xf32>,
    %c0_135 = arith.constant 0 : index
    %c0_136 = arith.constant 0 : index
    %c0_137 = arith.constant 0 : index
    %c0_138 = arith.constant 0 : index
    %184 = tpu.strided_load %arg9[%c0_135, %c0_136, %c0_137, %c0_138] {strides = array<i32: 1, 2, 1, 1>} : memref<1x16x8x8xf32, #tpu.memory_space<vmem>>, vector<1x8x8x8xf32>
    %c0_139 = arith.constant 0 : index
    %c1_140 = arith.constant 1 : index
    %c0_141 = arith.constant 0 : index
    %c0_142 = arith.constant 0 : index
    %185 = tpu.strided_load %arg9[%c0_139, %c1_140, %c0_141, %c0_142] {strides = array<i32: 1, 2, 1, 1>} : memref<1x16x8x8xf32, #tpu.memory_space<vmem>>, vector<1x8x8x8xf32>
    %186 = arith.maximumf %184, %185 : vector<1x8x8x8xf32>
    %187 = vector.extract_strided_slice %186 {offsets = [0, 0, 0, 0], sizes = [1, 1, 8, 8], strides = [1, 1, 1, 1]} : vector<1x8x8x8xf32> to vector<1x1x8x8xf32>
    %188 = vector.extract_strided_slice %95 {offsets = [0, 0, 0, 0], sizes = [1, 1, 8, 8], strides = [1, 1, 1, 1]} : vector<1x8x8x8xf32> to vector<1x1x8x8xf32>
    %189 = arith.addf %187, %188 : vector<1x1x8x8xf32>
    %c0_143 = arith.constant 0 : index
    %c0_144 = arith.constant 0 : index
    %c0_145 = arith.constant 0 : index
    %c0_146 = arith.constant 0 : index
    %190 = vector.load %arg6[%c0_143, %c0_144, %c0_145, %c0_146] : memref<1x8x8x8xf32, #tpu.memory_space<vmem>>, vector<1x1x8x8xf32>
    tpu.vector_store %arg6[%c0_143, %c0_144, %c0_145, %c0_146], %189 {strides = array<i32>} : memref<1x8x8x8xf32, #tpu.memory_space<vmem>>, vector<1x1x8x8xf32>,
    %191 = vector.extract_strided_slice %186 {offsets = [0, 1, 0, 0], sizes = [1, 7, 8, 8], strides = [1, 1, 1, 1]} : vector<1x8x8x8xf32> to vector<1x7x8x8xf32>
    %192 = vector.extract_strided_slice %185 {offsets = [0, 0, 0, 0], sizes = [1, 7, 8, 8], strides = [1, 1, 1, 1]} : vector<1x8x8x8xf32> to vector<1x7x8x8xf32>
    %193 = arith.maximumf %191, %192 : vector<1x7x8x8xf32>
    %194 = vector.extract_strided_slice %95 {offsets = [0, 1, 0, 0], sizes = [1, 7, 8, 8], strides = [1, 1, 1, 1]} : vector<1x8x8x8xf32> to vector<1x7x8x8xf32>
    %195 = arith.addf %193, %194 : vector<1x7x8x8xf32>
    %c0_147 = arith.constant 0 : index
    %c1_148 = arith.constant 1 : index
    %c0_149 = arith.constant 0 : index
    %c0_150 = arith.constant 0 : index
    %196 = vector.load %arg6[%c0_147, %c1_148, %c0_149, %c0_150] : memref<1x8x8x8xf32, #tpu.memory_space<vmem>>, vector<1x7x8x8xf32>
    tpu.vector_store %arg6[%c0_147, %c1_148, %c0_149, %c0_150], %195 {strides = array<i32>} : memref<1x8x8x8xf32, #tpu.memory_space<vmem>>, vector<1x7x8x8xf32>,
    return
  }
  func.func @transform_0(%arg0: i32) -> (i32, i32, i32, i32) {
    %c0_i32 = arith.constant 0 : i32
    %c0_i32_0 = arith.constant 0 : i32
    %c0_i32_1 = arith.constant 0 : i32
    %c0_i32_2 = arith.constant 0 : i32
    return %arg0, %c0_i32, %c0_i32_0, %c0_i32_1 : i32, i32, i32, i32
  }
  func.func @transform_1(%arg0: i32) -> (i32, i32, i32) {
    %c0_i32 = arith.constant 0 : i32
    %c0_i32_0 = arith.constant 0 : i32
    %c0_i32_1 = arith.constant 0 : i32
    %c0_i32_2 = arith.constant 0 : i32
    return %c0_i32, %c0_i32_0, %c0_i32_1 : i32, i32, i32
  }
  func.func @transform_2(%arg0: i32) -> (i32, i32, i32) {
    %c0_i32 = arith.constant 0 : i32
    %c0_i32_0 = arith.constant 0 : i32
    %c0_i32_1 = arith.constant 0 : i32
    %c0_i32_2 = arith.constant 0 : i32
    return %c0_i32, %c0_i32_0, %c0_i32_1 : i32, i32, i32
  }
  func.func @transform_3(%arg0: i32) -> (i32, i32) {
    %c0_i32 = arith.constant 0 : i32
    %c0_i32_0 = arith.constant 0 : i32
    %c0_i32_1 = arith.constant 0 : i32
    return %c0_i32, %c0_i32_0 : i32, i32
  }
  func.func @transform_4(%arg0: i32) -> (i32, i32) {
    %c0_i32 = arith.constant 0 : i32
    %c0_i32_0 = arith.constant 0 : i32
    %c0_i32_1 = arith.constant 0 : i32
    return %c0_i32, %c0_i32_0 : i32, i32
  }
  func.func @transform_5(%arg0: i32) -> (i32, i32, i32, i32) {
    %c0_i32 = arith.constant 0 : i32
    %c0_i32_0 = arith.constant 0 : i32
    %c0_i32_1 = arith.constant 0 : i32
    %c0_i32_2 = arith.constant 0 : i32
    return %arg0, %c0_i32, %c0_i32_0, %c0_i32_1 : i32, i32, i32, i32
  }
}

</mosaic_0001>

<llo_original>
// kernel: tpu_custom_call.1
$region0: #{tpu_custom_call.1}
  #allocation0 [shape = 'u32[]', space=smem, size = 0x4, offset = 0x4, fixed_abs, tag = 'smem constant byte address 0x4 - core index']
  #allocation1 [shape = 'u32[144,128]{1,0:T(1,128)}', space=vmem, size = 0x12000, scoped, tag = 'internal scratch']
  #allocation2 [shape = 'f32[1,18,18,4]{3,2,1,0:T(8,128)}', space=vmem, size = 0x36000, scoped, tag = 'scratch operand']
  #allocation3 [shape = 'f32[1,18,18,8]{3,2,1,0:T(8,128)}', space=vmem, size = 0x36000, scoped, tag = 'scratch operand']
  #allocation4 [shape = 'f32[1,16,8,8]{3,2,1,0:T(8,128)}', space=vmem, size = 0x10000, scoped, tag = 'scratch operand']
  %s0 = inlined_call_operand.vmem [shape: f32[2,16,16,4], index: 0, kind: input, shape index: {}]
  %s1 = inlined_call_operand.vmem [shape: bf16[9,4,8], index: 1, kind: input, shape index: {}]
  %s2 = inlined_call_operand.vmem [shape: bf16[9,8,8], index: 2, kind: input, shape index: {}]
  %s3 = inlined_call_operand.vmem [shape: bf16[4,8], index: 3, kind: input, shape index: {}]
  %s4 = inlined_call_operand.vmem [shape: f32[6,8], index: 4, kind: input, shape index: {}]
  %s5 = inlined_call_operand.hbm [shape: f32[2,8,8,8], index: 5, kind: output, shape index: {}]
  %s6 = sld [smem:[#allocation0]]
  $region53: #{tpu_custom_call.1} parent=0
    _
  %s8 = ssub.s32 1, %s6
  %s9 = scalar_select 0, %s8, %s6
  $region1: #{tpu_custom_call.1} parent=0
    #allocation5 [shape = 'u8[65536]{0}', space=vmem, size = 0x10000, scoped, tag = 'output window, operand 0']
    #allocation6 [shape = 's32[2]{0}', space=sflag, size = 0x8, scoped, tag = 'scoped memory for tpu_custom_call.1']
    %10 = vsyncpa [#allocation6], 0
    %s11 = scalar_lea.sflag [#allocation6], 1
    %12 = vsyncpa %s11, 0
    loop: start=0, step=1, limit=4
    $region2: #{tpu_custom_call.1} parent=1 // loop_pre_header
      _
    $region3: #{tpu_custom_call.1} parent=1 // loop_header
      %s14 = sphi 0, %s18
      %p15 = scmp.ge.s32.totalorder %s14, 4
      %s24 = sphi 0, %s26
      %s27 = sphi 0, %s24
      %s28 = sphi 0, %s27
      %s44 = sphi 0, %s28
      %s48 = sphi 0, %s48
      %s50 = sphi 0, %s48
      %s51 = sphi 0, %s50
      %s65 = sphi 0, %s51
      %s69 = sphi 0, %s69
      %s71 = sphi 0, %s69
      %s72 = sphi 0, %s71
      %s86 = sphi 0, %s72
      %s90 = sphi 0, %s90
      %s92 = sphi 0, %s90
      %s93 = sphi 0, %s92
      %s107 = sphi 0, %s93
      %s111 = sphi 0, %s111
      %s113 = sphi 0, %s111
      %s114 = sphi 0, %s113
      %s128 = sphi 0, %s114
      %s134 = sphi 0, %s136
      %s137 = sphi 0, %s134
      %s138 = sphi 0, %s137
      %s154 = sphi 0, %s138
    $region4: #{tpu_custom_call.1} parent=1 // loop_header_branch
      %17 = sbr.rel (%p15) target = $region8
    $region5: #{tpu_custom_call.1} parent=1 // loop_body
      %s19 = ssub.s32 %s14, 1
      %s20 = ssub.s32 %s14, 2
      %s21 = sadd.s32 %s14, 1
      %s22 = ssub.s32 %s14, %s21
      %p23 = scmp.eq.s32.totalorder %s22, 0
      %s25 = sadd.s32 %s24, 1
      %s26 = scalar_select %p23, %s24, %s25
      %p29 = pneg %p23
      %p30 = scmp.eq.s32.totalorder %s14, 1
      %p31 = por %p29, %p30
      %p32 = scmp.ne.s32.totalorder %s24, %s27
      %p33 = scmp.eq.s32.totalorder %s14, 0
      %p34 = por %p32, %p33
      %p35 = scmp.ne.s32.totalorder %s24, %s27
      %p36 = scmp.eq.s32.totalorder %s19, 1
      %p37 = por %p35, %p36
      %p38 = scmp.ne.s32.totalorder %s27, %s28
      %p39 = scmp.eq.s32.totalorder %s19, 0
      %p40 = por %p38, %p39
      %p41 = scmp.ne.s32.totalorder %s27, %s28
      %p42 = scmp.eq.s32.totalorder %s20, 1
      %p43 = por %p41, %p42
      %p45 = scmp.ne.s32.totalorder %s28, %s44
      %p46 = scmp.eq.s32.totalorder %s20, 0
      %p47 = por %p45, %p46
      %s49 = sadd.s32 %s48, 1
      %p52 = scmp.eq.s32.totalorder %s14, 1
      %p53 = scmp.ne.s32.totalorder %s48, %s50
      %p54 = scmp.eq.s32.totalorder %s14, 0
      %p55 = por %p53, %p54
      %p56 = scmp.ne.s32.totalorder %s48, %s50
      %p57 = scmp.eq.s32.totalorder %s19, 1
      %p58 = por %p56, %p57
      %p59 = scmp.ne.s32.totalorder %s50, %s51
      %p60 = scmp.eq.s32.totalorder %s19, 0
      %p61 = por %p59, %p60
      %p62 = scmp.ne.s32.totalorder %s50, %s51
      %p63 = scmp.eq.s32.totalorder %s20, 1
      %p64 = por %p62, %p63
      %p66 = scmp.ne.s32.totalorder %s51, %s65
      %p67 = scmp.eq.s32.totalorder %s20, 0
      %p68 = por %p66, %p67
      %s70 = sadd.s32 %s69, 1
      %p73 = scmp.eq.s32.totalorder %s14, 1
      %p74 = scmp.ne.s32.totalorder %s69, %s71
      %p75 = scmp.eq.s32.totalorder %s14, 0
      %p76 = por %p74, %p75
      %p77 = scmp.ne.s32.totalorder %s69, %s71
      %p78 = scmp.eq.s32.totalorder %s19, 1
      %p79 = por %p77, %p78
      %p80 = scmp.ne.s32.totalorder %s71, %s72
      %p81 = scmp.eq.s32.totalorder %s19, 0
      %p82 = por %p80, %p81
      %p83 = scmp.ne.s32.totalorder %s71, %s72
      %p84 = scmp.eq.s32.totalorder %s20, 1
      %p85 = por %p83, %p84
      %p87 = scmp.ne.s32.totalorder %s72, %s86
      %p88 = scmp.eq.s32.totalorder %s20, 0
      %p89 = por %p87, %p88
      %s91 = sadd.s32 %s90, 1
      %p94 = scmp.eq.s32.totalorder %s14, 1
      %p95 = scmp.ne.s32.totalorder %s90, %s92
      %p96 = scmp.eq.s32.totalorder %s14, 0
      %p97 = por %p95, %p96
      %p98 = scmp.ne.s32.totalorder %s90, %s92
      %p99 = scmp.eq.s32.totalorder %s19, 1
      %p100 = por %p98, %p99
      %p101 = scmp.ne.s32.totalorder %s92, %s93
      %p102 = scmp.eq.s32.totalorder %s19, 0
      %p103 = por %p101, %p102
      %p104 = scmp.ne.s32.totalorder %s92, %s93
      %p105 = scmp.eq.s32.totalorder %s20, 1
      %p106 = por %p104, %p105
      %p108 = scmp.ne.s32.totalorder %s93, %s107
      %p109 = scmp.eq.s32.totalorder %s20, 0
      %p110 = por %p108, %p109
      %s112 = sadd.s32 %s111, 1
      %p115 = scmp.eq.s32.totalorder %s14, 1
      %p116 = scmp.ne.s32.totalorder %s111, %s113
      %p117 = scmp.eq.s32.totalorder %s14, 0
      %p118 = por %p116, %p117
      %p119 = scmp.ne.s32.totalorder %s111, %s113
      %p120 = scmp.eq.s32.totalorder %s19, 1
      %p121 = por %p119, %p120
      %p122 = scmp.ne.s32.totalorder %s113, %s114
      %p123 = scmp.eq.s32.totalorder %s19, 0
      %p124 = por %p122, %p123
      %p125 = scmp.ne.s32.totalorder %s113, %s114
      %p126 = scmp.eq.s32.totalorder %s20, 1
      %p127 = por %p125, %p126
      %p129 = scmp.ne.s32.totalorder %s114, %s128
      %p130 = scmp.eq.s32.totalorder %s20, 0
      %p131 = por %p129, %p130
      %s132 = ssub.s32 %s14, %s21
      %p133 = scmp.eq.s32.totalorder %s132, 0
      %s135 = sadd.s32 %s134, 1
      %s136 = scalar_select %p133, %s134, %s135
      %p139 = pneg %p133
      %p140 = scmp.eq.s32.totalorder %s14, 1
      %p141 = por %p139, %p140
      %p142 = scmp.ne.s32.totalorder %s134, %s137
      %p143 = scmp.eq.s32.totalorder %s14, 0
      %p144 = por %p142, %p143
      %p145 = scmp.ne.s32.totalorder %s134, %s137
      %p146 = scmp.eq.s32.totalorder %s19, 1
      %p147 = por %p145, %p146
      %p148 = scmp.ne.s32.totalorder %s137, %s138
      %p149 = scmp.eq.s32.totalorder %s19, 0
      %p150 = por %p148, %p149
      %p151 = scmp.ne.s32.totalorder %s137, %s138
      %p152 = scmp.eq.s32.totalorder %s20, 1
      %p153 = por %p151, %p152
      %p155 = scmp.ne.s32.totalorder %s138, %s154
      %p156 = scmp.eq.s32.totalorder %s20, 0
      %p157 = por %p155, %p156
      %p158 = scmp.le.s32.totalorder 1, %s14
      %p159 = scmp.lt.s32.totalorder %s14, 3
      %p160 = pnand %p158, %p159
      %p161 = pneg %p160
      // Predicated region
      $region9: #{tpu_custom_call.1} parent=5 // pred_check
        _
      $region10: #{tpu_custom_call.1} parent=5 // pred_check_branch
        %163 = sbr.rel (%p160) target = $region12
      $region11: #{tpu_custom_call.1} parent=5 // pred_region
        %s164 = ssub.s32 %s14, 1
        // Predicated region
        $region13: #{tpu_custom_call.1} parent=11 // pred_check
          %p165 = pneg %p61
        $region14: #{tpu_custom_call.1} parent=11 // pred_check_branch
          %167 = sbr.rel (%p165) target = $region16
        $region15: #{tpu_custom_call.1} parent=11 // pred_region
          _
        $region16: #{tpu_custom_call.1} parent=11 // pred_fallthru
          _
        // Predicated region
        $region17: #{tpu_custom_call.1} parent=11 // pred_check
          %p168 = pneg %p82
        $region18: #{tpu_custom_call.1} parent=11 // pred_check_branch
          %170 = sbr.rel (%p168) target = $region20
        $region19: #{tpu_custom_call.1} parent=11 // pred_region
          _
        $region20: #{tpu_custom_call.1} parent=11 // pred_fallthru
          _
        // Predicated region
        $region21: #{tpu_custom_call.1} parent=11 // pred_check
          %p171 = pneg %p103
        $region22: #{tpu_custom_call.1} parent=11 // pred_check_branch
          %173 = sbr.rel (%p171) target = $region24
        $region23: #{tpu_custom_call.1} parent=11 // pred_region
          _
        $region24: #{tpu_custom_call.1} parent=11 // pred_fallthru
          _
        // Predicated region
        $region25: #{tpu_custom_call.1} parent=11 // pred_check
          %p174 = pneg %p124
        $region26: #{tpu_custom_call.1} parent=11 // pred_check_branch
          %176 = sbr.rel (%p174) target = $region28
        $region27: #{tpu_custom_call.1} parent=11 // pred_region
          _
        $region28: #{tpu_custom_call.1} parent=11 // pred_fallthru
          _
      $region12: #{tpu_custom_call.1} parent=5 // pred_fallthru
        _
      %p177 = scmp.lt.s32.totalorder %s14, 2
      // Predicated region
      $region29: #{tpu_custom_call.1} parent=5 // pred_check
        %p178 = pneg %p177
      $region30: #{tpu_custom_call.1} parent=5 // pred_check_branch
        %180 = sbr.rel (%p178) target = $region32
      $region31: #{tpu_custom_call.1} parent=5 // pred_region
        // Predicated region
        $region33: #{tpu_custom_call.1} parent=31 // pred_check
          %p181 = pneg %p34
        $region34: #{tpu_custom_call.1} parent=31 // pred_check_branch
          %183 = sbr.rel (%p181) target = $region36
        $region35: #{tpu_custom_call.1} parent=31 // pred_region
          %p184 = scmp.lt.s32.totalorder %s14, 1
          %s185 = scalar_select %p184, %s14, 1
          %s186 = smul.addr %s185, 32
          %s187 = smul.addr %s186, 8
          %s188 = scalar_lea.vmem %s0, %s187
        $region36: #{tpu_custom_call.1} parent=31 // pred_fallthru
          _
      $region32: #{tpu_custom_call.1} parent=5 // pred_fallthru
        _
      %p189 = scmp.le.s32.totalorder 1, %s14
      %p190 = scmp.lt.s32.totalorder %s14, 3
      %p191 = pnand %p189, %p190
      %p192 = pneg %p191
      // Predicated region
      $region37: #{tpu_custom_call.1} parent=5 // pred_check
        _
      $region38: #{tpu_custom_call.1} parent=5 // pred_check_branch
        %194 = sbr.rel (%p191) target = $region40
      $region39: #{tpu_custom_call.1} parent=5 // pred_region
        %s195 = ssub.s32 %s14, 1
        %p196 = scmp.lt.s32.totalorder %s19, 1
        %s197 = scalar_select %p196, %s19, 1
        %s198 = smul.addr %s197, 32
        %s199 = smul.addr %s198, 8
        %s200 = scalar_lea.vmem %s0, %s199
        %p201 = pneg %p40
        %p202 = pneg %p37
        %p203 = pneg %p61
        %p204 = pneg %p58
        %p205 = pneg %p82
        %p206 = pneg %p79
        %p207 = pneg %p103
        %p208 = pneg %p100
        %p209 = pneg %p124
        %p210 = pneg %p121
        %p211 = pneg %p150
        %p212 = pneg %p147
        %s213 = sand.u32 %s137, 1
        %s214 = scalar_lea.sflag [#allocation6], %s213
        %s215 = sand.u32 %s137, 1
        %s216 = smul.addr %s215, 64
        %s217 = scalar_lea.vmem [#allocation5], %s216
        %p218 = scmp.lt.s32.totalorder %s19, 1
        %s219 = scalar_select %p218, %s19, 1
        %s220 = smul.addr %s219, 32
        %s221 = smul.addr %s220, 8
        %s222 = scalar_lea.vmem %s0, %s221
        %v224 = vld [vmem:[%s4] sm:$0x3f]
        %v225 = vld [vmem:[%s1] sm:$0x3]
        %v226 = vld [vmem:[%s1 + $0x2] sm:$0x3]
        %v227 = vld [vmem:[%s1 + $0x4] sm:$0x3]
        %v228 = vld [vmem:[%s1 + $0x6] sm:$0x3]
        %v229 = vld [vmem:[%s1 + $0x8] sm:$0x3]
        %v230 = vld [vmem:[%s1 + $0xa] sm:$0x3]
        %v231 = vld [vmem:[%s1 + $0xc] sm:$0x3]
        %v232 = vld [vmem:[%s1 + $0xe] sm:$0x3]
        %v233 = vld [vmem:[%s1 + $0x10] sm:$0x3]
        %v234 = vld [vmem:[%s2] sm:$0xf]
        %v235 = vld [vmem:[%s2 + $0x4] sm:$0xf]
        %v236 = vld [vmem:[%s2 + $0x8] sm:$0xf]
        %v237 = vld [vmem:[%s2 + $0xc] sm:$0xf]
        %v238 = vld [vmem:[%s2 + $0x10] sm:$0xf]
        %v239 = vld [vmem:[%s2 + $0x14] sm:$0xf]
        %v240 = vld [vmem:[%s2 + $0x18] sm:$0xf]
        %v241 = vld [vmem:[%s2 + $0x1c] sm:$0xf]
        %v242 = vld [vmem:[%s2 + $0x20] sm:$0xf]
        %vm243 = vcmask 31744
        %244 = vst.msk [vmem:[#allocation2] sm:$0xff] %vm243, 0.0
        %245 = vst.msk [vmem:[#allocation2 + $0x8] sm:$0xff] %vm243, 0.0
        %vm246 = vcmask 25600
        %247 = vst.msk [vmem:[#allocation2 + $0x10] sm:$0x3] %vm246, 0.0
        %s248 = scalar_lea.vmem [#allocation2], 408
        %249 = vst.msk [vmem:[%s248] sm:$0xff] %vm243, 0.0
        %250 = vst.msk [vmem:[%s248 + $0x8] sm:$0xff] %vm243, 0.0
        %251 = vst.msk [vmem:[%s248 + $0x10] sm:$0x3] %vm246, 0.0
        %s252 = scalar_lea.vmem [#allocation2], 24
        %vm253 = vcmask 24576
        %254 = vst.msk [vmem:[%s252] sm:$0x1] %vm253, 0.0
        %255 = vst.msk [vmem:[%s252 + $0x18] sm:$0x1] %vm253, 0.0
        %256 = vst.msk [vmem:[%s252 + $0x30] sm:$0x1] %vm253, 0.0
        %257 = vst.msk [vmem:[%s252 + $0x48] sm:$0x1] %vm253, 0.0
        %258 = vst.msk [vmem:[%s252 + $0x60] sm:$0x1] %vm253, 0.0
        %259 = vst.msk [vmem:[%s252 + $0x78] sm:$0x1] %vm253, 0.0
        %260 = vst.msk [vmem:[%s252 + $0x90] sm:$0x1] %vm253, 0.0
        %261 = vst.msk [vmem:[%s252 + $0xa8] sm:$0x1] %vm253, 0.0
        %262 = vst.msk [vmem:[%s252 + $0xc0] sm:$0x1] %vm253, 0.0
        %263 = vst.msk [vmem:[%s252 + $0xd8] sm:$0x1] %vm253, 0.0
        %264 = vst.msk [vmem:[%s252 + $0xf0] sm:$0x1] %vm253, 0.0
        %265 = vst.msk [vmem:[%s252 + $0x108] sm:$0x1] %vm253, 0.0
        %266 = vst.msk [vmem:[%s252 + $0x120] sm:$0x1] %vm253, 0.0
        %267 = vst.msk [vmem:[%s252 + $0x138] sm:$0x1] %vm253, 0.0
        %268 = vst.msk [vmem:[%s252 + $0x150] sm:$0x1] %vm253, 0.0
        %269 = vst.msk [vmem:[%s252 + $0x168] sm:$0x1] %vm253, 0.0
        %270 = vst.msk [vmem:[%s252 + $0x11] sm:$0x1] %vm253, 0.0
        %271 = vst.msk [vmem:[%s252 + $0x29] sm:$0x1] %vm253, 0.0
        %272 = vst.msk [vmem:[%s252 + $0x41] sm:$0x1] %vm253, 0.0
        %273 = vst.msk [vmem:[%s252 + $0x59] sm:$0x1] %vm253, 0.0
        %274 = vst.msk [vmem:[%s252 + $0x71] sm:$0x1] %vm253, 0.0
        %275 = vst.msk [vmem:[%s252 + $0x89] sm:$0x1] %vm253, 0.0
        %276 = vst.msk [vmem:[%s252 + $0xa1] sm:$0x1] %vm253, 0.0
        %277 = vst.msk [vmem:[%s252 + $0xb9] sm:$0x1] %vm253, 0.0
        %278 = vst.msk [vmem:[%s252 + $0xd1] sm:$0x1] %vm253, 0.0
        %279 = vst.msk [vmem:[%s252 + $0xe9] sm:$0x1] %vm253, 0.0
        %280 = vst.msk [vmem:[%s252 + $0x101] sm:$0x1] %vm253, 0.0
        %281 = vst.msk [vmem:[%s252 + $0x119] sm:$0x1] %vm253, 0.0
        %282 = vst.msk [vmem:[%s252 + $0x131] sm:$0x1] %vm253, 0.0
        %283 = vst.msk [vmem:[%s252 + $0x149] sm:$0x1] %vm253, 0.0
        %284 = vst.msk [vmem:[%s252 + $0x161] sm:$0x1] %vm253, 0.0
        %285 = vst.msk [vmem:[%s252 + $0x179] sm:$0x1] %vm253, 0.0
        %vm286 = vcmask 64512
        %287 = vst.msk [vmem:[#allocation3] sm:$0xff] %vm286, 0.0
        %288 = vst.msk [vmem:[#allocation3 + $0x8] sm:$0xff] %vm286, 0.0
        %vm289 = vcmask 58368
        %290 = vst.msk [vmem:[#allocation3 + $0x10] sm:$0x3] %vm289, 0.0
        %s291 = scalar_lea.vmem [#allocation3], 408
        %292 = vst.msk [vmem:[%s291] sm:$0xff] %vm286, 0.0
        %293 = vst.msk [vmem:[%s291 + $0x8] sm:$0xff] %vm286, 0.0
        %294 = vst.msk [vmem:[%s291 + $0x10] sm:$0x3] %vm289, 0.0
        %s295 = scalar_lea.vmem [#allocation3], 24
        %vm296 = vcmask 57344
        %297 = vst.msk [vmem:[%s295] sm:$0x1] %vm296, 0.0
        %298 = vst.msk [vmem:[%s295 + $0x18] sm:$0x1] %vm296, 0.0
        %299 = vst.msk [vmem:[%s295 + $0x30] sm:$0x1] %vm296, 0.0
        %300 = vst.msk [vmem:[%s295 + $0x48] sm:$0x1] %vm296, 0.0
        %301 = vst.msk [vmem:[%s295 + $0x60] sm:$0x1] %vm296, 0.0
        %302 = vst.msk [vmem:[%s295 + $0x78] sm:$0x1] %vm296, 0.0
        %303 = vst.msk [vmem:[%s295 + $0x90] sm:$0x1] %vm296, 0.0
        %304 = vst.msk [vmem:[%s295 + $0xa8] sm:$0x1] %vm296, 0.0
        %305 = vst.msk [vmem:[%s295 + $0xc0] sm:$0x1] %vm296, 0.0
        %306 = vst.msk [vmem:[%s295 + $0xd8] sm:$0x1] %vm296, 0.0
        %307 = vst.msk [vmem:[%s295 + $0xf0] sm:$0x1] %vm296, 0.0
        %308 = vst.msk [vmem:[%s295 + $0x108] sm:$0x1] %vm296, 0.0
        %309 = vst.msk [vmem:[%s295 + $0x120] sm:$0x1] %vm296, 0.0
        %310 = vst.msk [vmem:[%s295 + $0x138] sm:$0x1] %vm296, 0.0
        %311 = vst.msk [vmem:[%s295 + $0x150] sm:$0x1] %vm296, 0.0
        %312 = vst.msk [vmem:[%s295 + $0x168] sm:$0x1] %vm296, 0.0
        %313 = vst.msk [vmem:[%s295 + $0x11] sm:$0x1] %vm296, 0.0
        %314 = vst.msk [vmem:[%s295 + $0x29] sm:$0x1] %vm296, 0.0
        %315 = vst.msk [vmem:[%s295 + $0x41] sm:$0x1] %vm296, 0.0
        %316 = vst.msk [vmem:[%s295 + $0x59] sm:$0x1] %vm296, 0.0
        %317 = vst.msk [vmem:[%s295 + $0x71] sm:$0x1] %vm296, 0.0
        %318 = vst.msk [vmem:[%s295 + $0x89] sm:$0x1] %vm296, 0.0
        %319 = vst.msk [vmem:[%s295 + $0xa1] sm:$0x1] %vm296, 0.0
        %320 = vst.msk [vmem:[%s295 + $0xb9] sm:$0x1] %vm296, 0.0
        %321 = vst.msk [vmem:[%s295 + $0xd1] sm:$0x1] %vm296, 0.0
        %322 = vst.msk [vmem:[%s295 + $0xe9] sm:$0x1] %vm296, 0.0
        %323 = vst.msk [vmem:[%s295 + $0x101] sm:$0x1] %vm296, 0.0
        %324 = vst.msk [vmem:[%s295 + $0x119] sm:$0x1] %vm296, 0.0
        %325 = vst.msk [vmem:[%s295 + $0x131] sm:$0x1] %vm296, 0.0
        %326 = vst.msk [vmem:[%s295 + $0x149] sm:$0x1] %vm296, 0.0
        %327 = vst.msk [vmem:[%s295 + $0x161] sm:$0x1] %vm296, 0.0
        %328 = vst.msk [vmem:[%s295 + $0x179] sm:$0x1] %vm296, 0.0
        %v329 = vld [vmem:[%s222] sm:$0xff]
        %v330 = vld [vmem:[%s222 + $0x8] sm:$0xff]
        %v331 = vld [vmem:[%s222 + $0x10] sm:$0xff]
        %v332 = vld [vmem:[%s222 + $0x18] sm:$0xff]
        %v333 = vld [vmem:[%s222 + $0x20] sm:$0xff]
        %v334 = vld [vmem:[%s222 + $0x28] sm:$0xff]
        %v335 = vld [vmem:[%s222 + $0x30] sm:$0xff]
        %v336 = vld [vmem:[%s222 + $0x38] sm:$0xff]
        %v337 = vld [vmem:[%s222 + $0x40] sm:$0xff]
        %v338 = vld [vmem:[%s222 + $0x48] sm:$0xff]
        %v339 = vld [vmem:[%s222 + $0x50] sm:$0xff]
        %v340 = vld [vmem:[%s222 + $0x58] sm:$0xff]
        %v341 = vld [vmem:[%s222 + $0x60] sm:$0xff]
        %v342 = vld [vmem:[%s222 + $0x68] sm:$0xff]
        %v343 = vld [vmem:[%s222 + $0x70] sm:$0xff]
        %v344 = vld [vmem:[%s222 + $0x78] sm:$0xff]
        %v345 = vld [vmem:[%s222 + $0x80] sm:$0xff]
        %v346 = vld [vmem:[%s222 + $0x88] sm:$0xff]
        %v347 = vld [vmem:[%s222 + $0x90] sm:$0xff]
        %v348 = vld [vmem:[%s222 + $0x98] sm:$0xff]
        %v349 = vld [vmem:[%s222 + $0xa0] sm:$0xff]
        %v350 = vld [vmem:[%s222 + $0xa8] sm:$0xff]
        %v351 = vld [vmem:[%s222 + $0xb0] sm:$0xff]
        %v352 = vld [vmem:[%s222 + $0xb8] sm:$0xff]
        %v353 = vld [vmem:[%s222 + $0xc0] sm:$0xff]
        %v354 = vld [vmem:[%s222 + $0xc8] sm:$0xff]
        %v355 = vld [vmem:[%s222 + $0xd0] sm:$0xff]
        %v356 = vld [vmem:[%s222 + $0xd8] sm:$0xff]
        %v357 = vld [vmem:[%s222 + $0xe0] sm:$0xff]
        %v358 = vld [vmem:[%s222 + $0xe8] sm:$0xff]
        %v359 = vld [vmem:[%s222 + $0xf0] sm:$0xff]
        %v360 = vld [vmem:[%s222 + $0xf8] sm:$0xff]
        %361 = vst.msk [vmem:[%s252 + $0x1] sm:$0xff] %vm243, %v329
        %362 = vst.msk [vmem:[%s252 + $0x9] sm:$0xff] %vm243, %v330
        %363 = vst.msk [vmem:[%s252 + $0x19] sm:$0xff] %vm243, %v331
        %364 = vst.msk [vmem:[%s252 + $0x21] sm:$0xff] %vm243, %v332
        %365 = vst.msk [vmem:[%s252 + $0x31] sm:$0xff] %vm243, %v333
        %366 = vst.msk [vmem:[%s252 + $0x39] sm:$0xff] %vm243, %v334
        %367 = vst.msk [vmem:[%s252 + $0x49] sm:$0xff] %vm243, %v335
        %368 = vst.msk [vmem:[%s252 + $0x51] sm:$0xff] %vm243, %v336
        %369 = vst.msk [vmem:[%s252 + $0x61] sm:$0xff] %vm243, %v337
        %370 = vst.msk [vmem:[%s252 + $0x69] sm:$0xff] %vm243, %v338
        %371 = vst.msk [vmem:[%s252 + $0x79] sm:$0xff] %vm243, %v339
        %372 = vst.msk [vmem:[%s252 + $0x81] sm:$0xff] %vm243, %v340
        %373 = vst.msk [vmem:[%s252 + $0x91] sm:$0xff] %vm243, %v341
        %374 = vst.msk [vmem:[%s252 + $0x99] sm:$0xff] %vm243, %v342
        %375 = vst.msk [vmem:[%s252 + $0xa9] sm:$0xff] %vm243, %v343
        %376 = vst.msk [vmem:[%s252 + $0xb1] sm:$0xff] %vm243, %v344
        %377 = vst.msk [vmem:[%s252 + $0xc1] sm:$0xff] %vm243, %v345
        %378 = vst.msk [vmem:[%s252 + $0xc9] sm:$0xff] %vm243, %v346
        %379 = vst.msk [vmem:[%s252 + $0xd9] sm:$0xff] %vm243, %v347
        %380 = vst.msk [vmem:[%s252 + $0xe1] sm:$0xff] %vm243, %v348
        %381 = vst.msk [vmem:[%s252 + $0xf1] sm:$0xff] %vm243, %v349
        %382 = vst.msk [vmem:[%s252 + $0xf9] sm:$0xff] %vm243, %v350
        %383 = vst.msk [vmem:[%s252 + $0x109] sm:$0xff] %vm243, %v351
        %384 = vst.msk [vmem:[%s252 + $0x111] sm:$0xff] %vm243, %v352
        %385 = vst.msk [vmem:[%s252 + $0x121] sm:$0xff] %vm243, %v353
        %386 = vst.msk [vmem:[%s252 + $0x129] sm:$0xff] %vm243, %v354
        %387 = vst.msk [vmem:[%s252 + $0x139] sm:$0xff] %vm243, %v355
        %388 = vst.msk [vmem:[%s252 + $0x141] sm:$0xff] %vm243, %v356
        %389 = vst.msk [vmem:[%s252 + $0x151] sm:$0xff] %vm243, %v357
        %390 = vst.msk [vmem:[%s252 + $0x159] sm:$0xff] %vm243, %v358
        %391 = vst.msk [vmem:[%s252 + $0x169] sm:$0xff] %vm243, %v359
        %392 = vst.msk [vmem:[%s252 + $0x171] sm:$0xff] %vm243, %v360
        %v393 = vld [vmem:[#allocation2] sm:$0xff]
        %v394 = vld [vmem:[#allocation2 + $0x8] sm:$0xff]
        %v395 = vld [vmem:[#allocation2 + $0x18] sm:$0xff]
        %v396 = vld [vmem:[#allocation2 + $0x20] sm:$0xff]
        %v397 = vld [vmem:[#allocation2 + $0x30] sm:$0xff]
        %v398 = vld [vmem:[#allocation2 + $0x38] sm:$0xff]
        %v399 = vld [vmem:[#allocation2 + $0x48] sm:$0xff]
        %v400 = vld [vmem:[#allocation2 + $0x50] sm:$0xff]
        %v401 = vld [vmem:[#allocation2 + $0x60] sm:$0xff]
        %v402 = vld [vmem:[#allocation2 + $0x68] sm:$0xff]
        %v403 = vld [vmem:[#allocation2 + $0x78] sm:$0xff]
        %v404 = vld [vmem:[#allocation2 + $0x80] sm:$0xff]
        %v405 = vld [vmem:[#allocation2 + $0x90] sm:$0xff]
        %v406 = vld [vmem:[#allocation2 + $0x98] sm:$0xff]
        %v407 = vld [vmem:[#allocation2 + $0xa8] sm:$0xff]
        %v408 = vld [vmem:[#allocation2 + $0xb0] sm:$0xff]
        %v409 = vld [vmem:[#allocation2 + $0xc0] sm:$0xff]
        %v410 = vld [vmem:[#allocation2 + $0xc8] sm:$0xff]
        %v411 = vld [vmem:[#allocation2 + $0xd8] sm:$0xff]
        %v412 = vld [vmem:[#allocation2 + $0xe0] sm:$0xff]
        %v413 = vld [vmem:[#allocation2 + $0xf0] sm:$0xff]
        %v414 = vld [vmem:[#allocation2 + $0xf8] sm:$0xff]
        %v415 = vld [vmem:[#allocation2 + $0x108] sm:$0xff]
        %v416 = vld [vmem:[#allocation2 + $0x110] sm:$0xff]
        %v417 = vld [vmem:[#allocation2 + $0x120] sm:$0xff]
        %v418 = vld [vmem:[#allocation2 + $0x128] sm:$0xff]
        %v419 = vld [vmem:[#allocation2 + $0x138] sm:$0xff]
        %v420 = vld [vmem:[#allocation2 + $0x140] sm:$0xff]
        %v421 = vld [vmem:[#allocation2 + $0x150] sm:$0xff]
        %v422 = vld [vmem:[#allocation2 + $0x158] sm:$0xff]
        %v423 = vld [vmem:[#allocation2 + $0x168] sm:$0xff]
        %v424 = vld [vmem:[#allocation2 + $0x170] sm:$0xff]
        %v425 = vld [vmem:[#allocation2 + $0x180] sm:$0xff]
        %v426 = vld [vmem:[#allocation2 + $0x188] sm:$0xff]
        %v427 = vld [vmem:[#allocation2 + $0x198] sm:$0xff]
        %v428 = vld [vmem:[#allocation2 + $0x1a0] sm:$0xff]
        %v429 = vpack.c.bf16 %v394, %v393
        %v430 = vpack.c.bf16 %v396, %v395
        %v431 = vpack.c.bf16 %v398, %v397
        %v432 = vpack.c.bf16 %v400, %v399
        %v433 = vpack.c.bf16 %v402, %v401
        %v434 = vpack.c.bf16 %v404, %v403
        %v435 = vpack.c.bf16 %v406, %v405
        %v436 = vpack.c.bf16 %v408, %v407
        %v437 = vpack.c.bf16 %v410, %v409
        %v438 = vpack.c.bf16 %v412, %v411
        %v439 = vpack.c.bf16 %v414, %v413
        %v440 = vpack.c.bf16 %v416, %v415
        %v441 = vpack.c.bf16 %v418, %v417
        %v442 = vpack.c.bf16 %v420, %v419
        %v443 = vpack.c.bf16 %v422, %v421
        %v444 = vpack.c.bf16 %v424, %v423
        %v445 = vpack.c.bf16 %v426, %v425
        %v446 = vpack.c.bf16 %v428, %v427
        %v448 = vsel %vm243, %v430, 0
        %v451 = vsel %vm243, %v431, 0
        %v454 = vsel %vm243, %v432, 0
        %v457 = vsel %vm243, %v433, 0
        %v460 = vsel %vm243, %v434, 0
        %v463 = vsel %vm243, %v435, 0
        %v466 = vsel %vm243, %v436, 0
        %v469 = vsel %vm243, %v437, 0
        %v472 = vsel %vm243, %v438, 0
        %v475 = vsel %vm243, %v439, 0
        %v478 = vsel %vm243, %v440, 0
        %v481 = vsel %vm243, %v441, 0
        %v484 = vsel %vm243, %v442, 0
        %v487 = vsel %vm243, %v443, 0
        %v490 = vsel %vm243, %v444, 0
        %v493 = vsel %vm243, %v445, 0
        %vm495 = vcmask 1041408
        %v497 = vsel %vm495, %v228, 0
        %499 = vmatprep.subr.bf16.mxu0 0
        %500 = vmatpush1.bf16.msra.mxu0 %v497
        %501 = vmatprep.subr.bf16.mxu0 0
        %502 = vmatpush1.bf16.msra.mxu0 0
        %503 = vmatprep.subr.bf16.mxu0 0
        %504 = vmatpush1.bf16.msra.mxu0 0
        %505 = vmatprep.subr.bf16.mxu0 0
        %506 = vmatpush1.bf16.msra.mxu0 0
        %507 = vmatprep.subr.bf16.mxu0 0
        %508 = vmatpush1.bf16.msra.mxu0 0
        %509 = vmatprep.subr.bf16.mxu0 0
        %510 = vmatpush1.bf16.msra.mxu0 0
        %511 = vmatprep.subr.bf16.mxu0 0
        %512 = vmatpush1.bf16.msra.mxu0 0
        %513 = vmatprep.subr.bf16.mxu0 0
        %514 = vmatpush1.bf16.msra.mxu0 0
        %515 = vmatprep.subr.bf16.mxu0 0
        %516 = vmatpush1.bf16.msra.mxu0 0
        %517 = vmatprep.subr.bf16.mxu0 0
        %518 = vmatpush1.bf16.msra.mxu0 0
        %519 = vmatprep.subr.bf16.mxu0 0
        %520 = vmatpush1.bf16.msra.mxu0 0
        %521 = vmatprep.subr.bf16.mxu0 0
        %522 = vmatpush1.bf16.msra.mxu0 0
        %523 = vmatprep.subr.bf16.mxu0 0
        %524 = vmatpush1.bf16.msra.mxu0 0
        %525 = vmatprep.subr.bf16.mxu0 0
        %526 = vmatpush1.bf16.msra.mxu0 0
        %527 = vmatprep.subr.bf16.mxu0 0
        %528 = vmatpush1.bf16.msra.mxu0 0
        %529 = vmatprep.subr.bf16.mxu0 0
        %530 = vmatpush1.bf16.msra.mxu0 0
        %531 = vmatprep.mubr.bf16.mxu0 0
        %532 = vmatmul.mubr.bf16.gmra.mrb[0].mxu0 %v448
        %v533 = vpop.f32.mrb[0].mxu0
        %v534 = vadd.f32 0.0, %v533
        %v535 = vpop.f32.mrb[0].mxu0
        %v536 = vpop.f32.mrb[0].mxu0
        %v537 = vadd.f32 0.0, %v536
        %v538 = vpop.f32.mrb[0].mxu0
        %539 = vmatprep.mubr.bf16.mxu0 0
        %540 = vmatmul.mubr.bf16.gmra.mrb[0].mxu0 %v451
        %v541 = vpop.f32.mrb[0].mxu0
        %v542 = vadd.f32 0.0, %v541
        %v543 = vpop.f32.mrb[0].mxu0
        %v544 = vpop.f32.mrb[0].mxu0
        %v545 = vadd.f32 0.0, %v544
        %v546 = vpop.f32.mrb[0].mxu0
        %547 = vmatprep.mubr.bf16.mxu0 0
        %548 = vmatmul.mubr.bf16.gmra.mrb[0].mxu0 %v454
        %v549 = vpop.f32.mrb[0].mxu0
        %v550 = vadd.f32 0.0, %v549
        %v551 = vpop.f32.mrb[0].mxu0
        %v552 = vpop.f32.mrb[0].mxu0
        %v553 = vadd.f32 0.0, %v552
        %v554 = vpop.f32.mrb[0].mxu0
        %555 = vmatprep.mubr.bf16.mxu0 0
        %556 = vmatmul.mubr.bf16.gmra.mrb[0].mxu0 %v457
        %v557 = vpop.f32.mrb[0].mxu0
        %v558 = vadd.f32 0.0, %v557
        %v559 = vpop.f32.mrb[0].mxu0
        %v560 = vpop.f32.mrb[0].mxu0
        %v561 = vadd.f32 0.0, %v560
        %v562 = vpop.f32.mrb[0].mxu0
        %563 = vmatprep.mubr.bf16.mxu0 0
        %564 = vmatmul.mubr.bf16.gmra.mrb[0].mxu0 %v460
        %v565 = vpop.f32.mrb[0].mxu0
        %v566 = vadd.f32 0.0, %v565
        %v567 = vpop.f32.mrb[0].mxu0
        %v568 = vpop.f32.mrb[0].mxu0
        %v569 = vadd.f32 0.0, %v568
        %v570 = vpop.f32.mrb[0].mxu0
        %571 = vmatprep.mubr.bf16.mxu0 0
        %572 = vmatmul.mubr.bf16.gmra.mrb[0].mxu0 %v463
        %v573 = vpop.f32.mrb[0].mxu0
        %v574 = vadd.f32 0.0, %v573
        %v575 = vpop.f32.mrb[0].mxu0
        %v576 = vpop.f32.mrb[0].mxu0
        %v577 = vadd.f32 0.0, %v576
        %v578 = vpop.f32.mrb[0].mxu0
        %579 = vmatprep.mubr.bf16.mxu0 0
        %580 = vmatmul.mubr.bf16.gmra.mrb[0].mxu0 %v466
        %v581 = vpop.f32.mrb[0].mxu0
        %v582 = vadd.f32 0.0, %v581
        %v583 = vpop.f32.mrb[0].mxu0
        %v584 = vpop.f32.mrb[0].mxu0
        %v585 = vadd.f32 0.0, %v584
        %v586 = vpop.f32.mrb[0].mxu0
        %587 = vmatprep.mubr.bf16.mxu0 0
        %588 = vmatmul.mubr.bf16.gmra.mrb[0].mxu0 %v469
        %v589 = vpop.f32.mrb[0].mxu0
        %v590 = vadd.f32 0.0, %v589
        %v591 = vpop.f32.mrb[0].mxu0
        %v592 = vpop.f32.mrb[0].mxu0
        %v593 = vadd.f32 0.0, %v592
        %v594 = vpop.f32.mrb[0].mxu0
        %595 = vmatprep.mubr.bf16.mxu0 0
        %596 = vmatmul.mubr.bf16.gmra.mrb[0].mxu0 %v472
        %v597 = vpop.f32.mrb[0].mxu0
        %v598 = vadd.f32 0.0, %v597
        %v599 = vpop.f32.mrb[0].mxu0
        %v600 = vpop.f32.mrb[0].mxu0
        %v601 = vadd.f32 0.0, %v600
        %v602 = vpop.f32.mrb[0].mxu0
        %603 = vmatprep.mubr.bf16.mxu0 0
        %604 = vmatmul.mubr.bf16.gmra.mrb[0].mxu0 %v475
        %v605 = vpop.f32.mrb[0].mxu0
        %v606 = vadd.f32 0.0, %v605
        %v607 = vpop.f32.mrb[0].mxu0
        %v608 = vpop.f32.mrb[0].mxu0
        %v609 = vadd.f32 0.0, %v608
        %v610 = vpop.f32.mrb[0].mxu0
        %611 = vmatprep.mubr.bf16.mxu0 0
        %612 = vmatmul.mubr.bf16.gmra.mrb[0].mxu0 %v478
        %v613 = vpop.f32.mrb[0].mxu0
        %v614 = vadd.f32 0.0, %v613
        %v615 = vpop.f32.mrb[0].mxu0
        %v616 = vpop.f32.mrb[0].mxu0
        %v617 = vadd.f32 0.0, %v616
        %v618 = vpop.f32.mrb[0].mxu0
        %619 = vmatprep.mubr.bf16.mxu0 0
        %620 = vmatmul.mubr.bf16.gmra.mrb[0].mxu0 %v481
        %v621 = vpop.f32.mrb[0].mxu0
        %v622 = vadd.f32 0.0, %v621
        %v623 = vpop.f32.mrb[0].mxu0
        %v624 = vpop.f32.mrb[0].mxu0
        %v625 = vadd.f32 0.0, %v624
        %v626 = vpop.f32.mrb[0].mxu0
        %627 = vmatprep.mubr.bf16.mxu0 0
        %628 = vmatmul.mubr.bf16.gmra.mrb[0].mxu0 %v484
        %v629 = vpop.f32.mrb[0].mxu0
        %v630 = vadd.f32 0.0, %v629
        %v631 = vpop.f32.mrb[0].mxu0
        %v632 = vpop.f32.mrb[0].mxu0
        %v633 = vadd.f32 0.0, %v632
        %v634 = vpop.f32.mrb[0].mxu0
        %635 = vmatprep.mubr.bf16.mxu0 0
        %636 = vmatmul.mubr.bf16.gmra.mrb[0].mxu0 %v487
        %v637 = vpop.f32.mrb[0].mxu0
        %v638 = vadd.f32 0.0, %v637
        %v639 = vpop.f32.mrb[0].mxu0
        %v640 = vpop.f32.mrb[0].mxu0
        %v641 = vadd.f32 0.0, %v640
        %v642 = vpop.f32.mrb[0].mxu0
        %643 = vmatprep.mubr.bf16.mxu0 0
        %644 = vmatmul.mubr.bf16.gmra.mrb[0].mxu0 %v490
        %v645 = vpop.f32.mrb[0].mxu0
        %v646 = vadd.f32 0.0, %v645
        %v647 = vpop.f32.mrb[0].mxu0
        %v648 = vpop.f32.mrb[0].mxu0
        %v649 = vadd.f32 0.0, %v648
        %v650 = vpop.f32.mrb[0].mxu0
        %651 = vmatprep.mubr.bf16.mxu0 0
        %652 = vmatmul.mubr.bf16.gmra.mrb[0].mxu0 %v493
        %v653 = vpop.f32.mrb[0].mxu0
        %v654 = vadd.f32 0.0, %v653
        %v655 = vpop.f32.mrb[0].mxu0
        %v656 = vpop.f32.mrb[0].mxu0
        %v657 = vadd.f32 0.0, %v656
        %v658 = vpop.f32.mrb[0].mxu0
        %659 = vdwg.mxu0
        %v661 = vsel %vm243, %v429, 0
        %v664 = vsel %vm495, %v225, 0
        %666 = vmatprep.subr.bf16.mxu0 0
        %667 = vmatpush1.bf16.msra.mxu0 %v664
        %668 = vmatprep.subr.bf16.mxu0 0
        %669 = vmatpush1.bf16.msra.mxu0 0
        %670 = vmatprep.subr.bf16.mxu0 0
        %671 = vmatpush1.bf16.msra.mxu0 0
        %672 = vmatprep.subr.bf16.mxu0 0
        %673 = vmatpush1.bf16.msra.mxu0 0
        %674 = vmatprep.subr.bf16.mxu0 0
        %675 = vmatpush1.bf16.msra.mxu0 0
        %676 = vmatprep.subr.bf16.mxu0 0
        %677 = vmatpush1.bf16.msra.mxu0 0
        %678 = vmatprep.subr.bf16.mxu0 0
        %679 = vmatpush1.bf16.msra.mxu0 0
        %680 = vmatprep.subr.bf16.mxu0 0
        %681 = vmatpush1.bf16.msra.mxu0 0
        %682 = vmatprep.subr.bf16.mxu0 0
        %683 = vmatpush1.bf16.msra.mxu0 0
        %684 = vmatprep.subr.bf16.mxu0 0
        %685 = vmatpush1.bf16.msra.mxu0 0
        %686 = vmatprep.subr.bf16.mxu0 0
        %687 = vmatpush1.bf16.msra.mxu0 0
        %688 = vmatprep.subr.bf16.mxu0 0
        %689 = vmatpush1.bf16.msra.mxu0 0
        %690 = vmatprep.subr.bf16.mxu0 0
        %691 = vmatpush1.bf16.msra.mxu0 0
        %692 = vmatprep.subr.bf16.mxu0 0
        %693 = vmatpush1.bf16.msra.mxu0 0
        %694 = vmatprep.subr.bf16.mxu0 0
        %695 = vmatpush1.bf16.msra.mxu0 0
        %696 = vmatprep.subr.bf16.mxu0 0
        %697 = vmatpush1.bf16.msra.mxu0 0
        %698 = vmatprep.mubr.bf16.mxu0 0
        %699 = vmatmul.mubr.bf16.gmra.mrb[0].mxu0 %v661
        %v700 = vpop.f32.mrb[0].mxu0
        %v701 = vadd.f32 %v534, %v700
        %v702 = vpop.f32.mrb[0].mxu0
        %v703 = vpop.f32.mrb[0].mxu0
        %v704 = vadd.f32 %v537, %v703
        %v705 = vpop.f32.mrb[0].mxu0
        %706 = vmatprep.mubr.bf16.mxu0 0
        %707 = vmatmul.mubr.bf16.gmra.mrb[0].mxu0 %v448
        %v708 = vpop.f32.mrb[0].mxu0
        %v709 = vadd.f32 %v542, %v708
        %v710 = vpop.f32.mrb[0].mxu0
        %v711 = vpop.f32.mrb[0].mxu0
        %v712 = vadd.f32 %v545, %v711
        %v713 = vpop.f32.mrb[0].mxu0
        %714 = vmatprep.mubr.bf16.mxu0 0
        %715 = vmatmul.mubr.bf16.gmra.mrb[0].mxu0 %v451
        %v716 = vpop.f32.mrb[0].mxu0
        %v717 = vadd.f32 %v550, %v716
        %v718 = vpop.f32.mrb[0].mxu0
        %v719 = vpop.f32.mrb[0].mxu0
        %v720 = vadd.f32 %v553, %v719
        %v721 = vpop.f32.mrb[0].mxu0
        %722 = vmatprep.mubr.bf16.mxu0 0
        %723 = vmatmul.mubr.bf16.gmra.mrb[0].mxu0 %v454
        %v724 = vpop.f32.mrb[0].mxu0
        %v725 = vadd.f32 %v558, %v724
        %v726 = vpop.f32.mrb[0].mxu0
        %v727 = vpop.f32.mrb[0].mxu0
        %v728 = vadd.f32 %v561, %v727
        %v729 = vpop.f32.mrb[0].mxu0
        %730 = vmatprep.mubr.bf16.mxu0 0
        %731 = vmatmul.mubr.bf16.gmra.mrb[0].mxu0 %v457
        %v732 = vpop.f32.mrb[0].mxu0
        %v733 = vadd.f32 %v566, %v732
        %v734 = vpop.f32.mrb[0].mxu0
        %v735 = vpop.f32.mrb[0].mxu0
        %v736 = vadd.f32 %v569, %v735
        %v737 = vpop.f32.mrb[0].mxu0
        %738 = vmatprep.mubr.bf16.mxu0 0
        %739 = vmatmul.mubr.bf16.gmra.mrb[0].mxu0 %v460
        %v740 = vpop.f32.mrb[0].mxu0
        %v741 = vadd.f32 %v574, %v740
        %v742 = vpop.f32.mrb[0].mxu0
        %v743 = vpop.f32.mrb[0].mxu0
        %v744 = vadd.f32 %v577, %v743
        %v745 = vpop.f32.mrb[0].mxu0
        %746 = vmatprep.mubr.bf16.mxu0 0
        %747 = vmatmul.mubr.bf16.gmra.mrb[0].mxu0 %v463
        %v748 = vpop.f32.mrb[0].mxu0
        %v749 = vadd.f32 %v582, %v748
        %v750 = vpop.f32.mrb[0].mxu0
        %v751 = vpop.f32.mrb[0].mxu0
        %v752 = vadd.f32 %v585, %v751
        %v753 = vpop.f32.mrb[0].mxu0
        %754 = vmatprep.mubr.bf16.mxu0 0
        %755 = vmatmul.mubr.bf16.gmra.mrb[0].mxu0 %v466
        %v756 = vpop.f32.mrb[0].mxu0
        %v757 = vadd.f32 %v590, %v756
        %v758 = vpop.f32.mrb[0].mxu0
        %v759 = vpop.f32.mrb[0].mxu0
        %v760 = vadd.f32 %v593, %v759
        %v761 = vpop.f32.mrb[0].mxu0
        %762 = vmatprep.mubr.bf16.mxu0 0
        %763 = vmatmul.mubr.bf16.gmra.mrb[0].mxu0 %v469
        %v764 = vpop.f32.mrb[0].mxu0
        %v765 = vadd.f32 %v598, %v764
        %v766 = vpop.f32.mrb[0].mxu0
        %v767 = vpop.f32.mrb[0].mxu0
        %v768 = vadd.f32 %v601, %v767
        %v769 = vpop.f32.mrb[0].mxu0
        %770 = vmatprep.mubr.bf16.mxu0 0
        %771 = vmatmul.mubr.bf16.gmra.mrb[0].mxu0 %v472
        %v772 = vpop.f32.mrb[0].mxu0
        %v773 = vadd.f32 %v606, %v772
        %v774 = vpop.f32.mrb[0].mxu0
        %v775 = vpop.f32.mrb[0].mxu0
        %v776 = vadd.f32 %v609, %v775
        %v777 = vpop.f32.mrb[0].mxu0
        %778 = vmatprep.mubr.bf16.mxu0 0
        %779 = vmatmul.mubr.bf16.gmra.mrb[0].mxu0 %v475
        %v780 = vpop.f32.mrb[0].mxu0
        %v781 = vadd.f32 %v614, %v780
        %v782 = vpop.f32.mrb[0].mxu0
        %v783 = vpop.f32.mrb[0].mxu0
        %v784 = vadd.f32 %v617, %v783
        %v785 = vpop.f32.mrb[0].mxu0
        %786 = vmatprep.mubr.bf16.mxu0 0
        %787 = vmatmul.mubr.bf16.gmra.mrb[0].mxu0 %v478
        %v788 = vpop.f32.mrb[0].mxu0
        %v789 = vadd.f32 %v622, %v788
        %v790 = vpop.f32.mrb[0].mxu0
        %v791 = vpop.f32.mrb[0].mxu0
        %v792 = vadd.f32 %v625, %v791
        %v793 = vpop.f32.mrb[0].mxu0
        %794 = vmatprep.mubr.bf16.mxu0 0
        %795 = vmatmul.mubr.bf16.gmra.mrb[0].mxu0 %v481
        %v796 = vpop.f32.mrb[0].mxu0
        %v797 = vadd.f32 %v630, %v796
        %v798 = vpop.f32.mrb[0].mxu0
        %v799 = vpop.f32.mrb[0].mxu0
        %v800 = vadd.f32 %v633, %v799
        %v801 = vpop.f32.mrb[0].mxu0
        %802 = vmatprep.mubr.bf16.mxu0 0
        %803 = vmatmul.mubr.bf16.gmra.mrb[0].mxu0 %v484
        %v804 = vpop.f32.mrb[0].mxu0
        %v805 = vadd.f32 %v638, %v804
        %v806 = vpop.f32.mrb[0].mxu0
        %v807 = vpop.f32.mrb[0].mxu0
        %v808 = vadd.f32 %v641, %v807
        %v809 = vpop.f32.mrb[0].mxu0
        %810 = vmatprep.mubr.bf16.mxu0 0
        %811 = vmatmul.mubr.bf16.gmra.mrb[0].mxu0 %v487
        %v812 = vpop.f32.mrb[0].mxu0
        %v813 = vadd.f32 %v646, %v812
        %v814 = vpop.f32.mrb[0].mxu0
        %v815 = vpop.f32.mrb[0].mxu0
        %v816 = vadd.f32 %v649, %v815
        %v817 = vpop.f32.mrb[0].mxu0
        %818 = vmatprep.mubr.bf16.mxu0 0
        %819 = vmatmul.mubr.bf16.gmra.mrb[0].mxu0 %v490
        %v820 = vpop.f32.mrb[0].mxu0
        %v821 = vadd.f32 %v654, %v820
        %v822 = vpop.f32.mrb[0].mxu0
        %v823 = vpop.f32.mrb[0].mxu0
        %v824 = vadd.f32 %v657, %v823
        %v825 = vpop.f32.mrb[0].mxu0
        %826 = vdwg.mxu0
        %v828 = vsel %vm243, %v446, 0
        %v831 = vsel %vm495, %v231, 0
        %833 = vmatprep.subr.bf16.mxu0 0
        %834 = vmatpush1.bf16.msra.mxu0 %v831
        %835 = vmatprep.subr.bf16.mxu0 0
        %836 = vmatpush1.bf16.msra.mxu0 0
        %837 = vmatprep.subr.bf16.mxu0 0
        %838 = vmatpush1.bf16.msra.mxu0 0
        %839 = vmatprep.subr.bf16.mxu0 0
        %840 = vmatpush1.bf16.msra.mxu0 0
        %841 = vmatprep.subr.bf16.mxu0 0
        %842 = vmatpush1.bf16.msra.mxu0 0
        %843 = vmatprep.subr.bf16.mxu0 0
        %844 = vmatpush1.bf16.msra.mxu0 0
        %845 = vmatprep.subr.bf16.mxu0 0
        %846 = vmatpush1.bf16.msra.mxu0 0
        %847 = vmatprep.subr.bf16.mxu0 0
        %848 = vmatpush1.bf16.msra.mxu0 0
        %849 = vmatprep.subr.bf16.mxu0 0
        %850 = vmatpush1.bf16.msra.mxu0 0
        %851 = vmatprep.subr.bf16.mxu0 0
        %852 = vmatpush1.bf16.msra.mxu0 0
        %853 = vmatprep.subr.bf16.mxu0 0
        %854 = vmatpush1.bf16.msra.mxu0 0
        %855 = vmatprep.subr.bf16.mxu0 0
        %856 = vmatpush1.bf16.msra.mxu0 0
        %857 = vmatprep.subr.bf16.mxu0 0
        %858 = vmatpush1.bf16.msra.mxu0 0
        %859 = vmatprep.subr.bf16.mxu0 0
        %860 = vmatpush1.bf16.msra.mxu0 0
        %861 = vmatprep.subr.bf16.mxu0 0
        %862 = vmatpush1.bf16.msra.mxu0 0
        %863 = vmatprep.subr.bf16.mxu0 0
        %864 = vmatpush1.bf16.msra.mxu0 0
        %865 = vmatprep.mubr.bf16.mxu0 0
        %866 = vmatmul.mubr.bf16.gmra.mrb[0].mxu0 %v451
        %v867 = vpop.f32.mrb[0].mxu0
        %v868 = vadd.f32 0.0, %v867
        %v869 = vpop.f32.mrb[0].mxu0
        %v870 = vpop.f32.mrb[0].mxu0
        %v871 = vadd.f32 0.0, %v870
        %v872 = vpop.f32.mrb[0].mxu0
        %873 = vmatprep.mubr.bf16.mxu0 0
        %874 = vmatmul.mubr.bf16.gmra.mrb[0].mxu0 %v454
        %v875 = vpop.f32.mrb[0].mxu0
        %v876 = vadd.f32 0.0, %v875
        %v877 = vpop.f32.mrb[0].mxu0
        %v878 = vpop.f32.mrb[0].mxu0
        %v879 = vadd.f32 0.0, %v878
        %v880 = vpop.f32.mrb[0].mxu0
        %881 = vmatprep.mubr.bf16.mxu0 0
        %882 = vmatmul.mubr.bf16.gmra.mrb[0].mxu0 %v457
        %v883 = vpop.f32.mrb[0].mxu0
        %v884 = vadd.f32 0.0, %v883
        %v885 = vpop.f32.mrb[0].mxu0
        %v886 = vpop.f32.mrb[0].mxu0
        %v887 = vadd.f32 0.0, %v886
        %v888 = vpop.f32.mrb[0].mxu0
        %889 = vmatprep.mubr.bf16.mxu0 0
        %890 = vmatmul.mubr.bf16.gmra.mrb[0].mxu0 %v460
        %v891 = vpop.f32.mrb[0].mxu0
        %v892 = vadd.f32 0.0, %v891
        %v893 = vpop.f32.mrb[0].mxu0
        %v894 = vpop.f32.mrb[0].mxu0
        %v895 = vadd.f32 0.0, %v894
        %v896 = vpop.f32.mrb[0].mxu0
        %897 = vmatprep.mubr.bf16.mxu0 0
        %898 = vmatmul.mubr.bf16.gmra.mrb[0].mxu0 %v463
        %v899 = vpop.f32.mrb[0].mxu0
        %v900 = vadd.f32 0.0, %v899
        %v901 = vpop.f32.mrb[0].mxu0
        %v902 = vpop.f32.mrb[0].mxu0
        %v903 = vadd.f32 0.0, %v902
        %v904 = vpop.f32.mrb[0].mxu0
        %905 = vmatprep.mubr.bf16.mxu0 0
        %906 = vmatmul.mubr.bf16.gmra.mrb[0].mxu0 %v466
        %v907 = vpop.f32.mrb[0].mxu0
        %v908 = vadd.f32 0.0, %v907
        %v909 = vpop.f32.mrb[0].mxu0
        %v910 = vpop.f32.mrb[0].mxu0
        %v911 = vadd.f32 0.0, %v910
        %v912 = vpop.f32.mrb[0].mxu0
        %913 = vmatprep.mubr.bf16.mxu0 0
        %914 = vmatmul.mubr.bf16.gmra.mrb[0].mxu0 %v469
        %v915 = vpop.f32.mrb[0].mxu0
        %v916 = vadd.f32 0.0, %v915
        %v917 = vpop.f32.mrb[0].mxu0
        %v918 = vpop.f32.mrb[0].mxu0
        %v919 = vadd.f32 0.0, %v918
        %v920 = vpop.f32.mrb[0].mxu0
        %921 = vmatprep.mubr.bf16.mxu0 0
        %922 = vmatmul.mubr.bf16.gmra.mrb[0].mxu0 %v472
        %v923 = vpop.f32.mrb[0].mxu0
        %v924 = vadd.f32 0.0, %v923
        %v925 = vpop.f32.mrb[0].mxu0
        %v926 = vpop.f32.mrb[0].mxu0
        %v927 = vadd.f32 0.0, %v926
        %v928 = vpop.f32.mrb[0].mxu0
        %929 = vmatprep.mubr.bf16.mxu0 0
        %930 = vmatmul.mubr.bf16.gmra.mrb[0].mxu0 %v475
        %v931 = vpop.f32.mrb[0].mxu0
        %v932 = vadd.f32 0.0, %v931
        %v933 = vpop.f32.mrb[0].mxu0
        %v934 = vpop.f32.mrb[0].mxu0
        %v935 = vadd.f32 0.0, %v934
        %v936 = vpop.f32.mrb[0].mxu0
        %937 = vmatprep.mubr.bf16.mxu0 0
        %938 = vmatmul.mubr.bf16.gmra.mrb[0].mxu0 %v478
        %v939 = vpop.f32.mrb[0].mxu0
        %v940 = vadd.f32 0.0, %v939
        %v941 = vpop.f32.mrb[0].mxu0
        %v942 = vpop.f32.mrb[0].mxu0
        %v943 = vadd.f32 0.0, %v942
        %v944 = vpop.f32.mrb[0].mxu0
        %945 = vmatprep.mubr.bf16.mxu0 0
        %946 = vmatmul.mubr.bf16.gmra.mrb[0].mxu0 %v481
        %v947 = vpop.f32.mrb[0].mxu0
        %v948 = vadd.f32 0.0, %v947
        %v949 = vpop.f32.mrb[0].mxu0
        %v950 = vpop.f32.mrb[0].mxu0
        %v951 = vadd.f32 0.0, %v950
        %v952 = vpop.f32.mrb[0].mxu0
        %953 = vmatprep.mubr.bf16.mxu0 0
        %954 = vmatmul.mubr.bf16.gmra.mrb[0].mxu0 %v484
        %v955 = vpop.f32.mrb[0].mxu0
        %v956 = vadd.f32 0.0, %v955
        %v957 = vpop.f32.mrb[0].mxu0
        %v958 = vpop.f32.mrb[0].mxu0
        %v959 = vadd.f32 0.0, %v958
        %v960 = vpop.f32.mrb[0].mxu0
        %961 = vmatprep.mubr.bf16.mxu0 0
        %962 = vmatmul.mubr.bf16.gmra.mrb[0].mxu0 %v487
        %v963 = vpop.f32.mrb[0].mxu0
        %v964 = vadd.f32 0.0, %v963
        %v965 = vpop.f32.mrb[0].mxu0
        %v966 = vpop.f32.mrb[0].mxu0
        %v967 = vadd.f32 0.0, %v966
        %v968 = vpop.f32.mrb[0].mxu0
        %969 = vmatprep.mubr.bf16.mxu0 0
        %970 = vmatmul.mubr.bf16.gmra.mrb[0].mxu0 %v490
        %v971 = vpop.f32.mrb[0].mxu0
        %v972 = vadd.f32 0.0, %v971
        %v973 = vpop.f32.mrb[0].mxu0
        %v974 = vpop.f32.mrb[0].mxu0
        %v975 = vadd.f32 0.0, %v974
        %v976 = vpop.f32.mrb[0].mxu0
        %977 = vmatprep.mubr.bf16.mxu0 0
        %978 = vmatmul.mubr.bf16.gmra.mrb[0].mxu0 %v493
        %v979 = vpop.f32.mrb[0].mxu0
        %v980 = vadd.f32 0.0, %v979
        %v981 = vpop.f32.mrb[0].mxu0
        %v982 = vpop.f32.mrb[0].mxu0
        %v983 = vadd.f32 0.0, %v982
        %v984 = vpop.f32.mrb[0].mxu0
        %985 = vmatprep.mubr.bf16.mxu0 0
        %986 = vmatmul.mubr.bf16.gmra.mrb[0].mxu0 %v828
        %v987 = vpop.f32.mrb[0].mxu0
        %v988 = vadd.f32 0.0, %v987
        %v989 = vpop.f32.mrb[0].mxu0
        %v990 = vpop.f32.mrb[0].mxu0
        %v991 = vadd.f32 0.0, %v990
        %v992 = vpop.f32.mrb[0].mxu0
        %993 = vdwg.mxu0
        %v994 = vadd.f32 %v701, %v868
        %v995 = vadd.f32 %v704, %v871
        %v996 = vadd.f32 %v709, %v876
        %v997 = vadd.f32 %v712, %v879
        %v998 = vadd.f32 %v717, %v884
        %v999 = vadd.f32 %v720, %v887
        %v1000 = vadd.f32 %v725, %v892
        %v1001 = vadd.f32 %v728, %v895
        %v1002 = vadd.f32 %v733, %v900
        %v1003 = vadd.f32 %v736, %v903
        %v1004 = vadd.f32 %v741, %v908
        %v1005 = vadd.f32 %v744, %v911
        %v1006 = vadd.f32 %v749, %v916
        %v1007 = vadd.f32 %v752, %v919
        %v1008 = vadd.f32 %v757, %v924
        %v1009 = vadd.f32 %v760, %v927
        %v1010 = vadd.f32 %v765, %v932
        %v1011 = vadd.f32 %v768, %v935
        %v1012 = vadd.f32 %v773, %v940
        %v1013 = vadd.f32 %v776, %v943
        %v1014 = vadd.f32 %v781, %v948
        %v1015 = vadd.f32 %v784, %v951
        %v1016 = vadd.f32 %v789, %v956
        %v1017 = vadd.f32 %v792, %v959
        %v1018 = vadd.f32 %v797, %v964
        %v1019 = vadd.f32 %v800, %v967
        %v1020 = vadd.f32 %v805, %v972
        %v1021 = vadd.f32 %v808, %v975
        %v1022 = vadd.f32 %v813, %v980
        %v1023 = vadd.f32 %v816, %v983
        %v1024 = vadd.f32 %v821, %v988
        %v1025 = vadd.f32 %v824, %v991
        %v1026 = vld [vmem:[#allocation2 + $0x1] sm:$0xff]
        %v1027 = vld [vmem:[#allocation2 + $0x9] sm:$0xff]
        %v1028 = vld [vmem:[#allocation2 + $0x19] sm:$0xff]
        %v1029 = vld [vmem:[#allocation2 + $0x21] sm:$0xff]
        %v1030 = vld [vmem:[#allocation2 + $0x31] sm:$0xff]
        %v1031 = vld [vmem:[#allocation2 + $0x39] sm:$0xff]
        %v1032 = vld [vmem:[#allocation2 + $0x49] sm:$0xff]
        %v1033 = vld [vmem:[#allocation2 + $0x51] sm:$0xff]
        %v1034 = vld [vmem:[#allocation2 + $0x61] sm:$0xff]
        %v1035 = vld [vmem:[#allocation2 + $0x69] sm:$0xff]
        %v1036 = vld [vmem:[#allocation2 + $0x79] sm:$0xff]
        %v1037 = vld [vmem:[#allocation2 + $0x81] sm:$0xff]
        %v1038 = vld [vmem:[#allocation2 + $0x91] sm:$0xff]
        %v1039 = vld [vmem:[#allocation2 + $0x99] sm:$0xff]
        %v1040 = vld [vmem:[#allocation2 + $0xa9] sm:$0xff]
        %v1041 = vld [vmem:[#allocation2 + $0xb1] sm:$0xff]
        %v1042 = vld [vmem:[#allocation2 + $0xc1] sm:$0xff]
        %v1043 = vld [vmem:[#allocation2 + $0xc9] sm:$0xff]
        %v1044 = vld [vmem:[#allocation2 + $0xd9] sm:$0xff]
        %v1045 = vld [vmem:[#allocation2 + $0xe1] sm:$0xff]
        %v1046 = vld [vmem:[#allocation2 + $0xf1] sm:$0xff]
        %v1047 = vld [vmem:[#allocation2 + $0xf9] sm:$0xff]
        %v1048 = vld [vmem:[#allocation2 + $0x109] sm:$0xff]
        %v1049 = vld [vmem:[#allocation2 + $0x111] sm:$0xff]
        %v1050 = vld [vmem:[#allocation2 + $0x121] sm:$0xff]
        %v1051 = vld [vmem:[#allocation2 + $0x129] sm:$0xff]
        %v1052 = vld [vmem:[#allocation2 + $0x139] sm:$0xff]
        %v1053 = vld [vmem:[#allocation2 + $0x141] sm:$0xff]
        %v1054 = vld [vmem:[#allocation2 + $0x151] sm:$0xff]
        %v1055 = vld [vmem:[#allocation2 + $0x159] sm:$0xff]
        %v1056 = vld [vmem:[#allocation2 + $0x169] sm:$0xff]
        %v1057 = vld [vmem:[#allocation2 + $0x171] sm:$0xff]
        %v1058 = vld [vmem:[#allocation2 + $0x181] sm:$0xff]
        %v1059 = vld [vmem:[#allocation2 + $0x189] sm:$0xff]
        %v1060 = vld [vmem:[#allocation2 + $0x199] sm:$0xff]
        %v1061 = vld [vmem:[#allocation2 + $0x1a1] sm:$0xff]
        %v1062 = vpack.c.bf16 %v1027, %v1026
        %v1063 = vpack.c.bf16 %v1029, %v1028
        %v1064 = vpack.c.bf16 %v1031, %v1030
        %v1065 = vpack.c.bf16 %v1033, %v1032
        %v1066 = vpack.c.bf16 %v1035, %v1034
        %v1067 = vpack.c.bf16 %v1037, %v1036
        %v1068 = vpack.c.bf16 %v1039, %v1038
        %v1069 = vpack.c.bf16 %v1041, %v1040
        %v1070 = vpack.c.bf16 %v1043, %v1042
        %v1071 = vpack.c.bf16 %v1045, %v1044
        %v1072 = vpack.c.bf16 %v1047, %v1046
        %v1073 = vpack.c.bf16 %v1049, %v1048
        %v1074 = vpack.c.bf16 %v1051, %v1050
        %v1075 = vpack.c.bf16 %v1053, %v1052
        %v1076 = vpack.c.bf16 %v1055, %v1054
        %v1077 = vpack.c.bf16 %v1057, %v1056
        %v1078 = vpack.c.bf16 %v1059, %v1058
        %v1079 = vpack.c.bf16 %v1061, %v1060
        %v1081 = vsel %vm243, %v1062, 0
        %v1084 = vsel %vm243, %v1063, 0
        %v1087 = vsel %vm243, %v1064, 0
        %v1090 = vsel %vm243, %v1065, 0
        %v1093 = vsel %vm243, %v1066, 0
        %v1096 = vsel %vm243, %v1067, 0
        %v1099 = vsel %vm243, %v1068, 0
        %v1102 = vsel %vm243, %v1069, 0
        %v1105 = vsel %vm243, %v1070, 0
        %v1108 = vsel %vm243, %v1071, 0
        %v1111 = vsel %vm243, %v1072, 0
        %v1114 = vsel %vm243, %v1073, 0
        %v1117 = vsel %vm243, %v1074, 0
        %v1120 = vsel %vm243, %v1075, 0
        %v1123 = vsel %vm243, %v1076, 0
        %v1126 = vsel %vm243, %v1077, 0
        %v1129 = vsel %vm495, %v226, 0
        %1131 = vmatprep.subr.bf16.mxu0 0
        %1132 = vmatpush1.bf16.msra.mxu0 %v1129
        %1133 = vmatprep.subr.bf16.mxu0 0
        %1134 = vmatpush1.bf16.msra.mxu0 0
        %1135 = vmatprep.subr.bf16.mxu0 0
        %1136 = vmatpush1.bf16.msra.mxu0 0
        %1137 = vmatprep.subr.bf16.mxu0 0
        %1138 = vmatpush1.bf16.msra.mxu0 0
        %1139 = vmatprep.subr.bf16.mxu0 0
        %1140 = vmatpush1.bf16.msra.mxu0 0
        %1141 = vmatprep.subr.bf16.mxu0 0
        %1142 = vmatpush1.bf16.msra.mxu0 0
        %1143 = vmatprep.subr.bf16.mxu0 0
        %1144 = vmatpush1.bf16.msra.mxu0 0
        %1145 = vmatprep.subr.bf16.mxu0 0
        %1146 = vmatpush1.bf16.msra.mxu0 0
        %1147 = vmatprep.subr.bf16.mxu0 0
        %1148 = vmatpush1.bf16.msra.mxu0 0
        %1149 = vmatprep.subr.bf16.mxu0 0
        %1150 = vmatpush1.bf16.msra.mxu0 0
        %1151 = vmatprep.subr.bf16.mxu0 0
        %1152 = vmatpush1.bf16.msra.mxu0 0
        %1153 = vmatprep.subr.bf16.mxu0 0
        %1154 = vmatpush1.bf16.msra.mxu0 0
        %1155 = vmatprep.subr.bf16.mxu0 0
        %1156 = vmatpush1.bf16.msra.mxu0 0
        %1157 = vmatprep.subr.bf16.mxu0 0
        %1158 = vmatpush1.bf16.msra.mxu0 0
        %1159 = vmatprep.subr.bf16.mxu0 0
        %1160 = vmatpush1.bf16.msra.mxu0 0
        %1161 = vmatprep.subr.bf16.mxu0 0
        %1162 = vmatpush1.bf16.msra.mxu0 0
        %1163 = vmatprep.mubr.bf16.mxu0 0
        %1164 = vmatmul.mubr.bf16.gmra.mrb[0].mxu0 %v1081
        %v1165 = vpop.f32.mrb[0].mxu0
        %v1166 = vadd.f32 0.0, %v1165
        %v1167 = vpop.f32.mrb[0].mxu0
        %v1168 = vpop.f32.mrb[0].mxu0
        %v1169 = vadd.f32 0.0, %v1168
        %v1170 = vpop.f32.mrb[0].mxu0
        %1171 = vmatprep.mubr.bf16.mxu0 0
        %1172 = vmatmul.mubr.bf16.gmra.mrb[0].mxu0 %v1084
        %v1173 = vpop.f32.mrb[0].mxu0
        %v1174 = vadd.f32 0.0, %v1173
        %v1175 = vpop.f32.mrb[0].mxu0
        %v1176 = vpop.f32.mrb[0].mxu0
        %v1177 = vadd.f32 0.0, %v1176
        %v1178 = vpop.f32.mrb[0].mxu0
        %1179 = vmatprep.mubr.bf16.mxu0 0
        %1180 = vmatmul.mubr.bf16.gmra.mrb[0].mxu0 %v1087
        %v1181 = vpop.f32.mrb[0].mxu0
        %v1182 = vadd.f32 0.0, %v1181
        %v1183 = vpop.f32.mrb[0].mxu0
        %v1184 = vpop.f32.mrb[0].mxu0
        %v1185 = vadd.f32 0.0, %v1184
        %v1186 = vpop.f32.mrb[0].mxu0
        %1187 = vmatprep.mubr.bf16.mxu0 0
        %1188 = vmatmul.mubr.bf16.gmra.mrb[0].mxu0 %v1090
        %v1189 = vpop.f32.mrb[0].mxu0
        %v1190 = vadd.f32 0.0, %v1189
        %v1191 = vpop.f32.mrb[0].mxu0
        %v1192 = vpop.f32.mrb[0].mxu0
        %v1193 = vadd.f32 0.0, %v1192
        %v1194 = vpop.f32.mrb[0].mxu0
        %1195 = vmatprep.mubr.bf16.mxu0 0
        %1196 = vmatmul.mubr.bf16.gmra.mrb[0].mxu0 %v1093
        %v1197 = vpop.f32.mrb[0].mxu0
        %v1198 = vadd.f32 0.0, %v1197
        %v1199 = vpop.f32.mrb[0].mxu0
        %v1200 = vpop.f32.mrb[0].mxu0
        %v1201 = vadd.f32 0.0, %v1200
        %v1202 = vpop.f32.mrb[0].mxu0
        %1203 = vmatprep.mubr.bf16.mxu0 0
        %1204 = vmatmul.mubr.bf16.gmra.mrb[0].mxu0 %v1096
        %v1205 = vpop.f32.mrb[0].mxu0
        %v1206 = vadd.f32 0.0, %v1205
        %v1207 = vpop.f32.mrb[0].mxu0
        %v1208 = vpop.f32.mrb[0].mxu0
        %v1209 = vadd.f32 0.0, %v1208
        %v1210 = vpop.f32.mrb[0].mxu0
        %1211 = vmatprep.mubr.bf16.mxu0 0
        %1212 = vmatmul.mubr.bf16.gmra.mrb[0].mxu0 %v1099
        %v1213 = vpop.f32.mrb[0].mxu0
        %v1214 = vadd.f32 0.0, %v1213
        %v1215 = vpop.f32.mrb[0].mxu0
        %v1216 = vpop.f32.mrb[0].mxu0
        %v1217 = vadd.f32 0.0, %v1216
        %v1218 = vpop.f32.mrb[0].mxu0
        %1219 = vmatprep.mubr.bf16.mxu0 0
        %1220 = vmatmul.mubr.bf16.gmra.mrb[0].mxu0 %v1102
        %v1221 = vpop.f32.mrb[0].mxu0
        %v1222 = vadd.f32 0.0, %v1221
        %v1223 = vpop.f32.mrb[0].mxu0
        %v1224 = vpop.f32.mrb[0].mxu0
        %v1225 = vadd.f32 0.0, %v1224
        %v1226 = vpop.f32.mrb[0].mxu0
        %1227 = vmatprep.mubr.bf16.mxu0 0
        %1228 = vmatmul.mubr.bf16.gmra.mrb[0].mxu0 %v1105
        %v1229 = vpop.f32.mrb[0].mxu0
        %v1230 = vadd.f32 0.0, %v1229
        %v1231 = vpop.f32.mrb[0].mxu0
        %v1232 = vpop.f32.mrb[0].mxu0
        %v1233 = vadd.f32 0.0, %v1232
        %v1234 = vpop.f32.mrb[0].mxu0
        %1235 = vmatprep.mubr.bf16.mxu0 0
        %1236 = vmatmul.mubr.bf16.gmra.mrb[0].mxu0 %v1108
        %v1237 = vpop.f32.mrb[0].mxu0
        %v1238 = vadd.f32 0.0, %v1237
        %v1239 = vpop.f32.mrb[0].mxu0
        %v1240 = vpop.f32.mrb[0].mxu0
        %v1241 = vadd.f32 0.0, %v1240
        %v1242 = vpop.f32.mrb[0].mxu0
        %1243 = vmatprep.mubr.bf16.mxu0 0
        %1244 = vmatmul.mubr.bf16.gmra.mrb[0].mxu0 %v1111
        %v1245 = vpop.f32.mrb[0].mxu0
        %v1246 = vadd.f32 0.0, %v1245
        %v1247 = vpop.f32.mrb[0].mxu0
        %v1248 = vpop.f32.mrb[0].mxu0
        %v1249 = vadd.f32 0.0, %v1248
        %v1250 = vpop.f32.mrb[0].mxu0
        %1251 = vmatprep.mubr.bf16.mxu0 0
        %1252 = vmatmul.mubr.bf16.gmra.mrb[0].mxu0 %v1114
        %v1253 = vpop.f32.mrb[0].mxu0
        %v1254 = vadd.f32 0.0, %v1253
        %v1255 = vpop.f32.mrb[0].mxu0
        %v1256 = vpop.f32.mrb[0].mxu0
        %v1257 = vadd.f32 0.0, %v1256
        %v1258 = vpop.f32.mrb[0].mxu0
        %1259 = vmatprep.mubr.bf16.mxu0 0
        %1260 = vmatmul.mubr.bf16.gmra.mrb[0].mxu0 %v1117
        %v1261 = vpop.f32.mrb[0].mxu0
        %v1262 = vadd.f32 0.0, %v1261
        %v1263 = vpop.f32.mrb[0].mxu0
        %v1264 = vpop.f32.mrb[0].mxu0
        %v1265 = vadd.f32 0.0, %v1264
        %v1266 = vpop.f32.mrb[0].mxu0
        %1267 = vmatprep.mubr.bf16.mxu0 0
        %1268 = vmatmul.mubr.bf16.gmra.mrb[0].mxu0 %v1120
        %v1269 = vpop.f32.mrb[0].mxu0
        %v1270 = vadd.f32 0.0, %v1269
        %v1271 = vpop.f32.mrb[0].mxu0
        %v1272 = vpop.f32.mrb[0].mxu0
        %v1273 = vadd.f32 0.0, %v1272
        %v1274 = vpop.f32.mrb[0].mxu0
        %1275 = vmatprep.mubr.bf16.mxu0 0
        %1276 = vmatmul.mubr.bf16.gmra.mrb[0].mxu0 %v1123
        %v1277 = vpop.f32.mrb[0].mxu0
        %v1278 = vadd.f32 0.0, %v1277
        %v1279 = vpop.f32.mrb[0].mxu0
        %v1280 = vpop.f32.mrb[0].mxu0
        %v1281 = vadd.f32 0.0, %v1280
        %v1282 = vpop.f32.mrb[0].mxu0
        %1283 = vmatprep.mubr.bf16.mxu0 0
        %1284 = vmatmul.mubr.bf16.gmra.mrb[0].mxu0 %v1126
        %v1285 = vpop.f32.mrb[0].mxu0
        %v1286 = vadd.f32 0.0, %v1285
        %v1287 = vpop.f32.mrb[0].mxu0
        %v1288 = vpop.f32.mrb[0].mxu0
        %v1289 = vadd.f32 0.0, %v1288
        %v1290 = vpop.f32.mrb[0].mxu0
        %1291 = vdwg.mxu0
        %v1292 = vadd.f32 %v994, %v1166
        %v1293 = vadd.f32 %v995, %v1169
        %v1294 = vadd.f32 %v996, %v1174
        %v1295 = vadd.f32 %v997, %v1177
        %v1296 = vadd.f32 %v998, %v1182
        %v1297 = vadd.f32 %v999, %v1185
        %v1298 = vadd.f32 %v1000, %v1190
        %v1299 = vadd.f32 %v1001, %v1193
        %v1300 = vadd.f32 %v1002, %v1198
        %v1301 = vadd.f32 %v1003, %v1201
        %v1302 = vadd.f32 %v1004, %v1206
        %v1303 = vadd.f32 %v1005, %v1209
        %v1304 = vadd.f32 %v1006, %v1214
        %v1305 = vadd.f32 %v1007, %v1217
        %v1306 = vadd.f32 %v1008, %v1222
        %v1307 = vadd.f32 %v1009, %v1225
        %v1308 = vadd.f32 %v1010, %v1230
        %v1309 = vadd.f32 %v1011, %v1233
        %v1310 = vadd.f32 %v1012, %v1238
        %v1311 = vadd.f32 %v1013, %v1241
        %v1312 = vadd.f32 %v1014, %v1246
        %v1313 = vadd.f32 %v1015, %v1249
        %v1314 = vadd.f32 %v1016, %v1254
        %v1315 = vadd.f32 %v1017, %v1257
        %v1316 = vadd.f32 %v1018, %v1262
        %v1317 = vadd.f32 %v1019, %v1265
        %v1318 = vadd.f32 %v1020, %v1270
        %v1319 = vadd.f32 %v1021, %v1273
        %v1320 = vadd.f32 %v1022, %v1278
        %v1321 = vadd.f32 %v1023, %v1281
        %v1322 = vadd.f32 %v1024, %v1286
        %v1323 = vadd.f32 %v1025, %v1289
        %v1325 = vsel %vm243, %v1078, 0
        %v1328 = vsel %vm495, %v229, 0
        %1330 = vmatprep.subr.bf16.mxu0 0
        %1331 = vmatpush1.bf16.msra.mxu0 %v1328
        %1332 = vmatprep.subr.bf16.mxu0 0
        %1333 = vmatpush1.bf16.msra.mxu0 0
        %1334 = vmatprep.subr.bf16.mxu0 0
        %1335 = vmatpush1.bf16.msra.mxu0 0
        %1336 = vmatprep.subr.bf16.mxu0 0
        %1337 = vmatpush1.bf16.msra.mxu0 0
        %1338 = vmatprep.subr.bf16.mxu0 0
        %1339 = vmatpush1.bf16.msra.mxu0 0
        %1340 = vmatprep.subr.bf16.mxu0 0
        %1341 = vmatpush1.bf16.msra.mxu0 0
        %1342 = vmatprep.subr.bf16.mxu0 0
        %1343 = vmatpush1.bf16.msra.mxu0 0
        %1344 = vmatprep.subr.bf16.mxu0 0
        %1345 = vmatpush1.bf16.msra.mxu0 0
        %1346 = vmatprep.subr.bf16.mxu0 0
        %1347 = vmatpush1.bf16.msra.mxu0 0
        %1348 = vmatprep.subr.bf16.mxu0 0
        %1349 = vmatpush1.bf16.msra.mxu0 0
        %1350 = vmatprep.subr.bf16.mxu0 0
        %1351 = vmatpush1.bf16.msra.mxu0 0
        %1352 = vmatprep.subr.bf16.mxu0 0
        %1353 = vmatpush1.bf16.msra.mxu0 0
        %1354 = vmatprep.subr.bf16.mxu0 0
        %1355 = vmatpush1.bf16.msra.mxu0 0
        %1356 = vmatprep.subr.bf16.mxu0 0
        %1357 = vmatpush1.bf16.msra.mxu0 0
        %1358 = vmatprep.subr.bf16.mxu0 0
        %1359 = vmatpush1.bf16.msra.mxu0 0
        %1360 = vmatprep.subr.bf16.mxu0 0
        %1361 = vmatpush1.bf16.msra.mxu0 0
        %1362 = vmatprep.mubr.bf16.mxu0 0
        %1363 = vmatmul.mubr.bf16.gmra.mrb[0].mxu0 %v1084
        %v1364 = vpop.f32.mrb[0].mxu0
        %v1365 = vadd.f32 0.0, %v1364
        %v1366 = vpop.f32.mrb[0].mxu0
        %v1367 = vpop.f32.mrb[0].mxu0
        %v1368 = vadd.f32 0.0, %v1367
        %v1369 = vpop.f32.mrb[0].mxu0
        %1370 = vmatprep.mubr.bf16.mxu0 0
        %1371 = vmatmul.mubr.bf16.gmra.mrb[0].mxu0 %v1087
        %v1372 = vpop.f32.mrb[0].mxu0
        %v1373 = vadd.f32 0.0, %v1372
        %v1374 = vpop.f32.mrb[0].mxu0
        %v1375 = vpop.f32.mrb[0].mxu0
        %v1376 = vadd.f32 0.0, %v1375
        %v1377 = vpop.f32.mrb[0].mxu0
        %1378 = vmatprep.mubr.bf16.mxu0 0
        %1379 = vmatmul.mubr.bf16.gmra.mrb[0].mxu0 %v1090
        %v1380 = vpop.f32.mrb[0].mxu0
        %v1381 = vadd.f32 0.0, %v1380
        %v1382 = vpop.f32.mrb[0].mxu0
        %v1383 = vpop.f32.mrb[0].mxu0
        %v1384 = vadd.f32 0.0, %v1383
        %v1385 = vpop.f32.mrb[0].mxu0
        %1386 = vmatprep.mubr.bf16.mxu0 0
        %1387 = vmatmul.mubr.bf16.gmra.mrb[0].mxu0 %v1093
        %v1388 = vpop.f32.mrb[0].mxu0
        %v1389 = vadd.f32 0.0, %v1388
        %v1390 = vpop.f32.mrb[0].mxu0
        %v1391 = vpop.f32.mrb[0].mxu0
        %v1392 = vadd.f32 0.0, %v1391
        %v1393 = vpop.f32.mrb[0].mxu0
        %1394 = vmatprep.mubr.bf16.mxu0 0
        %1395 = vmatmul.mubr.bf16.gmra.mrb[0].mxu0 %v1096
        %v1396 = vpop.f32.mrb[0].mxu0
        %v1397 = vadd.f32 0.0, %v1396
        %v1398 = vpop.f32.mrb[0].mxu0
        %v1399 = vpop.f32.mrb[0].mxu0
        %v1400 = vadd.f32 0.0, %v1399
        %v1401 = vpop.f32.mrb[0].mxu0
        %1402 = vmatprep.mubr.bf16.mxu0 0
        %1403 = vmatmul.mubr.bf16.gmra.mrb[0].mxu0 %v1099
        %v1404 = vpop.f32.mrb[0].mxu0
        %v1405 = vadd.f32 0.0, %v1404
        %v1406 = vpop.f32.mrb[0].mxu0
        %v1407 = vpop.f32.mrb[0].mxu0
        %v1408 = vadd.f32 0.0, %v1407
        %v1409 = vpop.f32.mrb[0].mxu0
        %1410 = vmatprep.mubr.bf16.mxu0 0
        %1411 = vmatmul.mubr.bf16.gmra.mrb[0].mxu0 %v1102
        %v1412 = vpop.f32.mrb[0].mxu0
        %v1413 = vadd.f32 0.0, %v1412
        %v1414 = vpop.f32.mrb[0].mxu0
        %v1415 = vpop.f32.mrb[0].mxu0
        %v1416 = vadd.f32 0.0, %v1415
        %v1417 = vpop.f32.mrb[0].mxu0
        %1418 = vmatprep.mubr.bf16.mxu0 0
        %1419 = vmatmul.mubr.bf16.gmra.mrb[0].mxu0 %v1105
        %v1420 = vpop.f32.mrb[0].mxu0
        %v1421 = vadd.f32 0.0, %v1420
        %v1422 = vpop.f32.mrb[0].mxu0
        %v1423 = vpop.f32.mrb[0].mxu0
        %v1424 = vadd.f32 0.0, %v1423
        %v1425 = vpop.f32.mrb[0].mxu0
        %1426 = vmatprep.mubr.bf16.mxu0 0
        %1427 = vmatmul.mubr.bf16.gmra.mrb[0].mxu0 %v1108
        %v1428 = vpop.f32.mrb[0].mxu0
        %v1429 = vadd.f32 0.0, %v1428
        %v1430 = vpop.f32.mrb[0].mxu0
        %v1431 = vpop.f32.mrb[0].mxu0
        %v1432 = vadd.f32 0.0, %v1431
        %v1433 = vpop.f32.mrb[0].mxu0
        %1434 = vmatprep.mubr.bf16.mxu0 0
        %1435 = vmatmul.mubr.bf16.gmra.mrb[0].mxu0 %v1111
        %v1436 = vpop.f32.mrb[0].mxu0
        %v1437 = vadd.f32 0.0, %v1436
        %v1438 = vpop.f32.mrb[0].mxu0
        %v1439 = vpop.f32.mrb[0].mxu0
        %v1440 = vadd.f32 0.0, %v1439
        %v1441 = vpop.f32.mrb[0].mxu0
        %1442 = vmatprep.mubr.bf16.mxu0 0
        %1443 = vmatmul.mubr.bf16.gmra.mrb[0].mxu0 %v1114
        %v1444 = vpop.f32.mrb[0].mxu0
        %v1445 = vadd.f32 0.0, %v1444
        %v1446 = vpop.f32.mrb[0].mxu0
        %v1447 = vpop.f32.mrb[0].mxu0
        %v1448 = vadd.f32 0.0, %v1447
        %v1449 = vpop.f32.mrb[0].mxu0
        %1450 = vmatprep.mubr.bf16.mxu0 0
        %1451 = vmatmul.mubr.bf16.gmra.mrb[0].mxu0 %v1117
        %v1452 = vpop.f32.mrb[0].mxu0
        %v1453 = vadd.f32 0.0, %v1452
        %v1454 = vpop.f32.mrb[0].mxu0
        %v1455 = vpop.f32.mrb[0].mxu0
        %v1456 = vadd.f32 0.0, %v1455
        %v1457 = vpop.f32.mrb[0].mxu0
        %1458 = vmatprep.mubr.bf16.mxu0 0
        %1459 = vmatmul.mubr.bf16.gmra.mrb[0].mxu0 %v1120
        %v1460 = vpop.f32.mrb[0].mxu0
        %v1461 = vadd.f32 0.0, %v1460
        %v1462 = vpop.f32.mrb[0].mxu0
        %v1463 = vpop.f32.mrb[0].mxu0
        %v1464 = vadd.f32 0.0, %v1463
        %v1465 = vpop.f32.mrb[0].mxu0
        %1466 = vmatprep.mubr.bf16.mxu0 0
        %1467 = vmatmul.mubr.bf16.gmra.mrb[0].mxu0 %v1123
        %v1468 = vpop.f32.mrb[0].mxu0
        %v1469 = vadd.f32 0.0, %v1468
        %v1470 = vpop.f32.mrb[0].mxu0
        %v1471 = vpop.f32.mrb[0].mxu0
        %v1472 = vadd.f32 0.0, %v1471
        %v1473 = vpop.f32.mrb[0].mxu0
        %1474 = vmatprep.mubr.bf16.mxu0 0
        %1475 = vmatmul.mubr.bf16.gmra.mrb[0].mxu0 %v1126
        %v1476 = vpop.f32.mrb[0].mxu0
        %v1477 = vadd.f32 0.0, %v1476
        %v1478 = vpop.f32.mrb[0].mxu0
        %v1479 = vpop.f32.mrb[0].mxu0
        %v1480 = vadd.f32 0.0, %v1479
        %v1481 = vpop.f32.mrb[0].mxu0
        %1482 = vmatprep.mubr.bf16.mxu0 0
        %1483 = vmatmul.mubr.bf16.gmra.mrb[0].mxu0 %v1325
        %v1484 = vpop.f32.mrb[0].mxu0
        %v1485 = vadd.f32 0.0, %v1484
        %v1486 = vpop.f32.mrb[0].mxu0
        %v1487 = vpop.f32.mrb[0].mxu0
        %v1488 = vadd.f32 0.0, %v1487
        %v1489 = vpop.f32.mrb[0].mxu0
        %1490 = vdwg.mxu0
        %v1491 = vadd.f32 %v1292, %v1365
        %v1492 = vadd.f32 %v1293, %v1368
        %v1493 = vadd.f32 %v1294, %v1373
        %v1494 = vadd.f32 %v1295, %v1376
        %v1495 = vadd.f32 %v1296, %v1381
        %v1496 = vadd.f32 %v1297, %v1384
        %v1497 = vadd.f32 %v1298, %v1389
        %v1498 = vadd.f32 %v1299, %v1392
        %v1499 = vadd.f32 %v1300, %v1397
        %v1500 = vadd.f32 %v1301, %v1400
        %v1501 = vadd.f32 %v1302, %v1405
        %v1502 = vadd.f32 %v1303, %v1408
        %v1503 = vadd.f32 %v1304, %v1413
        %v1504 = vadd.f32 %v1305, %v1416
        %v1505 = vadd.f32 %v1306, %v1421
        %v1506 = vadd.f32 %v1307, %v1424
        %v1507 = vadd.f32 %v1308, %v1429
        %v1508 = vadd.f32 %v1309, %v1432
        %v1509 = vadd.f32 %v1310, %v1437
        %v1510 = vadd.f32 %v1311, %v1440
        %v1511 = vadd.f32 %v1312, %v1445
        %v1512 = vadd.f32 %v1313, %v1448
        %v1513 = vadd.f32 %v1314, %v1453
        %v1514 = vadd.f32 %v1315, %v1456
        %v1515 = vadd.f32 %v1316, %v1461
        %v1516 = vadd.f32 %v1317, %v1464
        %v1517 = vadd.f32 %v1318, %v1469
        %v1518 = vadd.f32 %v1319, %v1472
        %v1519 = vadd.f32 %v1320, %v1477
        %v1520 = vadd.f32 %v1321, %v1480
        %v1521 = vadd.f32 %v1322, %v1485
        %v1522 = vadd.f32 %v1323, %v1488
        %v1524 = vsel %vm243, %v1079, 0
        %v1527 = vsel %vm495, %v232, 0
        %1529 = vmatprep.subr.bf16.mxu0 0
        %1530 = vmatpush1.bf16.msra.mxu0 %v1527
        %1531 = vmatprep.subr.bf16.mxu0 0
        %1532 = vmatpush1.bf16.msra.mxu0 0
        %1533 = vmatprep.subr.bf16.mxu0 0
        %1534 = vmatpush1.bf16.msra.mxu0 0
        %1535 = vmatprep.subr.bf16.mxu0 0
        %1536 = vmatpush1.bf16.msra.mxu0 0
        %1537 = vmatprep.subr.bf16.mxu0 0
        %1538 = vmatpush1.bf16.msra.mxu0 0
        %1539 = vmatprep.subr.bf16.mxu0 0
        %1540 = vmatpush1.bf16.msra.mxu0 0
        %1541 = vmatprep.subr.bf16.mxu0 0
        %1542 = vmatpush1.bf16.msra.mxu0 0
        %1543 = vmatprep.subr.bf16.mxu0 0
        %1544 = vmatpush1.bf16.msra.mxu0 0
        %1545 = vmatprep.subr.bf16.mxu0 0
        %1546 = vmatpush1.bf16.msra.mxu0 0
        %1547 = vmatprep.subr.bf16.mxu0 0
        %1548 = vmatpush1.bf16.msra.mxu0 0
        %1549 = vmatprep.subr.bf16.mxu0 0
        %1550 = vmatpush1.bf16.msra.mxu0 0
        %1551 = vmatprep.subr.bf16.mxu0 0
        %1552 = vmatpush1.bf16.msra.mxu0 0
        %1553 = vmatprep.subr.bf16.mxu0 0
        %1554 = vmatpush1.bf16.msra.mxu0 0
        %1555 = vmatprep.subr.bf16.mxu0 0
        %1556 = vmatpush1.bf16.msra.mxu0 0
        %1557 = vmatprep.subr.bf16.mxu0 0
        %1558 = vmatpush1.bf16.msra.mxu0 0
        %1559 = vmatprep.subr.bf16.mxu0 0
        %1560 = vmatpush1.bf16.msra.mxu0 0
        %1561 = vmatprep.mubr.bf16.mxu0 0
        %1562 = vmatmul.mubr.bf16.gmra.mrb[0].mxu0 %v1087
        %v1563 = vpop.f32.mrb[0].mxu0
        %v1564 = vadd.f32 0.0, %v1563
        %v1565 = vpop.f32.mrb[0].mxu0
        %v1566 = vpop.f32.mrb[0].mxu0
        %v1567 = vadd.f32 0.0, %v1566
        %v1568 = vpop.f32.mrb[0].mxu0
        %1569 = vmatprep.mubr.bf16.mxu0 0
        %1570 = vmatmul.mubr.bf16.gmra.mrb[0].mxu0 %v1090
        %v1571 = vpop.f32.mrb[0].mxu0
        %v1572 = vadd.f32 0.0, %v1571
        %v1573 = vpop.f32.mrb[0].mxu0
        %v1574 = vpop.f32.mrb[0].mxu0
        %v1575 = vadd.f32 0.0, %v1574
        %v1576 = vpop.f32.mrb[0].mxu0
        %1577 = vmatprep.mubr.bf16.mxu0 0
        %1578 = vmatmul.mubr.bf16.gmra.mrb[0].mxu0 %v1093
        %v1579 = vpop.f32.mrb[0].mxu0
        %v1580 = vadd.f32 0.0, %v1579
        %v1581 = vpop.f32.mrb[0].mxu0
        %v1582 = vpop.f32.mrb[0].mxu0
        %v1583 = vadd.f32 0.0, %v1582
        %v1584 = vpop.f32.mrb[0].mxu0
        %1585 = vmatprep.mubr.bf16.mxu0 0
        %1586 = vmatmul.mubr.bf16.gmra.mrb[0].mxu0 %v1096
        %v1587 = vpop.f32.mrb[0].mxu0
        %v1588 = vadd.f32 0.0, %v1587
        %v1589 = vpop.f32.mrb[0].mxu0
        %v1590 = vpop.f32.mrb[0].mxu0
        %v1591 = vadd.f32 0.0, %v1590
        %v1592 = vpop.f32.mrb[0].mxu0
        %1593 = vmatprep.mubr.bf16.mxu0 0
        %1594 = vmatmul.mubr.bf16.gmra.mrb[0].mxu0 %v1099
        %v1595 = vpop.f32.mrb[0].mxu0
        %v1596 = vadd.f32 0.0, %v1595
        %v1597 = vpop.f32.mrb[0].mxu0
        %v1598 = vpop.f32.mrb[0].mxu0
        %v1599 = vadd.f32 0.0, %v1598
        %v1600 = vpop.f32.mrb[0].mxu0
        %1601 = vmatprep.mubr.bf16.mxu0 0
        %1602 = vmatmul.mubr.bf16.gmra.mrb[0].mxu0 %v1102
        %v1603 = vpop.f32.mrb[0].mxu0
        %v1604 = vadd.f32 0.0, %v1603
        %v1605 = vpop.f32.mrb[0].mxu0
        %v1606 = vpop.f32.mrb[0].mxu0
        %v1607 = vadd.f32 0.0, %v1606
        %v1608 = vpop.f32.mrb[0].mxu0
        %1609 = vmatprep.mubr.bf16.mxu0 0
        %1610 = vmatmul.mubr.bf16.gmra.mrb[0].mxu0 %v1105
        %v1611 = vpop.f32.mrb[0].mxu0
        %v1612 = vadd.f32 0.0, %v1611
        %v1613 = vpop.f32.mrb[0].mxu0
        %v1614 = vpop.f32.mrb[0].mxu0
        %v1615 = vadd.f32 0.0, %v1614
        %v1616 = vpop.f32.mrb[0].mxu0
        %1617 = vmatprep.mubr.bf16.mxu0 0
        %1618 = vmatmul.mubr.bf16.gmra.mrb[0].mxu0 %v1108
        %v1619 = vpop.f32.mrb[0].mxu0
        %v1620 = vadd.f32 0.0, %v1619
        %v1621 = vpop.f32.mrb[0].mxu0
        %v1622 = vpop.f32.mrb[0].mxu0
        %v1623 = vadd.f32 0.0, %v1622
        %v1624 = vpop.f32.mrb[0].mxu0
        %1625 = vmatprep.mubr.bf16.mxu0 0
        %1626 = vmatmul.mubr.bf16.gmra.mrb[0].mxu0 %v1111
        %v1627 = vpop.f32.mrb[0].mxu0
        %v1628 = vadd.f32 0.0, %v1627
        %v1629 = vpop.f32.mrb[0].mxu0
        %v1630 = vpop.f32.mrb[0].mxu0
        %v1631 = vadd.f32 0.0, %v1630
        %v1632 = vpop.f32.mrb[0].mxu0
        %1633 = vmatprep.mubr.bf16.mxu0 0
        %1634 = vmatmul.mubr.bf16.gmra.mrb[0].mxu0 %v1114
        %v1635 = vpop.f32.mrb[0].mxu0
        %v1636 = vadd.f32 0.0, %v1635
        %v1637 = vpop.f32.mrb[0].mxu0
        %v1638 = vpop.f32.mrb[0].mxu0
        %v1639 = vadd.f32 0.0, %v1638
        %v1640 = vpop.f32.mrb[0].mxu0
        %1641 = vmatprep.mubr.bf16.mxu0 0
        %1642 = vmatmul.mubr.bf16.gmra.mrb[0].mxu0 %v1117
        %v1643 = vpop.f32.mrb[0].mxu0
        %v1644 = vadd.f32 0.0, %v1643
        %v1645 = vpop.f32.mrb[0].mxu0
        %v1646 = vpop.f32.mrb[0].mxu0
        %v1647 = vadd.f32 0.0, %v1646
        %v1648 = vpop.f32.mrb[0].mxu0
        %1649 = vmatprep.mubr.bf16.mxu0 0
        %1650 = vmatmul.mubr.bf16.gmra.mrb[0].mxu0 %v1120
        %v1651 = vpop.f32.mrb[0].mxu0
        %v1652 = vadd.f32 0.0, %v1651
        %v1653 = vpop.f32.mrb[0].mxu0
        %v1654 = vpop.f32.mrb[0].mxu0
        %v1655 = vadd.f32 0.0, %v1654
        %v1656 = vpop.f32.mrb[0].mxu0
        %1657 = vmatprep.mubr.bf16.mxu0 0
        %1658 = vmatmul.mubr.bf16.gmra.mrb[0].mxu0 %v1123
        %v1659 = vpop.f32.mrb[0].mxu0
        %v1660 = vadd.f32 0.0, %v1659
        %v1661 = vpop.f32.mrb[0].mxu0
        %v1662 = vpop.f32.mrb[0].mxu0
        %v1663 = vadd.f32 0.0, %v1662
        %v1664 = vpop.f32.mrb[0].mxu0
        %1665 = vmatprep.mubr.bf16.mxu0 0
        %1666 = vmatmul.mubr.bf16.gmra.mrb[0].mxu0 %v1126
        %v1667 = vpop.f32.mrb[0].mxu0
        %v1668 = vadd.f32 0.0, %v1667
        %v1669 = vpop.f32.mrb[0].mxu0
        %v1670 = vpop.f32.mrb[0].mxu0
        %v1671 = vadd.f32 0.0, %v1670
        %v1672 = vpop.f32.mrb[0].mxu0
        %1673 = vmatprep.mubr.bf16.mxu0 0
        %1674 = vmatmul.mubr.bf16.gmra.mrb[0].mxu0 %v1325
        %v1675 = vpop.f32.mrb[0].mxu0
        %v1676 = vadd.f32 0.0, %v1675
        %v1677 = vpop.f32.mrb[0].mxu0
        %v1678 = vpop.f32.mrb[0].mxu0
        %v1679 = vadd.f32 0.0, %v1678
        %v1680 = vpop.f32.mrb[0].mxu0
        %1681 = vmatprep.mubr.bf16.mxu0 0
        %1682 = vmatmul.mubr.bf16.gmra.mrb[0].mxu0 %v1524
        %v1683 = vpop.f32.mrb[0].mxu0
        %v1684 = vadd.f32 0.0, %v1683
        %v1685 = vpop.f32.mrb[0].mxu0
        %v1686 = vpop.f32.mrb[0].mxu0
        %v1687 = vadd.f32 0.0, %v1686
        %v1688 = vpop.f32.mrb[0].mxu0
        %1689 = vdwg.mxu0
        %v1690 = vadd.f32 %v1491, %v1564
        %v1691 = vadd.f32 %v1492, %v1567
        %v1692 = vadd.f32 %v1493, %v1572
        %v1693 = vadd.f32 %v1494, %v1575
        %v1694 = vadd.f32 %v1495, %v1580
        %v1695 = vadd.f32 %v1496, %v1583
        %v1696 = vadd.f32 %v1497, %v1588
        %v1697 = vadd.f32 %v1498, %v1591
        %v1698 = vadd.f32 %v1499, %v1596
        %v1699 = vadd.f32 %v1500, %v1599
        %v1700 = vadd.f32 %v1501, %v1604
        %v1701 = vadd.f32 %v1502, %v1607
        %v1702 = vadd.f32 %v1503, %v1612
        %v1703 = vadd.f32 %v1504, %v1615
        %v1704 = vadd.f32 %v1505, %v1620
        %v1705 = vadd.f32 %v1506, %v1623
        %v1706 = vadd.f32 %v1507, %v1628
        %v1707 = vadd.f32 %v1508, %v1631
        %v1708 = vadd.f32 %v1509, %v1636
        %v1709 = vadd.f32 %v1510, %v1639
        %v1710 = vadd.f32 %v1511, %v1644
        %v1711 = vadd.f32 %v1512, %v1647
        %v1712 = vadd.f32 %v1513, %v1652
        %v1713 = vadd.f32 %v1514, %v1655
        %v1714 = vadd.f32 %v1515, %v1660
        %v1715 = vadd.f32 %v1516, %v1663
        %v1716 = vadd.f32 %v1517, %v1668
        %v1717 = vadd.f32 %v1518, %v1671
        %v1718 = vadd.f32 %v1519, %v1676
        %v1719 = vadd.f32 %v1520, %v1679
        %v1720 = vadd.f32 %v1521, %v1684
        %v1721 = vadd.f32 %v1522, %v1687
        %v1722 = vld [vmem:[#allocation2 + $0x2] sm:$0xff]
        %v1723 = vld [vmem:[#allocation2 + $0xa] sm:$0xff]
        %v1724 = vld [vmem:[#allocation2 + $0x1a] sm:$0xff]
        %v1725 = vld [vmem:[#allocation2 + $0x22] sm:$0xff]
        %v1726 = vld [vmem:[#allocation2 + $0x32] sm:$0xff]
        %v1727 = vld [vmem:[#allocation2 + $0x3a] sm:$0xff]
        %v1728 = vld [vmem:[#allocation2 + $0x4a] sm:$0xff]
        %v1729 = vld [vmem:[#allocation2 + $0x52] sm:$0xff]
        %v1730 = vld [vmem:[#allocation2 + $0x62] sm:$0xff]
        %v1731 = vld [vmem:[#allocation2 + $0x6a] sm:$0xff]
        %v1732 = vld [vmem:[#allocation2 + $0x7a] sm:$0xff]
        %v1733 = vld [vmem:[#allocation2 + $0x82] sm:$0xff]
        %v1734 = vld [vmem:[#allocation2 + $0x92] sm:$0xff]
        %v1735 = vld [vmem:[#allocation2 + $0x9a] sm:$0xff]
        %v1736 = vld [vmem:[#allocation2 + $0xaa] sm:$0xff]
        %v1737 = vld [vmem:[#allocation2 + $0xb2] sm:$0xff]
        %v1738 = vld [vmem:[#allocation2 + $0xc2] sm:$0xff]
        %v1739 = vld [vmem:[#allocation2 + $0xca] sm:$0xff]
        %v1740 = vld [vmem:[#allocation2 + $0xda] sm:$0xff]
        %v1741 = vld [vmem:[#allocation2 + $0xe2] sm:$0xff]
        %v1742 = vld [vmem:[#allocation2 + $0xf2] sm:$0xff]
        %v1743 = vld [vmem:[#allocation2 + $0xfa] sm:$0xff]
        %v1744 = vld [vmem:[#allocation2 + $0x10a] sm:$0xff]
        %v1745 = vld [vmem:[#allocation2 + $0x112] sm:$0xff]
        %v1746 = vld [vmem:[#allocation2 + $0x122] sm:$0xff]
        %v1747 = vld [vmem:[#allocation2 + $0x12a] sm:$0xff]
        %v1748 = vld [vmem:[#allocation2 + $0x13a] sm:$0xff]
        %v1749 = vld [vmem:[#allocation2 + $0x142] sm:$0xff]
        %v1750 = vld [vmem:[#allocation2 + $0x152] sm:$0xff]
        %v1751 = vld [vmem:[#allocation2 + $0x15a] sm:$0xff]
        %v1752 = vld [vmem:[#allocation2 + $0x16a] sm:$0xff]
        %v1753 = vld [vmem:[#allocation2 + $0x172] sm:$0xff]
        %v1754 = vld [vmem:[#allocation2 + $0x182] sm:$0xff]
        %v1755 = vld [vmem:[#allocation2 + $0x18a] sm:$0xff]
        %v1756 = vld [vmem:[#allocation2 + $0x19a] sm:$0xff]
        %v1757 = vld [vmem:[#allocation2 + $0x1a2] sm:$0xff]
        %v1758 = vpack.c.bf16 %v1723, %v1722
        %v1759 = vpack.c.bf16 %v1725, %v1724
        %v1760 = vpack.c.bf16 %v1727, %v1726
        %v1761 = vpack.c.bf16 %v1729, %v1728
        %v1762 = vpack.c.bf16 %v1731, %v1730
        %v1763 = vpack.c.bf16 %v1733, %v1732
        %v1764 = vpack.c.bf16 %v1735, %v1734
        %v1765 = vpack.c.bf16 %v1737, %v1736
        %v1766 = vpack.c.bf16 %v1739, %v1738
        %v1767 = vpack.c.bf16 %v1741, %v1740
        %v1768 = vpack.c.bf16 %v1743, %v1742
        %v1769 = vpack.c.bf16 %v1745, %v1744
        %v1770 = vpack.c.bf16 %v1747, %v1746
        %v1771 = vpack.c.bf16 %v1749, %v1748
        %v1772 = vpack.c.bf16 %v1751, %v1750
        %v1773 = vpack.c.bf16 %v1753, %v1752
        %v1774 = vpack.c.bf16 %v1755, %v1754
        %v1775 = vpack.c.bf16 %v1757, %v1756
        %v1777 = vsel %vm243, %v1758, 0
        %v1780 = vsel %vm243, %v1759, 0
        %v1783 = vsel %vm243, %v1760, 0
        %v1786 = vsel %vm243, %v1761, 0
        %v1789 = vsel %vm243, %v1762, 0
        %v1792 = vsel %vm243, %v1763, 0
        %v1795 = vsel %vm243, %v1764, 0
        %v1798 = vsel %vm243, %v1765, 0
        %v1801 = vsel %vm243, %v1766, 0
        %v1804 = vsel %vm243, %v1767, 0
        %v1807 = vsel %vm243, %v1768, 0
        %v1810 = vsel %vm243, %v1769, 0
        %v1813 = vsel %vm243, %v1770, 0
        %v1816 = vsel %vm243, %v1771, 0
        %v1819 = vsel %vm243, %v1772, 0
        %v1822 = vsel %vm243, %v1773, 0
        %v1825 = vsel %vm495, %v227, 0
        %1827 = vmatprep.subr.bf16.mxu0 0
        %1828 = vmatpush1.bf16.msra.mxu0 %v1825
        %1829 = vmatprep.subr.bf16.mxu0 0
        %1830 = vmatpush1.bf16.msra.mxu0 0
        %1831 = vmatprep.subr.bf16.mxu0 0
        %1832 = vmatpush1.bf16.msra.mxu0 0
        %1833 = vmatprep.subr.bf16.mxu0 0
        %1834 = vmatpush1.bf16.msra.mxu0 0
        %1835 = vmatprep.subr.bf16.mxu0 0
        %1836 = vmatpush1.bf16.msra.mxu0 0
        %1837 = vmatprep.subr.bf16.mxu0 0
        %1838 = vmatpush1.bf16.msra.mxu0 0
        %1839 = vmatprep.subr.bf16.mxu0 0
        %1840 = vmatpush1.bf16.msra.mxu0 0
        %1841 = vmatprep.subr.bf16.mxu0 0
        %1842 = vmatpush1.bf16.msra.mxu0 0
        %1843 = vmatprep.subr.bf16.mxu0 0
        %1844 = vmatpush1.bf16.msra.mxu0 0
        %1845 = vmatprep.subr.bf16.mxu0 0
        %1846 = vmatpush1.bf16.msra.mxu0 0
        %1847 = vmatprep.subr.bf16.mxu0 0
        %1848 = vmatpush1.bf16.msra.mxu0 0
        %1849 = vmatprep.subr.bf16.mxu0 0
        %1850 = vmatpush1.bf16.msra.mxu0 0
        %1851 = vmatprep.subr.bf16.mxu0 0
        %1852 = vmatpush1.bf16.msra.mxu0 0
        %1853 = vmatprep.subr.bf16.mxu0 0
        %1854 = vmatpush1.bf16.msra.mxu0 0
        %1855 = vmatprep.subr.bf16.mxu0 0
        %1856 = vmatpush1.bf16.msra.mxu0 0
        %1857 = vmatprep.subr.bf16.mxu0 0
        %1858 = vmatpush1.bf16.msra.mxu0 0
        %1859 = vmatprep.mubr.bf16.mxu0 0
        %1860 = vmatmul.mubr.bf16.gmra.mrb[0].mxu0 %v1777
        %v1861 = vpop.f32.mrb[0].mxu0
        %v1862 = vadd.f32 0.0, %v1861
        %v1863 = vpop.f32.mrb[0].mxu0
        %v1864 = vpop.f32.mrb[0].mxu0
        %v1865 = vadd.f32 0.0, %v1864
        %v1866 = vpop.f32.mrb[0].mxu0
        %1867 = vmatprep.mubr.bf16.mxu0 0
        %1868 = vmatmul.mubr.bf16.gmra.mrb[0].mxu0 %v1780
        %v1869 = vpop.f32.mrb[0].mxu0
        %v1870 = vadd.f32 0.0, %v1869
        %v1871 = vpop.f32.mrb[0].mxu0
        %v1872 = vpop.f32.mrb[0].mxu0
        %v1873 = vadd.f32 0.0, %v1872
        %v1874 = vpop.f32.mrb[0].mxu0
        %1875 = vmatprep.mubr.bf16.mxu0 0
        %1876 = vmatmul.mubr.bf16.gmra.mrb[0].mxu0 %v1783
        %v1877 = vpop.f32.mrb[0].mxu0
        %v1878 = vadd.f32 0.0, %v1877
        %v1879 = vpop.f32.mrb[0].mxu0
        %v1880 = vpop.f32.mrb[0].mxu0
        %v1881 = vadd.f32 0.0, %v1880
        %v1882 = vpop.f32.mrb[0].mxu0
        %1883 = vmatprep.mubr.bf16.mxu0 0
        %1884 = vmatmul.mubr.bf16.gmra.mrb[0].mxu0 %v1786
        %v1885 = vpop.f32.mrb[0].mxu0
        %v1886 = vadd.f32 0.0, %v1885
        %v1887 = vpop.f32.mrb[0].mxu0
        %v1888 = vpop.f32.mrb[0].mxu0
        %v1889 = vadd.f32 0.0, %v1888
        %v1890 = vpop.f32.mrb[0].mxu0
        %1891 = vmatprep.mubr.bf16.mxu0 0
        %1892 = vmatmul.mubr.bf16.gmra.mrb[0].mxu0 %v1789
        %v1893 = vpop.f32.mrb[0].mxu0
        %v1894 = vadd.f32 0.0, %v1893
        %v1895 = vpop.f32.mrb[0].mxu0
        %v1896 = vpop.f32.mrb[0].mxu0
        %v1897 = vadd.f32 0.0, %v1896
        %v1898 = vpop.f32.mrb[0].mxu0
        %1899 = vmatprep.mubr.bf16.mxu0 0
        %1900 = vmatmul.mubr.bf16.gmra.mrb[0].mxu0 %v1792
        %v1901 = vpop.f32.mrb[0].mxu0
        %v1902 = vadd.f32 0.0, %v1901
        %v1903 = vpop.f32.mrb[0].mxu0
        %v1904 = vpop.f32.mrb[0].mxu0
        %v1905 = vadd.f32 0.0, %v1904
        %v1906 = vpop.f32.mrb[0].mxu0
        %1907 = vmatprep.mubr.bf16.mxu0 0
        %1908 = vmatmul.mubr.bf16.gmra.mrb[0].mxu0 %v1795
        %v1909 = vpop.f32.mrb[0].mxu0
        %v1910 = vadd.f32 0.0, %v1909
        %v1911 = vpop.f32.mrb[0].mxu0
        %v1912 = vpop.f32.mrb[0].mxu0
        %v1913 = vadd.f32 0.0, %v1912
        %v1914 = vpop.f32.mrb[0].mxu0
        %1915 = vmatprep.mubr.bf16.mxu0 0
        %1916 = vmatmul.mubr.bf16.gmra.mrb[0].mxu0 %v1798
        %v1917 = vpop.f32.mrb[0].mxu0
        %v1918 = vadd.f32 0.0, %v1917
        %v1919 = vpop.f32.mrb[0].mxu0
        %v1920 = vpop.f32.mrb[0].mxu0
        %v1921 = vadd.f32 0.0, %v1920
        %v1922 = vpop.f32.mrb[0].mxu0
        %1923 = vmatprep.mubr.bf16.mxu0 0
        %1924 = vmatmul.mubr.bf16.gmra.mrb[0].mxu0 %v1801
        %v1925 = vpop.f32.mrb[0].mxu0
        %v1926 = vadd.f32 0.0, %v1925
        %v1927 = vpop.f32.mrb[0].mxu0
        %v1928 = vpop.f32.mrb[0].mxu0
        %v1929 = vadd.f32 0.0, %v1928
        %v1930 = vpop.f32.mrb[0].mxu0
        %1931 = vmatprep.mubr.bf16.mxu0 0
        %1932 = vmatmul.mubr.bf16.gmra.mrb[0].mxu0 %v1804
        %v1933 = vpop.f32.mrb[0].mxu0
        %v1934 = vadd.f32 0.0, %v1933
        %v1935 = vpop.f32.mrb[0].mxu0
        %v1936 = vpop.f32.mrb[0].mxu0
        %v1937 = vadd.f32 0.0, %v1936
        %v1938 = vpop.f32.mrb[0].mxu0
        %1939 = vmatprep.mubr.bf16.mxu0 0
        %1940 = vmatmul.mubr.bf16.gmra.mrb[0].mxu0 %v1807
        %v1941 = vpop.f32.mrb[0].mxu0
        %v1942 = vadd.f32 0.0, %v1941
        %v1943 = vpop.f32.mrb[0].mxu0
        %v1944 = vpop.f32.mrb[0].mxu0
        %v1945 = vadd.f32 0.0, %v1944
        %v1946 = vpop.f32.mrb[0].mxu0
        %1947 = vmatprep.mubr.bf16.mxu0 0
        %1948 = vmatmul.mubr.bf16.gmra.mrb[0].mxu0 %v1810
        %v1949 = vpop.f32.mrb[0].mxu0
        %v1950 = vadd.f32 0.0, %v1949
        %v1951 = vpop.f32.mrb[0].mxu0
        %v1952 = vpop.f32.mrb[0].mxu0
        %v1953 = vadd.f32 0.0, %v1952
        %v1954 = vpop.f32.mrb[0].mxu0
        %1955 = vmatprep.mubr.bf16.mxu0 0
        %1956 = vmatmul.mubr.bf16.gmra.mrb[0].mxu0 %v1813
        %v1957 = vpop.f32.mrb[0].mxu0
        %v1958 = vadd.f32 0.0, %v1957
        %v1959 = vpop.f32.mrb[0].mxu0
        %v1960 = vpop.f32.mrb[0].mxu0
        %v1961 = vadd.f32 0.0, %v1960
        %v1962 = vpop.f32.mrb[0].mxu0
        %1963 = vmatprep.mubr.bf16.mxu0 0
        %1964 = vmatmul.mubr.bf16.gmra.mrb[0].mxu0 %v1816
        %v1965 = vpop.f32.mrb[0].mxu0
        %v1966 = vadd.f32 0.0, %v1965
        %v1967 = vpop.f32.mrb[0].mxu0
        %v1968 = vpop.f32.mrb[0].mxu0
        %v1969 = vadd.f32 0.0, %v1968
        %v1970 = vpop.f32.mrb[0].mxu0
        %1971 = vmatprep.mubr.bf16.mxu0 0
        %1972 = vmatmul.mubr.bf16.gmra.mrb[0].mxu0 %v1819
        %v1973 = vpop.f32.mrb[0].mxu0
        %v1974 = vadd.f32 0.0, %v1973
        %v1975 = vpop.f32.mrb[0].mxu0
        %v1976 = vpop.f32.mrb[0].mxu0
        %v1977 = vadd.f32 0.0, %v1976
        %v1978 = vpop.f32.mrb[0].mxu0
        %1979 = vmatprep.mubr.bf16.mxu0 0
        %1980 = vmatmul.mubr.bf16.gmra.mrb[0].mxu0 %v1822
        %v1981 = vpop.f32.mrb[0].mxu0
        %v1982 = vadd.f32 0.0, %v1981
        %v1983 = vpop.f32.mrb[0].mxu0
        %v1984 = vpop.f32.mrb[0].mxu0
        %v1985 = vadd.f32 0.0, %v1984
        %v1986 = vpop.f32.mrb[0].mxu0
        %1987 = vdwg.mxu0
        %v1988 = vadd.f32 %v1690, %v1862
        %v1989 = vadd.f32 %v1691, %v1865
        %v1990 = vadd.f32 %v1692, %v1870
        %v1991 = vadd.f32 %v1693, %v1873
        %v1992 = vadd.f32 %v1694, %v1878
        %v1993 = vadd.f32 %v1695, %v1881
        %v1994 = vadd.f32 %v1696, %v1886
        %v1995 = vadd.f32 %v1697, %v1889
        %v1996 = vadd.f32 %v1698, %v1894
        %v1997 = vadd.f32 %v1699, %v1897
        %v1998 = vadd.f32 %v1700, %v1902
        %v1999 = vadd.f32 %v1701, %v1905
        %v2000 = vadd.f32 %v1702, %v1910
        %v2001 = vadd.f32 %v1703, %v1913
        %v2002 = vadd.f32 %v1704, %v1918
        %v2003 = vadd.f32 %v1705, %v1921
        %v2004 = vadd.f32 %v1706, %v1926
        %v2005 = vadd.f32 %v1707, %v1929
        %v2006 = vadd.f32 %v1708, %v1934
        %v2007 = vadd.f32 %v1709, %v1937
        %v2008 = vadd.f32 %v1710, %v1942
        %v2009 = vadd.f32 %v1711, %v1945
        %v2010 = vadd.f32 %v1712, %v1950
        %v2011 = vadd.f32 %v1713, %v1953
        %v2012 = vadd.f32 %v1714, %v1958
        %v2013 = vadd.f32 %v1715, %v1961
        %v2014 = vadd.f32 %v1716, %v1966
        %v2015 = vadd.f32 %v1717, %v1969
        %v2016 = vadd.f32 %v1718, %v1974
        %v2017 = vadd.f32 %v1719, %v1977
        %v2018 = vadd.f32 %v1720, %v1982
        %v2019 = vadd.f32 %v1721, %v1985
        %v2021 = vsel %vm243, %v1774, 0
        %v2024 = vsel %vm495, %v230, 0
        %2026 = vmatprep.subr.bf16.mxu0 0
        %2027 = vmatpush1.bf16.msra.mxu0 %v2024
        %2028 = vmatprep.subr.bf16.mxu0 0
        %2029 = vmatpush1.bf16.msra.mxu0 0
        %2030 = vmatprep.subr.bf16.mxu0 0
        %2031 = vmatpush1.bf16.msra.mxu0 0
        %2032 = vmatprep.subr.bf16.mxu0 0
        %2033 = vmatpush1.bf16.msra.mxu0 0
        %2034 = vmatprep.subr.bf16.mxu0 0
        %2035 = vmatpush1.bf16.msra.mxu0 0
        %2036 = vmatprep.subr.bf16.mxu0 0
        %2037 = vmatpush1.bf16.msra.mxu0 0
        %2038 = vmatprep.subr.bf16.mxu0 0
        %2039 = vmatpush1.bf16.msra.mxu0 0
        %2040 = vmatprep.subr.bf16.mxu0 0
        %2041 = vmatpush1.bf16.msra.mxu0 0
        %2042 = vmatprep.subr.bf16.mxu0 0
        %2043 = vmatpush1.bf16.msra.mxu0 0
        %2044 = vmatprep.subr.bf16.mxu0 0
        %2045 = vmatpush1.bf16.msra.mxu0 0
        %2046 = vmatprep.subr.bf16.mxu0 0
        %2047 = vmatpush1.bf16.msra.mxu0 0
        %2048 = vmatprep.subr.bf16.mxu0 0
        %2049 = vmatpush1.bf16.msra.mxu0 0
        %2050 = vmatprep.subr.bf16.mxu0 0
        %2051 = vmatpush1.bf16.msra.mxu0 0
        %2052 = vmatprep.subr.bf16.mxu0 0
        %2053 = vmatpush1.bf16.msra.mxu0 0
        %2054 = vmatprep.subr.bf16.mxu0 0
        %2055 = vmatpush1.bf16.msra.mxu0 0
        %2056 = vmatprep.subr.bf16.mxu0 0
        %2057 = vmatpush1.bf16.msra.mxu0 0
        %2058 = vmatprep.mubr.bf16.mxu0 0
        %2059 = vmatmul.mubr.bf16.gmra.mrb[0].mxu0 %v1780
        %v2060 = vpop.f32.mrb[0].mxu0
        %v2061 = vadd.f32 0.0, %v2060
        %v2062 = vpop.f32.mrb[0].mxu0
        %v2063 = vpop.f32.mrb[0].mxu0
        %v2064 = vadd.f32 0.0, %v2063
        %v2065 = vpop.f32.mrb[0].mxu0
        %2066 = vmatprep.mubr.bf16.mxu0 0
        %2067 = vmatmul.mubr.bf16.gmra.mrb[0].mxu0 %v1783
        %v2068 = vpop.f32.mrb[0].mxu0
        %v2069 = vadd.f32 0.0, %v2068
        %v2070 = vpop.f32.mrb[0].mxu0
        %v2071 = vpop.f32.mrb[0].mxu0
        %v2072 = vadd.f32 0.0, %v2071
        %v2073 = vpop.f32.mrb[0].mxu0
        %2074 = vmatprep.mubr.bf16.mxu0 0
        %2075 = vmatmul.mubr.bf16.gmra.mrb[0].mxu0 %v1786
        %v2076 = vpop.f32.mrb[0].mxu0
        %v2077 = vadd.f32 0.0, %v2076
        %v2078 = vpop.f32.mrb[0].mxu0
        %v2079 = vpop.f32.mrb[0].mxu0
        %v2080 = vadd.f32 0.0, %v2079
        %v2081 = vpop.f32.mrb[0].mxu0
        %2082 = vmatprep.mubr.bf16.mxu0 0
        %2083 = vmatmul.mubr.bf16.gmra.mrb[0].mxu0 %v1789
        %v2084 = vpop.f32.mrb[0].mxu0
        %v2085 = vadd.f32 0.0, %v2084
        %v2086 = vpop.f32.mrb[0].mxu0
        %v2087 = vpop.f32.mrb[0].mxu0
        %v2088 = vadd.f32 0.0, %v2087
        %v2089 = vpop.f32.mrb[0].mxu0
        %2090 = vmatprep.mubr.bf16.mxu0 0
        %2091 = vmatmul.mubr.bf16.gmra.mrb[0].mxu0 %v1792
        %v2092 = vpop.f32.mrb[0].mxu0
        %v2093 = vadd.f32 0.0, %v2092
        %v2094 = vpop.f32.mrb[0].mxu0
        %v2095 = vpop.f32.mrb[0].mxu0
        %v2096 = vadd.f32 0.0, %v2095
        %v2097 = vpop.f32.mrb[0].mxu0
        %2098 = vmatprep.mubr.bf16.mxu0 0
        %2099 = vmatmul.mubr.bf16.gmra.mrb[0].mxu0 %v1795
        %v2100 = vpop.f32.mrb[0].mxu0
        %v2101 = vadd.f32 0.0, %v2100
        %v2102 = vpop.f32.mrb[0].mxu0
        %v2103 = vpop.f32.mrb[0].mxu0
        %v2104 = vadd.f32 0.0, %v2103
        %v2105 = vpop.f32.mrb[0].mxu0
        %2106 = vmatprep.mubr.bf16.mxu0 0
        %2107 = vmatmul.mubr.bf16.gmra.mrb[0].mxu0 %v1798
        %v2108 = vpop.f32.mrb[0].mxu0
        %v2109 = vadd.f32 0.0, %v2108
        %v2110 = vpop.f32.mrb[0].mxu0
        %v2111 = vpop.f32.mrb[0].mxu0
        %v2112 = vadd.f32 0.0, %v2111
        %v2113 = vpop.f32.mrb[0].mxu0
        %2114 = vmatprep.mubr.bf16.mxu0 0
        %2115 = vmatmul.mubr.bf16.gmra.mrb[0].mxu0 %v1801
        %v2116 = vpop.f32.mrb[0].mxu0
        %v2117 = vadd.f32 0.0, %v2116
        %v2118 = vpop.f32.mrb[0].mxu0
        %v2119 = vpop.f32.mrb[0].mxu0
        %v2120 = vadd.f32 0.0, %v2119
        %v2121 = vpop.f32.mrb[0].mxu0
        %2122 = vmatprep.mubr.bf16.mxu0 0
        %2123 = vmatmul.mubr.bf16.gmra.mrb[0].mxu0 %v1804
        %v2124 = vpop.f32.mrb[0].mxu0
        %v2125 = vadd.f32 0.0, %v2124
        %v2126 = vpop.f32.mrb[0].mxu0
        %v2127 = vpop.f32.mrb[0].mxu0
        %v2128 = vadd.f32 0.0, %v2127
        %v2129 = vpop.f32.mrb[0].mxu0
        %2130 = vmatprep.mubr.bf16.mxu0 0
        %2131 = vmatmul.mubr.bf16.gmra.mrb[0].mxu0 %v1807
        %v2132 = vpop.f32.mrb[0].mxu0
        %v2133 = vadd.f32 0.0, %v2132
        %v2134 = vpop.f32.mrb[0].mxu0
        %v2135 = vpop.f32.mrb[0].mxu0
        %v2136 = vadd.f32 0.0, %v2135
        %v2137 = vpop.f32.mrb[0].mxu0
        %2138 = vmatprep.mubr.bf16.mxu0 0
        %2139 = vmatmul.mubr.bf16.gmra.mrb[0].mxu0 %v1810
        %v2140 = vpop.f32.mrb[0].mxu0
        %v2141 = vadd.f32 0.0, %v2140
        %v2142 = vpop.f32.mrb[0].mxu0
        %v2143 = vpop.f32.mrb[0].mxu0
        %v2144 = vadd.f32 0.0, %v2143
        %v2145 = vpop.f32.mrb[0].mxu0
        %2146 = vmatprep.mubr.bf16.mxu0 0
        %2147 = vmatmul.mubr.bf16.gmra.mrb[0].mxu0 %v1813
        %v2148 = vpop.f32.mrb[0].mxu0
        %v2149 = vadd.f32 0.0, %v2148
        %v2150 = vpop.f32.mrb[0].mxu0
        %v2151 = vpop.f32.mrb[0].mxu0
        %v2152 = vadd.f32 0.0, %v2151
        %v2153 = vpop.f32.mrb[0].mxu0
        %2154 = vmatprep.mubr.bf16.mxu0 0
        %2155 = vmatmul.mubr.bf16.gmra.mrb[0].mxu0 %v1816
        %v2156 = vpop.f32.mrb[0].mxu0
        %v2157 = vadd.f32 0.0, %v2156
        %v2158 = vpop.f32.mrb[0].mxu0
        %v2159 = vpop.f32.mrb[0].mxu0
        %v2160 = vadd.f32 0.0, %v2159
        %v2161 = vpop.f32.mrb[0].mxu0
        %2162 = vmatprep.mubr.bf16.mxu0 0
        %2163 = vmatmul.mubr.bf16.gmra.mrb[0].mxu0 %v1819
        %v2164 = vpop.f32.mrb[0].mxu0
        %v2165 = vadd.f32 0.0, %v2164
        %v2166 = vpop.f32.mrb[0].mxu0
        %v2167 = vpop.f32.mrb[0].mxu0
        %v2168 = vadd.f32 0.0, %v2167
        %v2169 = vpop.f32.mrb[0].mxu0
        %2170 = vmatprep.mubr.bf16.mxu0 0
        %2171 = vmatmul.mubr.bf16.gmra.mrb[0].mxu0 %v1822
        %v2172 = vpop.f32.mrb[0].mxu0
        %v2173 = vadd.f32 0.0, %v2172
        %v2174 = vpop.f32.mrb[0].mxu0
        %v2175 = vpop.f32.mrb[0].mxu0
        %v2176 = vadd.f32 0.0, %v2175
        %v2177 = vpop.f32.mrb[0].mxu0
        %2178 = vmatprep.mubr.bf16.mxu0 0
        %2179 = vmatmul.mubr.bf16.gmra.mrb[0].mxu0 %v2021
        %v2180 = vpop.f32.mrb[0].mxu0
        %v2181 = vadd.f32 0.0, %v2180
        %v2182 = vpop.f32.mrb[0].mxu0
        %v2183 = vpop.f32.mrb[0].mxu0
        %v2184 = vadd.f32 0.0, %v2183
        %v2185 = vpop.f32.mrb[0].mxu0
        %2186 = vdwg.mxu0
        %v2187 = vadd.f32 %v1988, %v2061
        %v2188 = vadd.f32 %v1989, %v2064
        %v2189 = vadd.f32 %v1990, %v2069
        %v2190 = vadd.f32 %v1991, %v2072
        %v2191 = vadd.f32 %v1992, %v2077
        %v2192 = vadd.f32 %v1993, %v2080
        %v2193 = vadd.f32 %v1994, %v2085
        %v2194 = vadd.f32 %v1995, %v2088
        %v2195 = vadd.f32 %v1996, %v2093
        %v2196 = vadd.f32 %v1997, %v2096
        %v2197 = vadd.f32 %v1998, %v2101
        %v2198 = vadd.f32 %v1999, %v2104
        %v2199 = vadd.f32 %v2000, %v2109
        %v2200 = vadd.f32 %v2001, %v2112
        %v2201 = vadd.f32 %v2002, %v2117
        %v2202 = vadd.f32 %v2003, %v2120
        %v2203 = vadd.f32 %v2004, %v2125
        %v2204 = vadd.f32 %v2005, %v2128
        %v2205 = vadd.f32 %v2006, %v2133
        %v2206 = vadd.f32 %v2007, %v2136
        %v2207 = vadd.f32 %v2008, %v2141
        %v2208 = vadd.f32 %v2009, %v2144
        %v2209 = vadd.f32 %v2010, %v2149
        %v2210 = vadd.f32 %v2011, %v2152
        %v2211 = vadd.f32 %v2012, %v2157
        %v2212 = vadd.f32 %v2013, %v2160
        %v2213 = vadd.f32 %v2014, %v2165
        %v2214 = vadd.f32 %v2015, %v2168
        %v2215 = vadd.f32 %v2016, %v2173
        %v2216 = vadd.f32 %v2017, %v2176
        %v2217 = vadd.f32 %v2018, %v2181
        %v2218 = vadd.f32 %v2019, %v2184
        %v2220 = vsel %vm243, %v1775, 0
        %v2223 = vsel %vm495, %v233, 0
        %2225 = vmatprep.subr.bf16.mxu0 0
        %2226 = vmatpush1.bf16.msra.mxu0 %v2223
        %2227 = vmatprep.subr.bf16.mxu0 0
        %2228 = vmatpush1.bf16.msra.mxu0 0
        %2229 = vmatprep.subr.bf16.mxu0 0
        %2230 = vmatpush1.bf16.msra.mxu0 0
        %2231 = vmatprep.subr.bf16.mxu0 0
        %2232 = vmatpush1.bf16.msra.mxu0 0
        %2233 = vmatprep.subr.bf16.mxu0 0
        %2234 = vmatpush1.bf16.msra.mxu0 0
        %2235 = vmatprep.subr.bf16.mxu0 0
        %2236 = vmatpush1.bf16.msra.mxu0 0
        %2237 = vmatprep.subr.bf16.mxu0 0
        %2238 = vmatpush1.bf16.msra.mxu0 0
        %2239 = vmatprep.subr.bf16.mxu0 0
        %2240 = vmatpush1.bf16.msra.mxu0 0
        %2241 = vmatprep.subr.bf16.mxu0 0
        %2242 = vmatpush1.bf16.msra.mxu0 0
        %2243 = vmatprep.subr.bf16.mxu0 0
        %2244 = vmatpush1.bf16.msra.mxu0 0
        %2245 = vmatprep.subr.bf16.mxu0 0
        %2246 = vmatpush1.bf16.msra.mxu0 0
        %2247 = vmatprep.subr.bf16.mxu0 0
        %2248 = vmatpush1.bf16.msra.mxu0 0
        %2249 = vmatprep.subr.bf16.mxu0 0
        %2250 = vmatpush1.bf16.msra.mxu0 0
        %2251 = vmatprep.subr.bf16.mxu0 0
        %2252 = vmatpush1.bf16.msra.mxu0 0
        %2253 = vmatprep.subr.bf16.mxu0 0
        %2254 = vmatpush1.bf16.msra.mxu0 0
        %2255 = vmatprep.subr.bf16.mxu0 0
        %2256 = vmatpush1.bf16.msra.mxu0 0
        %2257 = vmatprep.mubr.bf16.mxu0 0
        %2258 = vmatmul.mubr.bf16.gmra.mrb[0].mxu0 %v1783
        %v2259 = vpop.f32.mrb[0].mxu0
        %v2260 = vadd.f32 0.0, %v2259
        %v2261 = vpop.f32.mrb[0].mxu0
        %v2262 = vpop.f32.mrb[0].mxu0
        %v2263 = vadd.f32 0.0, %v2262
        %v2264 = vpop.f32.mrb[0].mxu0
        %2265 = vmatprep.mubr.bf16.mxu0 0
        %2266 = vmatmul.mubr.bf16.gmra.mrb[0].mxu0 %v1786
        %v2267 = vpop.f32.mrb[0].mxu0
        %v2268 = vadd.f32 0.0, %v2267
        %v2269 = vpop.f32.mrb[0].mxu0
        %v2270 = vpop.f32.mrb[0].mxu0
        %v2271 = vadd.f32 0.0, %v2270
        %v2272 = vpop.f32.mrb[0].mxu0
        %2273 = vmatprep.mubr.bf16.mxu0 0
        %2274 = vmatmul.mubr.bf16.gmra.mrb[0].mxu0 %v1789
        %v2275 = vpop.f32.mrb[0].mxu0
        %v2276 = vadd.f32 0.0, %v2275
        %v2277 = vpop.f32.mrb[0].mxu0
        %v2278 = vpop.f32.mrb[0].mxu0
        %v2279 = vadd.f32 0.0, %v2278
        %v2280 = vpop.f32.mrb[0].mxu0
        %2281 = vmatprep.mubr.bf16.mxu0 0
        %2282 = vmatmul.mubr.bf16.gmra.mrb[0].mxu0 %v1792
        %v2283 = vpop.f32.mrb[0].mxu0
        %v2284 = vadd.f32 0.0, %v2283
        %v2285 = vpop.f32.mrb[0].mxu0
        %v2286 = vpop.f32.mrb[0].mxu0
        %v2287 = vadd.f32 0.0, %v2286
        %v2288 = vpop.f32.mrb[0].mxu0
        %2289 = vmatprep.mubr.bf16.mxu0 0
        %2290 = vmatmul.mubr.bf16.gmra.mrb[0].mxu0 %v1795
        %v2291 = vpop.f32.mrb[0].mxu0
        %v2292 = vadd.f32 0.0, %v2291
        %v2293 = vpop.f32.mrb[0].mxu0
        %v2294 = vpop.f32.mrb[0].mxu0
        %v2295 = vadd.f32 0.0, %v2294
        %v2296 = vpop.f32.mrb[0].mxu0
        %2297 = vmatprep.mubr.bf16.mxu0 0
        %2298 = vmatmul.mubr.bf16.gmra.mrb[0].mxu0 %v1798
        %v2299 = vpop.f32.mrb[0].mxu0
        %v2300 = vadd.f32 0.0, %v2299
        %v2301 = vpop.f32.mrb[0].mxu0
        %v2302 = vpop.f32.mrb[0].mxu0
        %v2303 = vadd.f32 0.0, %v2302
        %v2304 = vpop.f32.mrb[0].mxu0
        %2305 = vmatprep.mubr.bf16.mxu0 0
        %2306 = vmatmul.mubr.bf16.gmra.mrb[0].mxu0 %v1801
        %v2307 = vpop.f32.mrb[0].mxu0
        %v2308 = vadd.f32 0.0, %v2307
        %v2309 = vpop.f32.mrb[0].mxu0
        %v2310 = vpop.f32.mrb[0].mxu0
        %v2311 = vadd.f32 0.0, %v2310
        %v2312 = vpop.f32.mrb[0].mxu0
        %2313 = vmatprep.mubr.bf16.mxu0 0
        %2314 = vmatmul.mubr.bf16.gmra.mrb[0].mxu0 %v1804
        %v2315 = vpop.f32.mrb[0].mxu0
        %v2316 = vadd.f32 0.0, %v2315
        %v2317 = vpop.f32.mrb[0].mxu0
        %v2318 = vpop.f32.mrb[0].mxu0
        %v2319 = vadd.f32 0.0, %v2318
        %v2320 = vpop.f32.mrb[0].mxu0
        %2321 = vmatprep.mubr.bf16.mxu0 0
        %2322 = vmatmul.mubr.bf16.gmra.mrb[0].mxu0 %v1807
        %v2323 = vpop.f32.mrb[0].mxu0
        %v2324 = vadd.f32 0.0, %v2323
        %v2325 = vpop.f32.mrb[0].mxu0
        %v2326 = vpop.f32.mrb[0].mxu0
        %v2327 = vadd.f32 0.0, %v2326
        %v2328 = vpop.f32.mrb[0].mxu0
        %2329 = vmatprep.mubr.bf16.mxu0 0
        %2330 = vmatmul.mubr.bf16.gmra.mrb[0].mxu0 %v1810
        %v2331 = vpop.f32.mrb[0].mxu0
        %v2332 = vadd.f32 0.0, %v2331
        %v2333 = vpop.f32.mrb[0].mxu0
        %v2334 = vpop.f32.mrb[0].mxu0
        %v2335 = vadd.f32 0.0, %v2334
        %v2336 = vpop.f32.mrb[0].mxu0
        %2337 = vmatprep.mubr.bf16.mxu0 0
        %2338 = vmatmul.mubr.bf16.gmra.mrb[0].mxu0 %v1813
        %v2339 = vpop.f32.mrb[0].mxu0
        %v2340 = vadd.f32 0.0, %v2339
        %v2341 = vpop.f32.mrb[0].mxu0
        %v2342 = vpop.f32.mrb[0].mxu0
        %v2343 = vadd.f32 0.0, %v2342
        %v2344 = vpop.f32.mrb[0].mxu0
        %2345 = vmatprep.mubr.bf16.mxu0 0
        %2346 = vmatmul.mubr.bf16.gmra.mrb[0].mxu0 %v1816
        %v2347 = vpop.f32.mrb[0].mxu0
        %v2348 = vadd.f32 0.0, %v2347
        %v2349 = vpop.f32.mrb[0].mxu0
        %v2350 = vpop.f32.mrb[0].mxu0
        %v2351 = vadd.f32 0.0, %v2350
        %v2352 = vpop.f32.mrb[0].mxu0
        %2353 = vmatprep.mubr.bf16.mxu0 0
        %2354 = vmatmul.mubr.bf16.gmra.mrb[0].mxu0 %v1819
        %v2355 = vpop.f32.mrb[0].mxu0
        %v2356 = vadd.f32 0.0, %v2355
        %v2357 = vpop.f32.mrb[0].mxu0
        %v2358 = vpop.f32.mrb[0].mxu0
        %v2359 = vadd.f32 0.0, %v2358
        %v2360 = vpop.f32.mrb[0].mxu0
        %2361 = vmatprep.mubr.bf16.mxu0 0
        %2362 = vmatmul.mubr.bf16.gmra.mrb[0].mxu0 %v1822
        %v2363 = vpop.f32.mrb[0].mxu0
        %v2364 = vadd.f32 0.0, %v2363
        %v2365 = vpop.f32.mrb[0].mxu0
        %v2366 = vpop.f32.mrb[0].mxu0
        %v2367 = vadd.f32 0.0, %v2366
        %v2368 = vpop.f32.mrb[0].mxu0
        %2369 = vmatprep.mubr.bf16.mxu0 0
        %2370 = vmatmul.mubr.bf16.gmra.mrb[0].mxu0 %v2021
        %v2371 = vpop.f32.mrb[0].mxu0
        %v2372 = vadd.f32 0.0, %v2371
        %v2373 = vpop.f32.mrb[0].mxu0
        %v2374 = vpop.f32.mrb[0].mxu0
        %v2375 = vadd.f32 0.0, %v2374
        %v2376 = vpop.f32.mrb[0].mxu0
        %2377 = vmatprep.mubr.bf16.mxu0 0
        %2378 = vmatmul.mubr.bf16.gmra.mrb[0].mxu0 %v2220
        %v2379 = vpop.f32.mrb[0].mxu0
        %v2380 = vadd.f32 0.0, %v2379
        %v2381 = vpop.f32.mrb[0].mxu0
        %v2382 = vpop.f32.mrb[0].mxu0
        %v2383 = vadd.f32 0.0, %v2382
        %v2384 = vpop.f32.mrb[0].mxu0
        %2385 = vdwg.mxu0
        %v2386 = vadd.f32 %v2187, %v2260
        %v2387 = vadd.f32 %v2188, %v2263
        %v2388 = vadd.f32 %v2189, %v2268
        %v2389 = vadd.f32 %v2190, %v2271
        %v2390 = vadd.f32 %v2191, %v2276
        %v2391 = vadd.f32 %v2192, %v2279
        %v2392 = vadd.f32 %v2193, %v2284
        %v2393 = vadd.f32 %v2194, %v2287
        %v2394 = vadd.f32 %v2195, %v2292
        %v2395 = vadd.f32 %v2196, %v2295
        %v2396 = vadd.f32 %v2197, %v2300
        %v2397 = vadd.f32 %v2198, %v2303
        %v2398 = vadd.f32 %v2199, %v2308
        %v2399 = vadd.f32 %v2200, %v2311
        %v2400 = vadd.f32 %v2201, %v2316
        %v2401 = vadd.f32 %v2202, %v2319
        %v2402 = vadd.f32 %v2203, %v2324
        %v2403 = vadd.f32 %v2204, %v2327
        %v2404 = vadd.f32 %v2205, %v2332
        %v2405 = vadd.f32 %v2206, %v2335
        %v2406 = vadd.f32 %v2207, %v2340
        %v2407 = vadd.f32 %v2208, %v2343
        %v2408 = vadd.f32 %v2209, %v2348
        %v2409 = vadd.f32 %v2210, %v2351
        %v2410 = vadd.f32 %v2211, %v2356
        %v2411 = vadd.f32 %v2212, %v2359
        %v2412 = vadd.f32 %v2213, %v2364
        %v2413 = vadd.f32 %v2214, %v2367
        %v2414 = vadd.f32 %v2215, %v2372
        %v2415 = vadd.f32 %v2216, %v2375
        %v2416 = vadd.f32 %v2217, %v2380
        %v2417 = vadd.f32 %v2218, %v2383
        %v2418 = vld [vmem:[%s222] sm:$0xff]
        %v2419 = vld [vmem:[%s222 + $0x8] sm:$0xff]
        %v2420 = vld [vmem:[%s222 + $0x20] sm:$0xff]
        %v2421 = vld [vmem:[%s222 + $0x28] sm:$0xff]
        %v2422 = vld [vmem:[%s222 + $0x40] sm:$0xff]
        %v2423 = vld [vmem:[%s222 + $0x48] sm:$0xff]
        %v2424 = vld [vmem:[%s222 + $0x60] sm:$0xff]
        %v2425 = vld [vmem:[%s222 + $0x68] sm:$0xff]
        %v2426 = vld [vmem:[%s222 + $0x80] sm:$0xff]
        %v2427 = vld [vmem:[%s222 + $0x88] sm:$0xff]
        %v2428 = vld [vmem:[%s222 + $0xa0] sm:$0xff]
        %v2429 = vld [vmem:[%s222 + $0xa8] sm:$0xff]
        %v2430 = vld [vmem:[%s222 + $0xc0] sm:$0xff]
        %v2431 = vld [vmem:[%s222 + $0xc8] sm:$0xff]
        %v2432 = vld [vmem:[%s222 + $0xe0] sm:$0xff]
        %v2433 = vld [vmem:[%s222 + $0xe8] sm:$0xff]
        %2434 = vst.msk [vmem:[%s252 + $0x1] sm:$0xff] %vm243, %v2418
        %2435 = vst.msk [vmem:[%s252 + $0x9] sm:$0xff] %vm243, %v2419
        %2436 = vst.msk [vmem:[%s252 + $0x19] sm:$0xff] %vm243, %v2420
        %2437 = vst.msk [vmem:[%s252 + $0x21] sm:$0xff] %vm243, %v2421
        %2438 = vst.msk [vmem:[%s252 + $0x31] sm:$0xff] %vm243, %v2422
        %2439 = vst.msk [vmem:[%s252 + $0x39] sm:$0xff] %vm243, %v2423
        %2440 = vst.msk [vmem:[%s252 + $0x49] sm:$0xff] %vm243, %v2424
        %2441 = vst.msk [vmem:[%s252 + $0x51] sm:$0xff] %vm243, %v2425
        %2442 = vst.msk [vmem:[%s252 + $0x61] sm:$0xff] %vm243, %v2426
        %2443 = vst.msk [vmem:[%s252 + $0x69] sm:$0xff] %vm243, %v2427
        %2444 = vst.msk [vmem:[%s252 + $0x79] sm:$0xff] %vm243, %v2428
        %2445 = vst.msk [vmem:[%s252 + $0x81] sm:$0xff] %vm243, %v2429
        %2446 = vst.msk [vmem:[%s252 + $0x91] sm:$0xff] %vm243, %v2430
        %2447 = vst.msk [vmem:[%s252 + $0x99] sm:$0xff] %vm243, %v2431
        %2448 = vst.msk [vmem:[%s252 + $0xa9] sm:$0xff] %vm243, %v2432
        %2449 = vst.msk [vmem:[%s252 + $0xb1] sm:$0xff] %vm243, %v2433
        %s2450 = scalar_lea.vmem %s252, 1 [#allocation2]
        %v2451 = vld [vmem:[%s2450] ss:$2 sm:$0xff]
        %s2452 = scalar_lea.vmem %s252, 25 [#allocation2]
        %v2453 = vld [vmem:[%s2452] ss:$2 sm:$0xff]
        %s2454 = scalar_lea.vmem %s252, 49 [#allocation2]
        %v2455 = vld [vmem:[%s2454] ss:$2 sm:$0xff]
        %s2456 = scalar_lea.vmem %s252, 73 [#allocation2]
        %v2457 = vld [vmem:[%s2456] ss:$2 sm:$0xff]
        %s2458 = scalar_lea.vmem %s252, 97 [#allocation2]
        %v2459 = vld [vmem:[%s2458] ss:$2 sm:$0xff]
        %s2460 = scalar_lea.vmem %s252, 121 [#allocation2]
        %v2461 = vld [vmem:[%s2460] ss:$2 sm:$0xff]
        %s2462 = scalar_lea.vmem %s252, 145 [#allocation2]
        %v2463 = vld [vmem:[%s2462] ss:$2 sm:$0xff]
        %s2464 = scalar_lea.vmem %s252, 169 [#allocation2]
        %v2465 = vld [vmem:[%s2464] ss:$2 sm:$0xff]
        %v2466 = vpack.c.bf16 %v2453, %v2451
        %v2467 = vpack.c.bf16 %v2457, %v2455
        %v2468 = vpack.c.bf16 %v2461, %v2459
        %v2469 = vpack.c.bf16 %v2465, %v2463
        %v2470 = vld [vmem:[%s3] sm:$0x3]
        %v2472 = vsel %vm243, %v2466, 0
        %v2475 = vsel %vm243, %v2467, 0
        %v2478 = vsel %vm243, %v2468, 0
        %v2481 = vsel %vm243, %v2469, 0
        %v2484 = vsel %vm495, %v2470, 0
        %2486 = vmatprep.subr.bf16.mxu0 0
        %2487 = vmatpush1.bf16.msra.mxu0 %v2484
        %2488 = vmatprep.subr.bf16.mxu0 0
        %2489 = vmatpush1.bf16.msra.mxu0 0
        %2490 = vmatprep.subr.bf16.mxu0 0
        %2491 = vmatpush1.bf16.msra.mxu0 0
        %2492 = vmatprep.subr.bf16.mxu0 0
        %2493 = vmatpush1.bf16.msra.mxu0 0
        %2494 = vmatprep.subr.bf16.mxu0 0
        %2495 = vmatpush1.bf16.msra.mxu0 0
        %2496 = vmatprep.subr.bf16.mxu0 0
        %2497 = vmatpush1.bf16.msra.mxu0 0
        %2498 = vmatprep.subr.bf16.mxu0 0
        %2499 = vmatpush1.bf16.msra.mxu0 0
        %2500 = vmatprep.subr.bf16.mxu0 0
        %2501 = vmatpush1.bf16.msra.mxu0 0
        %2502 = vmatprep.subr.bf16.mxu0 0
        %2503 = vmatpush1.bf16.msra.mxu0 0
        %2504 = vmatprep.subr.bf16.mxu0 0
        %2505 = vmatpush1.bf16.msra.mxu0 0
        %2506 = vmatprep.subr.bf16.mxu0 0
        %2507 = vmatpush1.bf16.msra.mxu0 0
        %2508 = vmatprep.subr.bf16.mxu0 0
        %2509 = vmatpush1.bf16.msra.mxu0 0
        %2510 = vmatprep.subr.bf16.mxu0 0
        %2511 = vmatpush1.bf16.msra.mxu0 0
        %2512 = vmatprep.subr.bf16.mxu0 0
        %2513 = vmatpush1.bf16.msra.mxu0 0
        %2514 = vmatprep.subr.bf16.mxu0 0
        %2515 = vmatpush1.bf16.msra.mxu0 0
        %2516 = vmatprep.subr.bf16.mxu0 0
        %2517 = vmatpush1.bf16.msra.mxu0 0
        %2518 = vmatprep.mubr.bf16.mxu0 0
        %2519 = vmatmul.mubr.bf16.gmra.mrb[0].mxu0 %v2472
        %v2520 = vpop.f32.mrb[0].mxu0
        %v2521 = vadd.f32 0.0, %v2520
        %v2522 = vpop.f32.mrb[0].mxu0
        %v2523 = vpop.f32.mrb[0].mxu0
        %v2524 = vadd.f32 0.0, %v2523
        %v2525 = vpop.f32.mrb[0].mxu0
        %2526 = vmatprep.mubr.bf16.mxu0 0
        %2527 = vmatmul.mubr.bf16.gmra.mrb[0].mxu0 %v2475
        %v2528 = vpop.f32.mrb[0].mxu0
        %v2529 = vadd.f32 0.0, %v2528
        %v2530 = vpop.f32.mrb[0].mxu0
        %v2531 = vpop.f32.mrb[0].mxu0
        %v2532 = vadd.f32 0.0, %v2531
        %v2533 = vpop.f32.mrb[0].mxu0
        %2534 = vmatprep.mubr.bf16.mxu0 0
        %2535 = vmatmul.mubr.bf16.gmra.mrb[0].mxu0 %v2478
        %v2536 = vpop.f32.mrb[0].mxu0
        %v2537 = vadd.f32 0.0, %v2536
        %v2538 = vpop.f32.mrb[0].mxu0
        %v2539 = vpop.f32.mrb[0].mxu0
        %v2540 = vadd.f32 0.0, %v2539
        %v2541 = vpop.f32.mrb[0].mxu0
        %2542 = vmatprep.mubr.bf16.mxu0 0
        %2543 = vmatmul.mubr.bf16.gmra.mrb[0].mxu0 %v2481
        %v2544 = vpop.f32.mrb[0].mxu0
        %v2545 = vadd.f32 0.0, %v2544
        %v2546 = vpop.f32.mrb[0].mxu0
        %v2547 = vpop.f32.mrb[0].mxu0
        %v2548 = vadd.f32 0.0, %v2547
        %v2549 = vpop.f32.mrb[0].mxu0
        %2550 = vdwg.mxu0
        %v2551 = vlaneseq
        %v2552 = vshrl.u32 %v2551, 7
        %v2553 = vsub.s32 4, %v2552
        %v2554 = vrot.slane %v224, %v2553
        %v2555 = vmul.f32 %v2521, %v2554
        %v2556 = vmul.f32 %v2524, %v2554
        %v2557 = vmul.f32 %v2529, %v2554
        %v2558 = vmul.f32 %v2532, %v2554
        %v2559 = vmul.f32 %v2537, %v2554
        %v2560 = vmul.f32 %v2540, %v2554
        %v2561 = vmul.f32 %v2545, %v2554
        %v2562 = vmul.f32 %v2548, %v2554
        %v2563 = vlaneseq
        %v2564 = vshrl.u32 %v2563, 7
        %v2565 = vsub.s32 5, %v2564
        %v2566 = vrot.slane %v224, %v2565
        %v2567 = vadd.f32 %v2555, %v2566
        %v2568 = vadd.f32 %v2556, %v2566
        %v2569 = vadd.f32 %v2557, %v2566
        %v2570 = vadd.f32 %v2558, %v2566
        %v2571 = vadd.f32 %v2559, %v2566
        %v2572 = vadd.f32 %v2560, %v2566
        %v2573 = vadd.f32 %v2561, %v2566
        %v2574 = vadd.f32 %v2562, %v2566
        %v2575 = vlaneseq
        %v2576 = vshrl.u32 %v2575, 7
        %v2577 = vsub.s32 0, %v2576
        %v2578 = vrot.slane %v224, %v2577
        %v2579 = vmul.f32 %v2386, %v2578
        %v2580 = vmul.f32 %v2387, %v2578
        %v2581 = vmul.f32 %v2388, %v2578
        %v2582 = vmul.f32 %v2389, %v2578
        %v2583 = vmul.f32 %v2390, %v2578
        %v2584 = vmul.f32 %v2391, %v2578
        %v2585 = vmul.f32 %v2392, %v2578
        %v2586 = vmul.f32 %v2393, %v2578
        %v2587 = vmul.f32 %v2394, %v2578
        %v2588 = vmul.f32 %v2395, %v2578
        %v2589 = vmul.f32 %v2396, %v2578
        %v2590 = vmul.f32 %v2397, %v2578
        %v2591 = vmul.f32 %v2398, %v2578
        %v2592 = vmul.f32 %v2399, %v2578
        %v2593 = vmul.f32 %v2400, %v2578
        %v2594 = vmul.f32 %v2401, %v2578
        %v2595 = vmul.f32 %v2402, %v2578
        %v2596 = vmul.f32 %v2403, %v2578
        %v2597 = vmul.f32 %v2404, %v2578
        %v2598 = vmul.f32 %v2405, %v2578
        %v2599 = vmul.f32 %v2406, %v2578
        %v2600 = vmul.f32 %v2407, %v2578
        %v2601 = vmul.f32 %v2408, %v2578
        %v2602 = vmul.f32 %v2409, %v2578
        %v2603 = vmul.f32 %v2410, %v2578
        %v2604 = vmul.f32 %v2411, %v2578
        %v2605 = vmul.f32 %v2412, %v2578
        %v2606 = vmul.f32 %v2413, %v2578
        %v2607 = vmul.f32 %v2414, %v2578
        %v2608 = vmul.f32 %v2415, %v2578
        %v2609 = vmul.f32 %v2416, %v2578
        %v2610 = vmul.f32 %v2417, %v2578
        %v2611 = vlaneseq
        %v2612 = vshrl.u32 %v2611, 7
        %v2613 = vsub.s32 1, %v2612
        %v2614 = vrot.slane %v224, %v2613
        %v2615 = vadd.f32 %v2579, %v2614
        %v2616 = vadd.f32 %v2580, %v2614
        %v2617 = vadd.f32 %v2581, %v2614
        %v2618 = vadd.f32 %v2582, %v2614
        %v2619 = vadd.f32 %v2583, %v2614
        %v2620 = vadd.f32 %v2584, %v2614
        %v2621 = vadd.f32 %v2585, %v2614
        %v2622 = vadd.f32 %v2586, %v2614
        %v2623 = vadd.f32 %v2587, %v2614
        %v2624 = vadd.f32 %v2588, %v2614
        %v2625 = vadd.f32 %v2589, %v2614
        %v2626 = vadd.f32 %v2590, %v2614
        %v2627 = vadd.f32 %v2591, %v2614
        %v2628 = vadd.f32 %v2592, %v2614
        %v2629 = vadd.f32 %v2593, %v2614
        %v2630 = vadd.f32 %v2594, %v2614
        %v2631 = vadd.f32 %v2595, %v2614
        %v2632 = vadd.f32 %v2596, %v2614
        %v2633 = vadd.f32 %v2597, %v2614
        %v2634 = vadd.f32 %v2598, %v2614
        %v2635 = vadd.f32 %v2599, %v2614
        %v2636 = vadd.f32 %v2600, %v2614
        %v2637 = vadd.f32 %v2601, %v2614
        %v2638 = vadd.f32 %v2602, %v2614
        %v2639 = vadd.f32 %v2603, %v2614
        %v2640 = vadd.f32 %v2604, %v2614
        %v2641 = vadd.f32 %v2605, %v2614
        %v2642 = vadd.f32 %v2606, %v2614
        %v2643 = vadd.f32 %v2607, %v2614
        %v2644 = vadd.f32 %v2608, %v2614
        %v2645 = vadd.f32 %v2609, %v2614
        %v2646 = vadd.f32 %v2610, %v2614
        %v2647 = vmax.f32 %v2615, 0.0
        %v2648 = vmax.f32 %v2616, 0.0
        %v2649 = vmax.f32 %v2617, 0.0
        %v2650 = vmax.f32 %v2618, 0.0
        %v2651 = vmax.f32 %v2619, 0.0
        %v2652 = vmax.f32 %v2620, 0.0
        %v2653 = vmax.f32 %v2621, 0.0
        %v2654 = vmax.f32 %v2622, 0.0
        %v2655 = vmax.f32 %v2623, 0.0
        %v2656 = vmax.f32 %v2624, 0.0
        %v2657 = vmax.f32 %v2625, 0.0
        %v2658 = vmax.f32 %v2626, 0.0
        %v2659 = vmax.f32 %v2627, 0.0
        %v2660 = vmax.f32 %v2628, 0.0
        %v2661 = vmax.f32 %v2629, 0.0
        %v2662 = vmax.f32 %v2630, 0.0
        %v2663 = vmax.f32 %v2631, 0.0
        %v2664 = vmax.f32 %v2632, 0.0
        %v2665 = vmax.f32 %v2633, 0.0
        %v2666 = vmax.f32 %v2634, 0.0
        %v2667 = vmax.f32 %v2635, 0.0
        %v2668 = vmax.f32 %v2636, 0.0
        %v2669 = vmax.f32 %v2637, 0.0
        %v2670 = vmax.f32 %v2638, 0.0
        %v2671 = vmax.f32 %v2639, 0.0
        %v2672 = vmax.f32 %v2640, 0.0
        %v2673 = vmax.f32 %v2641, 0.0
        %v2674 = vmax.f32 %v2642, 0.0
        %v2675 = vmax.f32 %v2643, 0.0
        %v2676 = vmax.f32 %v2644, 0.0
        %v2677 = vmax.f32 %v2645, 0.0
        %v2678 = vmax.f32 %v2646, 0.0
        %2679 = vst.msk [vmem:[%s295 + $0x1] sm:$0xff] %vm286, %v2647
        %2680 = vst.msk [vmem:[%s295 + $0x9] sm:$0xff] %vm286, %v2648
        %2681 = vst.msk [vmem:[%s295 + $0x19] sm:$0xff] %vm286, %v2649
        %2682 = vst.msk [vmem:[%s295 + $0x21] sm:$0xff] %vm286, %v2650
        %2683 = vst.msk [vmem:[%s295 + $0x31] sm:$0xff] %vm286, %v2651
        %2684 = vst.msk [vmem:[%s295 + $0x39] sm:$0xff] %vm286, %v2652
        %2685 = vst.msk [vmem:[%s295 + $0x49] sm:$0xff] %vm286, %v2653
        %2686 = vst.msk [vmem:[%s295 + $0x51] sm:$0xff] %vm286, %v2654
        %2687 = vst.msk [vmem:[%s295 + $0x61] sm:$0xff] %vm286, %v2655
        %2688 = vst.msk [vmem:[%s295 + $0x69] sm:$0xff] %vm286, %v2656
        %2689 = vst.msk [vmem:[%s295 + $0x79] sm:$0xff] %vm286, %v2657
        %2690 = vst.msk [vmem:[%s295 + $0x81] sm:$0xff] %vm286, %v2658
        %2691 = vst.msk [vmem:[%s295 + $0x91] sm:$0xff] %vm286, %v2659
        %2692 = vst.msk [vmem:[%s295 + $0x99] sm:$0xff] %vm286, %v2660
        %2693 = vst.msk [vmem:[%s295 + $0xa9] sm:$0xff] %vm286, %v2661
        %2694 = vst.msk [vmem:[%s295 + $0xb1] sm:$0xff] %vm286, %v2662
        %2695 = vst.msk [vmem:[%s295 + $0xc1] sm:$0xff] %vm286, %v2663
        %2696 = vst.msk [vmem:[%s295 + $0xc9] sm:$0xff] %vm286, %v2664
        %2697 = vst.msk [vmem:[%s295 + $0xd9] sm:$0xff] %vm286, %v2665
        %2698 = vst.msk [vmem:[%s295 + $0xe1] sm:$0xff] %vm286, %v2666
        %2699 = vst.msk [vmem:[%s295 + $0xf1] sm:$0xff] %vm286, %v2667
        %2700 = vst.msk [vmem:[%s295 + $0xf9] sm:$0xff] %vm286, %v2668
        %2701 = vst.msk [vmem:[%s295 + $0x109] sm:$0xff] %vm286, %v2669
        %2702 = vst.msk [vmem:[%s295 + $0x111] sm:$0xff] %vm286, %v2670
        %2703 = vst.msk [vmem:[%s295 + $0x121] sm:$0xff] %vm286, %v2671
        %2704 = vst.msk [vmem:[%s295 + $0x129] sm:$0xff] %vm286, %v2672
        %2705 = vst.msk [vmem:[%s295 + $0x139] sm:$0xff] %vm286, %v2673
        %2706 = vst.msk [vmem:[%s295 + $0x141] sm:$0xff] %vm286, %v2674
        %2707 = vst.msk [vmem:[%s295 + $0x151] sm:$0xff] %vm286, %v2675
        %2708 = vst.msk [vmem:[%s295 + $0x159] sm:$0xff] %vm286, %v2676
        %2709 = vst.msk [vmem:[%s295 + $0x169] sm:$0xff] %vm286, %v2677
        %2710 = vst.msk [vmem:[%s295 + $0x171] sm:$0xff] %vm286, %v2678
        %v2711 = vld [vmem:[#allocation3] sm:$0xff]
        %v2712 = vld [vmem:[#allocation3 + $0x8] sm:$0xff]
        %v2713 = vld [vmem:[#allocation3 + $0x18] sm:$0xff]
        %v2714 = vld [vmem:[#allocation3 + $0x20] sm:$0xff]
        %v2715 = vld [vmem:[#allocation3 + $0x30] sm:$0xff]
        %v2716 = vld [vmem:[#allocation3 + $0x38] sm:$0xff]
        %v2717 = vld [vmem:[#allocation3 + $0x48] sm:$0xff]
        %v2718 = vld [vmem:[#allocation3 + $0x50] sm:$0xff]
        %v2719 = vld [vmem:[#allocation3 + $0x60] sm:$0xff]
        %v2720 = vld [vmem:[#allocation3 + $0x68] sm:$0xff]
        %v2721 = vld [vmem:[#allocation3 + $0x78] sm:$0xff]
        %v2722 = vld [vmem:[#allocation3 + $0x80] sm:$0xff]
        %v2723 = vld [vmem:[#allocation3 + $0x90] sm:$0xff]
        %v2724 = vld [vmem:[#allocation3 + $0x98] sm:$0xff]
        %v2725 = vld [vmem:[#allocation3 + $0xa8] sm:$0xff]
        %v2726 = vld [vmem:[#allocation3 + $0xb0] sm:$0xff]
        %v2727 = vld [vmem:[#allocation3 + $0xc0] sm:$0xff]
        %v2728 = vld [vmem:[#allocation3 + $0xc8] sm:$0xff]
        %v2729 = vld [vmem:[#allocation3 + $0xd8] sm:$0xff]
        %v2730 = vld [vmem:[#allocation3 + $0xe0] sm:$0xff]
        %v2731 = vld [vmem:[#allocation3 + $0xf0] sm:$0xff]
        %v2732 = vld [vmem:[#allocation3 + $0xf8] sm:$0xff]
        %v2733 = vld [vmem:[#allocation3 + $0x108] sm:$0xff]
        %v2734 = vld [vmem:[#allocation3 + $0x110] sm:$0xff]
        %v2735 = vld [vmem:[#allocation3 + $0x120] sm:$0xff]
        %v2736 = vld [vmem:[#allocation3 + $0x128] sm:$0xff]
        %v2737 = vld [vmem:[#allocation3 + $0x138] sm:$0xff]
        %v2738 = vld [vmem:[#allocation3 + $0x140] sm:$0xff]
        %v2739 = vld [vmem:[#allocation3 + $0x150] sm:$0xff]
        %v2740 = vld [vmem:[#allocation3 + $0x158] sm:$0xff]
        %v2741 = vld [vmem:[#allocation3 + $0x168] sm:$0xff]
        %v2742 = vld [vmem:[#allocation3 + $0x170] sm:$0xff]
        %v2743 = vld [vmem:[#allocation3 + $0x180] sm:$0xff]
        %v2744 = vld [vmem:[#allocation3 + $0x188] sm:$0xff]
        %v2745 = vld [vmem:[#allocation3 + $0x198] sm:$0xff]
        %v2746 = vld [vmem:[#allocation3 + $0x1a0] sm:$0xff]
        %v2747 = vpack.c.bf16 %v2712, %v2711
        %v2748 = vpack.c.bf16 %v2714, %v2713
        %v2749 = vpack.c.bf16 %v2716, %v2715
        %v2750 = vpack.c.bf16 %v2718, %v2717
        %v2751 = vpack.c.bf16 %v2720, %v2719
        %v2752 = vpack.c.bf16 %v2722, %v2721
        %v2753 = vpack.c.bf16 %v2724, %v2723
        %v2754 = vpack.c.bf16 %v2726, %v2725
        %v2755 = vpack.c.bf16 %v2728, %v2727
        %v2756 = vpack.c.bf16 %v2730, %v2729
        %v2757 = vpack.c.bf16 %v2732, %v2731
        %v2758 = vpack.c.bf16 %v2734, %v2733
        %v2759 = vpack.c.bf16 %v2736, %v2735
        %v2760 = vpack.c.bf16 %v2738, %v2737
        %v2761 = vpack.c.bf16 %v2740, %v2739
        %v2762 = vpack.c.bf16 %v2742, %v2741
        %v2763 = vpack.c.bf16 %v2744, %v2743
        %v2764 = vpack.c.bf16 %v2746, %v2745
        %v2766 = vsel %vm286, %v2748, 0
        %v2769 = vsel %vm286, %v2749, 0
        %v2772 = vsel %vm286, %v2750, 0
        %v2775 = vsel %vm286, %v2751, 0
        %v2778 = vsel %vm286, %v2752, 0
        %v2781 = vsel %vm286, %v2753, 0
        %v2784 = vsel %vm286, %v2754, 0
        %v2787 = vsel %vm286, %v2755, 0
        %v2790 = vsel %vm286, %v2756, 0
        %v2793 = vsel %vm286, %v2757, 0
        %v2796 = vsel %vm286, %v2758, 0
        %v2799 = vsel %vm286, %v2759, 0
        %v2802 = vsel %vm286, %v2760, 0
        %v2805 = vsel %vm286, %v2761, 0
        %v2808 = vsel %vm286, %v2762, 0
        %v2811 = vsel %vm286, %v2763, 0
        %vm2813 = vcmask 1043456
        %v2815 = vsel %vm2813, %v237, 0
        %2817 = vmatprep.subr.bf16.mxu0 0
        %2818 = vmatpush1.bf16.msra.mxu0 %v2815
        %2819 = vmatprep.subr.bf16.mxu0 0
        %2820 = vmatpush1.bf16.msra.mxu0 0
        %2821 = vmatprep.subr.bf16.mxu0 0
        %2822 = vmatpush1.bf16.msra.mxu0 0
        %2823 = vmatprep.subr.bf16.mxu0 0
        %2824 = vmatpush1.bf16.msra.mxu0 0
        %2825 = vmatprep.subr.bf16.mxu0 0
        %2826 = vmatpush1.bf16.msra.mxu0 0
        %2827 = vmatprep.subr.bf16.mxu0 0
        %2828 = vmatpush1.bf16.msra.mxu0 0
        %2829 = vmatprep.subr.bf16.mxu0 0
        %2830 = vmatpush1.bf16.msra.mxu0 0
        %2831 = vmatprep.subr.bf16.mxu0 0
        %2832 = vmatpush1.bf16.msra.mxu0 0
        %2833 = vmatprep.subr.bf16.mxu0 0
        %2834 = vmatpush1.bf16.msra.mxu0 0
        %2835 = vmatprep.subr.bf16.mxu0 0
        %2836 = vmatpush1.bf16.msra.mxu0 0
        %2837 = vmatprep.subr.bf16.mxu0 0
        %2838 = vmatpush1.bf16.msra.mxu0 0
        %2839 = vmatprep.subr.bf16.mxu0 0
        %2840 = vmatpush1.bf16.msra.mxu0 0
        %2841 = vmatprep.subr.bf16.mxu0 0
        %2842 = vmatpush1.bf16.msra.mxu0 0
        %2843 = vmatprep.subr.bf16.mxu0 0
        %2844 = vmatpush1.bf16.msra.mxu0 0
        %2845 = vmatprep.subr.bf16.mxu0 0
        %2846 = vmatpush1.bf16.msra.mxu0 0
        %2847 = vmatprep.subr.bf16.mxu0 0
        %2848 = vmatpush1.bf16.msra.mxu0 0
        %2849 = vmatprep.mubr.bf16.mxu0 0
        %2850 = vmatmul.mubr.bf16.gmra.mrb[0].mxu0 %v2766
        %v2851 = vpop.f32.mrb[0].mxu0
        %v2852 = vadd.f32 0.0, %v2851
        %v2853 = vpop.f32.mrb[0].mxu0
        %v2854 = vpop.f32.mrb[0].mxu0
        %v2855 = vadd.f32 0.0, %v2854
        %v2856 = vpop.f32.mrb[0].mxu0
        %2857 = vmatprep.mubr.bf16.mxu0 0
        %2858 = vmatmul.mubr.bf16.gmra.mrb[0].mxu0 %v2769
        %v2859 = vpop.f32.mrb[0].mxu0
        %v2860 = vadd.f32 0.0, %v2859
        %v2861 = vpop.f32.mrb[0].mxu0
        %v2862 = vpop.f32.mrb[0].mxu0
        %v2863 = vadd.f32 0.0, %v2862
        %v2864 = vpop.f32.mrb[0].mxu0
        %2865 = vmatprep.mubr.bf16.mxu0 0
        %2866 = vmatmul.mubr.bf16.gmra.mrb[0].mxu0 %v2772
        %v2867 = vpop.f32.mrb[0].mxu0
        %v2868 = vadd.f32 0.0, %v2867
        %v2869 = vpop.f32.mrb[0].mxu0
        %v2870 = vpop.f32.mrb[0].mxu0
        %v2871 = vadd.f32 0.0, %v2870
        %v2872 = vpop.f32.mrb[0].mxu0
        %2873 = vmatprep.mubr.bf16.mxu0 0
        %2874 = vmatmul.mubr.bf16.gmra.mrb[0].mxu0 %v2775
        %v2875 = vpop.f32.mrb[0].mxu0
        %v2876 = vadd.f32 0.0, %v2875
        %v2877 = vpop.f32.mrb[0].mxu0
        %v2878 = vpop.f32.mrb[0].mxu0
        %v2879 = vadd.f32 0.0, %v2878
        %v2880 = vpop.f32.mrb[0].mxu0
        %2881 = vmatprep.mubr.bf16.mxu0 0
        %2882 = vmatmul.mubr.bf16.gmra.mrb[0].mxu0 %v2778
        %v2883 = vpop.f32.mrb[0].mxu0
        %v2884 = vadd.f32 0.0, %v2883
        %v2885 = vpop.f32.mrb[0].mxu0
        %v2886 = vpop.f32.mrb[0].mxu0
        %v2887 = vadd.f32 0.0, %v2886
        %v2888 = vpop.f32.mrb[0].mxu0
        %2889 = vmatprep.mubr.bf16.mxu0 0
        %2890 = vmatmul.mubr.bf16.gmra.mrb[0].mxu0 %v2781
        %v2891 = vpop.f32.mrb[0].mxu0
        %v2892 = vadd.f32 0.0, %v2891
        %v2893 = vpop.f32.mrb[0].mxu0
        %v2894 = vpop.f32.mrb[0].mxu0
        %v2895 = vadd.f32 0.0, %v2894
        %v2896 = vpop.f32.mrb[0].mxu0
        %2897 = vmatprep.mubr.bf16.mxu0 0
        %2898 = vmatmul.mubr.bf16.gmra.mrb[0].mxu0 %v2784
        %v2899 = vpop.f32.mrb[0].mxu0
        %v2900 = vadd.f32 0.0, %v2899
        %v2901 = vpop.f32.mrb[0].mxu0
        %v2902 = vpop.f32.mrb[0].mxu0
        %v2903 = vadd.f32 0.0, %v2902
        %v2904 = vpop.f32.mrb[0].mxu0
        %2905 = vmatprep.mubr.bf16.mxu0 0
        %2906 = vmatmul.mubr.bf16.gmra.mrb[0].mxu0 %v2787
        %v2907 = vpop.f32.mrb[0].mxu0
        %v2908 = vadd.f32 0.0, %v2907
        %v2909 = vpop.f32.mrb[0].mxu0
        %v2910 = vpop.f32.mrb[0].mxu0
        %v2911 = vadd.f32 0.0, %v2910
        %v2912 = vpop.f32.mrb[0].mxu0
        %2913 = vmatprep.mubr.bf16.mxu0 0
        %2914 = vmatmul.mubr.bf16.gmra.mrb[0].mxu0 %v2790
        %v2915 = vpop.f32.mrb[0].mxu0
        %v2916 = vadd.f32 0.0, %v2915
        %v2917 = vpop.f32.mrb[0].mxu0
        %v2918 = vpop.f32.mrb[0].mxu0
        %v2919 = vadd.f32 0.0, %v2918
        %v2920 = vpop.f32.mrb[0].mxu0
        %2921 = vmatprep.mubr.bf16.mxu0 0
        %2922 = vmatmul.mubr.bf16.gmra.mrb[0].mxu0 %v2793
        %v2923 = vpop.f32.mrb[0].mxu0
        %v2924 = vadd.f32 0.0, %v2923
        %v2925 = vpop.f32.mrb[0].mxu0
        %v2926 = vpop.f32.mrb[0].mxu0
        %v2927 = vadd.f32 0.0, %v2926
        %v2928 = vpop.f32.mrb[0].mxu0
        %2929 = vmatprep.mubr.bf16.mxu0 0
        %2930 = vmatmul.mubr.bf16.gmra.mrb[0].mxu0 %v2796
        %v2931 = vpop.f32.mrb[0].mxu0
        %v2932 = vadd.f32 0.0, %v2931
        %v2933 = vpop.f32.mrb[0].mxu0
        %v2934 = vpop.f32.mrb[0].mxu0
        %v2935 = vadd.f32 0.0, %v2934
        %v2936 = vpop.f32.mrb[0].mxu0
        %2937 = vmatprep.mubr.bf16.mxu0 0
        %2938 = vmatmul.mubr.bf16.gmra.mrb[0].mxu0 %v2799
        %v2939 = vpop.f32.mrb[0].mxu0
        %v2940 = vadd.f32 0.0, %v2939
        %v2941 = vpop.f32.mrb[0].mxu0
        %v2942 = vpop.f32.mrb[0].mxu0
        %v2943 = vadd.f32 0.0, %v2942
        %v2944 = vpop.f32.mrb[0].mxu0
        %2945 = vmatprep.mubr.bf16.mxu0 0
        %2946 = vmatmul.mubr.bf16.gmra.mrb[0].mxu0 %v2802
        %v2947 = vpop.f32.mrb[0].mxu0
        %v2948 = vadd.f32 0.0, %v2947
        %v2949 = vpop.f32.mrb[0].mxu0
        %v2950 = vpop.f32.mrb[0].mxu0
        %v2951 = vadd.f32 0.0, %v2950
        %v2952 = vpop.f32.mrb[0].mxu0
        %2953 = vmatprep.mubr.bf16.mxu0 0
        %2954 = vmatmul.mubr.bf16.gmra.mrb[0].mxu0 %v2805
        %v2955 = vpop.f32.mrb[0].mxu0
        %v2956 = vadd.f32 0.0, %v2955
        %v2957 = vpop.f32.mrb[0].mxu0
        %v2958 = vpop.f32.mrb[0].mxu0
        %v2959 = vadd.f32 0.0, %v2958
        %v2960 = vpop.f32.mrb[0].mxu0
        %2961 = vmatprep.mubr.bf16.mxu0 0
        %2962 = vmatmul.mubr.bf16.gmra.mrb[0].mxu0 %v2808
        %v2963 = vpop.f32.mrb[0].mxu0
        %v2964 = vadd.f32 0.0, %v2963
        %v2965 = vpop.f32.mrb[0].mxu0
        %v2966 = vpop.f32.mrb[0].mxu0
        %v2967 = vadd.f32 0.0, %v2966
        %v2968 = vpop.f32.mrb[0].mxu0
        %2969 = vmatprep.mubr.bf16.mxu0 0
        %2970 = vmatmul.mubr.bf16.gmra.mrb[0].mxu0 %v2811
        %v2971 = vpop.f32.mrb[0].mxu0
        %v2972 = vadd.f32 0.0, %v2971
        %v2973 = vpop.f32.mrb[0].mxu0
        %v2974 = vpop.f32.mrb[0].mxu0
        %v2975 = vadd.f32 0.0, %v2974
        %v2976 = vpop.f32.mrb[0].mxu0
        %2977 = vdwg.mxu0
        %v2979 = vsel %vm286, %v2747, 0
        %v2982 = vsel %vm2813, %v234, 0
        %2984 = vmatprep.subr.bf16.mxu0 0
        %2985 = vmatpush1.bf16.msra.mxu0 %v2982
        %2986 = vmatprep.subr.bf16.mxu0 0
        %2987 = vmatpush1.bf16.msra.mxu0 0
        %2988 = vmatprep.subr.bf16.mxu0 0
        %2989 = vmatpush1.bf16.msra.mxu0 0
        %2990 = vmatprep.subr.bf16.mxu0 0
        %2991 = vmatpush1.bf16.msra.mxu0 0
        %2992 = vmatprep.subr.bf16.mxu0 0
        %2993 = vmatpush1.bf16.msra.mxu0 0
        %2994 = vmatprep.subr.bf16.mxu0 0
        %2995 = vmatpush1.bf16.msra.mxu0 0
        %2996 = vmatprep.subr.bf16.mxu0 0
        %2997 = vmatpush1.bf16.msra.mxu0 0
        %2998 = vmatprep.subr.bf16.mxu0 0
        %2999 = vmatpush1.bf16.msra.mxu0 0
        %3000 = vmatprep.subr.bf16.mxu0 0
        %3001 = vmatpush1.bf16.msra.mxu0 0
        %3002 = vmatprep.subr.bf16.mxu0 0
        %3003 = vmatpush1.bf16.msra.mxu0 0
        %3004 = vmatprep.subr.bf16.mxu0 0
        %3005 = vmatpush1.bf16.msra.mxu0 0
        %3006 = vmatprep.subr.bf16.mxu0 0
        %3007 = vmatpush1.bf16.msra.mxu0 0
        %3008 = vmatprep.subr.bf16.mxu0 0
        %3009 = vmatpush1.bf16.msra.mxu0 0
        %3010 = vmatprep.subr.bf16.mxu0 0
        %3011 = vmatpush1.bf16.msra.mxu0 0
        %3012 = vmatprep.subr.bf16.mxu0 0
        %3013 = vmatpush1.bf16.msra.mxu0 0
        %3014 = vmatprep.subr.bf16.mxu0 0
        %3015 = vmatpush1.bf16.msra.mxu0 0
        %3016 = vmatprep.mubr.bf16.mxu0 0
        %3017 = vmatmul.mubr.bf16.gmra.mrb[0].mxu0 %v2979
        %v3018 = vpop.f32.mrb[0].mxu0
        %v3019 = vadd.f32 %v2852, %v3018
        %v3020 = vpop.f32.mrb[0].mxu0
        %v3021 = vpop.f32.mrb[0].mxu0
        %v3022 = vadd.f32 %v2855, %v3021
        %v3023 = vpop.f32.mrb[0].mxu0
        %3024 = vmatprep.mubr.bf16.mxu0 0
        %3025 = vmatmul.mubr.bf16.gmra.mrb[0].mxu0 %v2766
        %v3026 = vpop.f32.mrb[0].mxu0
        %v3027 = vadd.f32 %v2860, %v3026
        %v3028 = vpop.f32.mrb[0].mxu0
        %v3029 = vpop.f32.mrb[0].mxu0
        %v3030 = vadd.f32 %v2863, %v3029
        %v3031 = vpop.f32.mrb[0].mxu0
        %3032 = vmatprep.mubr.bf16.mxu0 0
        %3033 = vmatmul.mubr.bf16.gmra.mrb[0].mxu0 %v2769
        %v3034 = vpop.f32.mrb[0].mxu0
        %v3035 = vadd.f32 %v2868, %v3034
        %v3036 = vpop.f32.mrb[0].mxu0
        %v3037 = vpop.f32.mrb[0].mxu0
        %v3038 = vadd.f32 %v2871, %v3037
        %v3039 = vpop.f32.mrb[0].mxu0
        %3040 = vmatprep.mubr.bf16.mxu0 0
        %3041 = vmatmul.mubr.bf16.gmra.mrb[0].mxu0 %v2772
        %v3042 = vpop.f32.mrb[0].mxu0
        %v3043 = vadd.f32 %v2876, %v3042
        %v3044 = vpop.f32.mrb[0].mxu0
        %v3045 = vpop.f32.mrb[0].mxu0
        %v3046 = vadd.f32 %v2879, %v3045
        %v3047 = vpop.f32.mrb[0].mxu0
        %3048 = vmatprep.mubr.bf16.mxu0 0
        %3049 = vmatmul.mubr.bf16.gmra.mrb[0].mxu0 %v2775
        %v3050 = vpop.f32.mrb[0].mxu0
        %v3051 = vadd.f32 %v2884, %v3050
        %v3052 = vpop.f32.mrb[0].mxu0
        %v3053 = vpop.f32.mrb[0].mxu0
        %v3054 = vadd.f32 %v2887, %v3053
        %v3055 = vpop.f32.mrb[0].mxu0
        %3056 = vmatprep.mubr.bf16.mxu0 0
        %3057 = vmatmul.mubr.bf16.gmra.mrb[0].mxu0 %v2778
        %v3058 = vpop.f32.mrb[0].mxu0
        %v3059 = vadd.f32 %v2892, %v3058
        %v3060 = vpop.f32.mrb[0].mxu0
        %v3061 = vpop.f32.mrb[0].mxu0
        %v3062 = vadd.f32 %v2895, %v3061
        %v3063 = vpop.f32.mrb[0].mxu0
        %3064 = vmatprep.mubr.bf16.mxu0 0
        %3065 = vmatmul.mubr.bf16.gmra.mrb[0].mxu0 %v2781
        %v3066 = vpop.f32.mrb[0].mxu0
        %v3067 = vadd.f32 %v2900, %v3066
        %v3068 = vpop.f32.mrb[0].mxu0
        %v3069 = vpop.f32.mrb[0].mxu0
        %v3070 = vadd.f32 %v2903, %v3069
        %v3071 = vpop.f32.mrb[0].mxu0
        %3072 = vmatprep.mubr.bf16.mxu0 0
        %3073 = vmatmul.mubr.bf16.gmra.mrb[0].mxu0 %v2784
        %v3074 = vpop.f32.mrb[0].mxu0
        %v3075 = vadd.f32 %v2908, %v3074
        %v3076 = vpop.f32.mrb[0].mxu0
        %v3077 = vpop.f32.mrb[0].mxu0
        %v3078 = vadd.f32 %v2911, %v3077
        %v3079 = vpop.f32.mrb[0].mxu0
        %3080 = vmatprep.mubr.bf16.mxu0 0
        %3081 = vmatmul.mubr.bf16.gmra.mrb[0].mxu0 %v2787
        %v3082 = vpop.f32.mrb[0].mxu0
        %v3083 = vadd.f32 %v2916, %v3082
        %v3084 = vpop.f32.mrb[0].mxu0
        %v3085 = vpop.f32.mrb[0].mxu0
        %v3086 = vadd.f32 %v2919, %v3085
        %v3087 = vpop.f32.mrb[0].mxu0
        %3088 = vmatprep.mubr.bf16.mxu0 0
        %3089 = vmatmul.mubr.bf16.gmra.mrb[0].mxu0 %v2790
        %v3090 = vpop.f32.mrb[0].mxu0
        %v3091 = vadd.f32 %v2924, %v3090
        %v3092 = vpop.f32.mrb[0].mxu0
        %v3093 = vpop.f32.mrb[0].mxu0
        %v3094 = vadd.f32 %v2927, %v3093
        %v3095 = vpop.f32.mrb[0].mxu0
        %3096 = vmatprep.mubr.bf16.mxu0 0
        %3097 = vmatmul.mubr.bf16.gmra.mrb[0].mxu0 %v2793
        %v3098 = vpop.f32.mrb[0].mxu0
        %v3099 = vadd.f32 %v2932, %v3098
        %v3100 = vpop.f32.mrb[0].mxu0
        %v3101 = vpop.f32.mrb[0].mxu0
        %v3102 = vadd.f32 %v2935, %v3101
        %v3103 = vpop.f32.mrb[0].mxu0
        %3104 = vmatprep.mubr.bf16.mxu0 0
        %3105 = vmatmul.mubr.bf16.gmra.mrb[0].mxu0 %v2796
        %v3106 = vpop.f32.mrb[0].mxu0
        %v3107 = vadd.f32 %v2940, %v3106
        %v3108 = vpop.f32.mrb[0].mxu0
        %v3109 = vpop.f32.mrb[0].mxu0
        %v3110 = vadd.f32 %v2943, %v3109
        %v3111 = vpop.f32.mrb[0].mxu0
        %3112 = vmatprep.mubr.bf16.mxu0 0
        %3113 = vmatmul.mubr.bf16.gmra.mrb[0].mxu0 %v2799
        %v3114 = vpop.f32.mrb[0].mxu0
        %v3115 = vadd.f32 %v2948, %v3114
        %v3116 = vpop.f32.mrb[0].mxu0
        %v3117 = vpop.f32.mrb[0].mxu0
        %v3118 = vadd.f32 %v2951, %v3117
        %v3119 = vpop.f32.mrb[0].mxu0
        %3120 = vmatprep.mubr.bf16.mxu0 0
        %3121 = vmatmul.mubr.bf16.gmra.mrb[0].mxu0 %v2802
        %v3122 = vpop.f32.mrb[0].mxu0
        %v3123 = vadd.f32 %v2956, %v3122
        %v3124 = vpop.f32.mrb[0].mxu0
        %v3125 = vpop.f32.mrb[0].mxu0
        %v3126 = vadd.f32 %v2959, %v3125
        %v3127 = vpop.f32.mrb[0].mxu0
        %3128 = vmatprep.mubr.bf16.mxu0 0
        %3129 = vmatmul.mubr.bf16.gmra.mrb[0].mxu0 %v2805
        %v3130 = vpop.f32.mrb[0].mxu0
        %v3131 = vadd.f32 %v2964, %v3130
        %v3132 = vpop.f32.mrb[0].mxu0
        %v3133 = vpop.f32.mrb[0].mxu0
        %v3134 = vadd.f32 %v2967, %v3133
        %v3135 = vpop.f32.mrb[0].mxu0
        %3136 = vmatprep.mubr.bf16.mxu0 0
        %3137 = vmatmul.mubr.bf16.gmra.mrb[0].mxu0 %v2808
        %v3138 = vpop.f32.mrb[0].mxu0
        %v3139 = vadd.f32 %v2972, %v3138
        %v3140 = vpop.f32.mrb[0].mxu0
        %v3141 = vpop.f32.mrb[0].mxu0
        %v3142 = vadd.f32 %v2975, %v3141
        %v3143 = vpop.f32.mrb[0].mxu0
        %3144 = vdwg.mxu0
        %v3146 = vsel %vm286, %v2764, 0
        %v3149 = vsel %vm2813, %v240, 0
        %3151 = vmatprep.subr.bf16.mxu0 0
        %3152 = vmatpush1.bf16.msra.mxu0 %v3149
        %3153 = vmatprep.subr.bf16.mxu0 0
        %3154 = vmatpush1.bf16.msra.mxu0 0
        %3155 = vmatprep.subr.bf16.mxu0 0
        %3156 = vmatpush1.bf16.msra.mxu0 0
        %3157 = vmatprep.subr.bf16.mxu0 0
        %3158 = vmatpush1.bf16.msra.mxu0 0
        %3159 = vmatprep.subr.bf16.mxu0 0
        %3160 = vmatpush1.bf16.msra.mxu0 0
        %3161 = vmatprep.subr.bf16.mxu0 0
        %3162 = vmatpush1.bf16.msra.mxu0 0
        %3163 = vmatprep.subr.bf16.mxu0 0
        %3164 = vmatpush1.bf16.msra.mxu0 0
        %3165 = vmatprep.subr.bf16.mxu0 0
        %3166 = vmatpush1.bf16.msra.mxu0 0
        %3167 = vmatprep.subr.bf16.mxu0 0
        %3168 = vmatpush1.bf16.msra.mxu0 0
        %3169 = vmatprep.subr.bf16.mxu0 0
        %3170 = vmatpush1.bf16.msra.mxu0 0
        %3171 = vmatprep.subr.bf16.mxu0 0
        %3172 = vmatpush1.bf16.msra.mxu0 0
        %3173 = vmatprep.subr.bf16.mxu0 0
        %3174 = vmatpush1.bf16.msra.mxu0 0
        %3175 = vmatprep.subr.bf16.mxu0 0
        %3176 = vmatpush1.bf16.msra.mxu0 0
        %3177 = vmatprep.subr.bf16.mxu0 0
        %3178 = vmatpush1.bf16.msra.mxu0 0
        %3179 = vmatprep.subr.bf16.mxu0 0
        %3180 = vmatpush1.bf16.msra.mxu0 0
        %3181 = vmatprep.subr.bf16.mxu0 0
        %3182 = vmatpush1.bf16.msra.mxu0 0
        %3183 = vmatprep.mubr.bf16.mxu0 0
        %3184 = vmatmul.mubr.bf16.gmra.mrb[0].mxu0 %v2769
        %v3185 = vpop.f32.mrb[0].mxu0
        %v3186 = vadd.f32 0.0, %v3185
        %v3187 = vpop.f32.mrb[0].mxu0
        %v3188 = vpop.f32.mrb[0].mxu0
        %v3189 = vadd.f32 0.0, %v3188
        %v3190 = vpop.f32.mrb[0].mxu0
        %3191 = vmatprep.mubr.bf16.mxu0 0
        %3192 = vmatmul.mubr.bf16.gmra.mrb[0].mxu0 %v2772
        %v3193 = vpop.f32.mrb[0].mxu0
        %v3194 = vadd.f32 0.0, %v3193
        %v3195 = vpop.f32.mrb[0].mxu0
        %v3196 = vpop.f32.mrb[0].mxu0
        %v3197 = vadd.f32 0.0, %v3196
        %v3198 = vpop.f32.mrb[0].mxu0
        %3199 = vmatprep.mubr.bf16.mxu0 0
        %3200 = vmatmul.mubr.bf16.gmra.mrb[0].mxu0 %v2775
        %v3201 = vpop.f32.mrb[0].mxu0
        %v3202 = vadd.f32 0.0, %v3201
        %v3203 = vpop.f32.mrb[0].mxu0
        %v3204 = vpop.f32.mrb[0].mxu0
        %v3205 = vadd.f32 0.0, %v3204
        %v3206 = vpop.f32.mrb[0].mxu0
        %3207 = vmatprep.mubr.bf16.mxu0 0
        %3208 = vmatmul.mubr.bf16.gmra.mrb[0].mxu0 %v2778
        %v3209 = vpop.f32.mrb[0].mxu0
        %v3210 = vadd.f32 0.0, %v3209
        %v3211 = vpop.f32.mrb[0].mxu0
        %v3212 = vpop.f32.mrb[0].mxu0
        %v3213 = vadd.f32 0.0, %v3212
        %v3214 = vpop.f32.mrb[0].mxu0
        %3215 = vmatprep.mubr.bf16.mxu0 0
        %3216 = vmatmul.mubr.bf16.gmra.mrb[0].mxu0 %v2781
        %v3217 = vpop.f32.mrb[0].mxu0
        %v3218 = vadd.f32 0.0, %v3217
        %v3219 = vpop.f32.mrb[0].mxu0
        %v3220 = vpop.f32.mrb[0].mxu0
        %v3221 = vadd.f32 0.0, %v3220
        %v3222 = vpop.f32.mrb[0].mxu0
        %3223 = vmatprep.mubr.bf16.mxu0 0
        %3224 = vmatmul.mubr.bf16.gmra.mrb[0].mxu0 %v2784
        %v3225 = vpop.f32.mrb[0].mxu0
        %v3226 = vadd.f32 0.0, %v3225
        %v3227 = vpop.f32.mrb[0].mxu0
        %v3228 = vpop.f32.mrb[0].mxu0
        %v3229 = vadd.f32 0.0, %v3228
        %v3230 = vpop.f32.mrb[0].mxu0
        %3231 = vmatprep.mubr.bf16.mxu0 0
        %3232 = vmatmul.mubr.bf16.gmra.mrb[0].mxu0 %v2787
        %v3233 = vpop.f32.mrb[0].mxu0
        %v3234 = vadd.f32 0.0, %v3233
        %v3235 = vpop.f32.mrb[0].mxu0
        %v3236 = vpop.f32.mrb[0].mxu0
        %v3237 = vadd.f32 0.0, %v3236
        %v3238 = vpop.f32.mrb[0].mxu0
        %3239 = vmatprep.mubr.bf16.mxu0 0
        %3240 = vmatmul.mubr.bf16.gmra.mrb[0].mxu0 %v2790
        %v3241 = vpop.f32.mrb[0].mxu0
        %v3242 = vadd.f32 0.0, %v3241
        %v3243 = vpop.f32.mrb[0].mxu0
        %v3244 = vpop.f32.mrb[0].mxu0
        %v3245 = vadd.f32 0.0, %v3244
        %v3246 = vpop.f32.mrb[0].mxu0
        %3247 = vmatprep.mubr.bf16.mxu0 0
        %3248 = vmatmul.mubr.bf16.gmra.mrb[0].mxu0 %v2793
        %v3249 = vpop.f32.mrb[0].mxu0
        %v3250 = vadd.f32 0.0, %v3249
        %v3251 = vpop.f32.mrb[0].mxu0
        %v3252 = vpop.f32.mrb[0].mxu0
        %v3253 = vadd.f32 0.0, %v3252
        %v3254 = vpop.f32.mrb[0].mxu0
        %3255 = vmatprep.mubr.bf16.mxu0 0
        %3256 = vmatmul.mubr.bf16.gmra.mrb[0].mxu0 %v2796
        %v3257 = vpop.f32.mrb[0].mxu0
        %v3258 = vadd.f32 0.0, %v3257
        %v3259 = vpop.f32.mrb[0].mxu0
        %v3260 = vpop.f32.mrb[0].mxu0
        %v3261 = vadd.f32 0.0, %v3260
        %v3262 = vpop.f32.mrb[0].mxu0
        %3263 = vmatprep.mubr.bf16.mxu0 0
        %3264 = vmatmul.mubr.bf16.gmra.mrb[0].mxu0 %v2799
        %v3265 = vpop.f32.mrb[0].mxu0
        %v3266 = vadd.f32 0.0, %v3265
        %v3267 = vpop.f32.mrb[0].mxu0
        %v3268 = vpop.f32.mrb[0].mxu0
        %v3269 = vadd.f32 0.0, %v3268
        %v3270 = vpop.f32.mrb[0].mxu0
        %3271 = vmatprep.mubr.bf16.mxu0 0
        %3272 = vmatmul.mubr.bf16.gmra.mrb[0].mxu0 %v2802
        %v3273 = vpop.f32.mrb[0].mxu0
        %v3274 = vadd.f32 0.0, %v3273
        %v3275 = vpop.f32.mrb[0].mxu0
        %v3276 = vpop.f32.mrb[0].mxu0
        %v3277 = vadd.f32 0.0, %v3276
        %v3278 = vpop.f32.mrb[0].mxu0
        %3279 = vmatprep.mubr.bf16.mxu0 0
        %3280 = vmatmul.mubr.bf16.gmra.mrb[0].mxu0 %v2805
        %v3281 = vpop.f32.mrb[0].mxu0
        %v3282 = vadd.f32 0.0, %v3281
        %v3283 = vpop.f32.mrb[0].mxu0
        %v3284 = vpop.f32.mrb[0].mxu0
        %v3285 = vadd.f32 0.0, %v3284
        %v3286 = vpop.f32.mrb[0].mxu0
        %3287 = vmatprep.mubr.bf16.mxu0 0
        %3288 = vmatmul.mubr.bf16.gmra.mrb[0].mxu0 %v2808
        %v3289 = vpop.f32.mrb[0].mxu0
        %v3290 = vadd.f32 0.0, %v3289
        %v3291 = vpop.f32.mrb[0].mxu0
        %v3292 = vpop.f32.mrb[0].mxu0
        %v3293 = vadd.f32 0.0, %v3292
        %v3294 = vpop.f32.mrb[0].mxu0
        %3295 = vmatprep.mubr.bf16.mxu0 0
        %3296 = vmatmul.mubr.bf16.gmra.mrb[0].mxu0 %v2811
        %v3297 = vpop.f32.mrb[0].mxu0
        %v3298 = vadd.f32 0.0, %v3297
        %v3299 = vpop.f32.mrb[0].mxu0
        %v3300 = vpop.f32.mrb[0].mxu0
        %v3301 = vadd.f32 0.0, %v3300
        %v3302 = vpop.f32.mrb[0].mxu0
        %3303 = vmatprep.mubr.bf16.mxu0 0
        %3304 = vmatmul.mubr.bf16.gmra.mrb[0].mxu0 %v3146
        %v3305 = vpop.f32.mrb[0].mxu0
        %v3306 = vadd.f32 0.0, %v3305
        %v3307 = vpop.f32.mrb[0].mxu0
        %v3308 = vpop.f32.mrb[0].mxu0
        %v3309 = vadd.f32 0.0, %v3308
        %v3310 = vpop.f32.mrb[0].mxu0
        %3311 = vdwg.mxu0
        %v3312 = vadd.f32 %v3019, %v3186
        %v3313 = vadd.f32 %v3022, %v3189
        %v3314 = vadd.f32 %v3027, %v3194
        %v3315 = vadd.f32 %v3030, %v3197
        %v3316 = vadd.f32 %v3035, %v3202
        %v3317 = vadd.f32 %v3038, %v3205
        %v3318 = vadd.f32 %v3043, %v3210
        %v3319 = vadd.f32 %v3046, %v3213
        %v3320 = vadd.f32 %v3051, %v3218
        %v3321 = vadd.f32 %v3054, %v3221
        %v3322 = vadd.f32 %v3059, %v3226
        %v3323 = vadd.f32 %v3062, %v3229
        %v3324 = vadd.f32 %v3067, %v3234
        %v3325 = vadd.f32 %v3070, %v3237
        %v3326 = vadd.f32 %v3075, %v3242
        %v3327 = vadd.f32 %v3078, %v3245
        %v3328 = vadd.f32 %v3083, %v3250
        %v3329 = vadd.f32 %v3086, %v3253
        %v3330 = vadd.f32 %v3091, %v3258
        %v3331 = vadd.f32 %v3094, %v3261
        %v3332 = vadd.f32 %v3099, %v3266
        %v3333 = vadd.f32 %v3102, %v3269
        %v3334 = vadd.f32 %v3107, %v3274
        %v3335 = vadd.f32 %v3110, %v3277
        %v3336 = vadd.f32 %v3115, %v3282
        %v3337 = vadd.f32 %v3118, %v3285
        %v3338 = vadd.f32 %v3123, %v3290
        %v3339 = vadd.f32 %v3126, %v3293
        %v3340 = vadd.f32 %v3131, %v3298
        %v3341 = vadd.f32 %v3134, %v3301
        %v3342 = vadd.f32 %v3139, %v3306
        %v3343 = vadd.f32 %v3142, %v3309
        %v3344 = vld [vmem:[#allocation3 + $0x1] sm:$0xff]
        %v3345 = vld [vmem:[#allocation3 + $0x9] sm:$0xff]
        %v3346 = vld [vmem:[#allocation3 + $0x19] sm:$0xff]
        %v3347 = vld [vmem:[#allocation3 + $0x21] sm:$0xff]
        %v3348 = vld [vmem:[#allocation3 + $0x31] sm:$0xff]
        %v3349 = vld [vmem:[#allocation3 + $0x39] sm:$0xff]
        %v3350 = vld [vmem:[#allocation3 + $0x49] sm:$0xff]
        %v3351 = vld [vmem:[#allocation3 + $0x51] sm:$0xff]
        %v3352 = vld [vmem:[#allocation3 + $0x61] sm:$0xff]
        %v3353 = vld [vmem:[#allocation3 + $0x69] sm:$0xff]
        %v3354 = vld [vmem:[#allocation3 + $0x79] sm:$0xff]
        %v3355 = vld [vmem:[#allocation3 + $0x81] sm:$0xff]
        %v3356 = vld [vmem:[#allocation3 + $0x91] sm:$0xff]
        %v3357 = vld [vmem:[#allocation3 + $0x99] sm:$0xff]
        %v3358 = vld [vmem:[#allocation3 + $0xa9] sm:$0xff]
        %v3359 = vld [vmem:[#allocation3 + $0xb1] sm:$0xff]
        %v3360 = vld [vmem:[#allocation3 + $0xc1] sm:$0xff]
        %v3361 = vld [vmem:[#allocation3 + $0xc9] sm:$0xff]
        %v3362 = vld [vmem:[#allocation3 + $0xd9] sm:$0xff]
        %v3363 = vld [vmem:[#allocation3 + $0xe1] sm:$0xff]
        %v3364 = vld [vmem:[#allocation3 + $0xf1] sm:$0xff]
        %v3365 = vld [vmem:[#allocation3 + $0xf9] sm:$0xff]
        %v3366 = vld [vmem:[#allocation3 + $0x109] sm:$0xff]
        %v3367 = vld [vmem:[#allocation3 + $0x111] sm:$0xff]
        %v3368 = vld [vmem:[#allocation3 + $0x121] sm:$0xff]
        %v3369 = vld [vmem:[#allocation3 + $0x129] sm:$0xff]
        %v3370 = vld [vmem:[#allocation3 + $0x139] sm:$0xff]
        %v3371 = vld [vmem:[#allocation3 + $0x141] sm:$0xff]
        %v3372 = vld [vmem:[#allocation3 + $0x151] sm:$0xff]
        %v3373 = vld [vmem:[#allocation3 + $0x159] sm:$0xff]
        %v3374 = vld [vmem:[#allocation3 + $0x169] sm:$0xff]
        %v3375 = vld [vmem:[#allocation3 + $0x171] sm:$0xff]
        %v3376 = vld [vmem:[#allocation3 + $0x181] sm:$0xff]
        %v3377 = vld [vmem:[#allocation3 + $0x189] sm:$0xff]
        %v3378 = vld [vmem:[#allocation3 + $0x199] sm:$0xff]
        %v3379 = vld [vmem:[#allocation3 + $0x1a1] sm:$0xff]
        %v3380 = vpack.c.bf16 %v3345, %v3344
        %v3381 = vpack.c.bf16 %v3347, %v3346
        %v3382 = vpack.c.bf16 %v3349, %v3348
        %v3383 = vpack.c.bf16 %v3351, %v3350
        %v3384 = vpack.c.bf16 %v3353, %v3352
        %v3385 = vpack.c.bf16 %v3355, %v3354
        %v3386 = vpack.c.bf16 %v3357, %v3356
        %v3387 = vpack.c.bf16 %v3359, %v3358
        %v3388 = vpack.c.bf16 %v3361, %v3360
        %v3389 = vpack.c.bf16 %v3363, %v3362
        %v3390 = vpack.c.bf16 %v3365, %v3364
        %v3391 = vpack.c.bf16 %v3367, %v3366
        %v3392 = vpack.c.bf16 %v3369, %v3368
        %v3393 = vpack.c.bf16 %v3371, %v3370
        %v3394 = vpack.c.bf16 %v3373, %v3372
        %v3395 = vpack.c.bf16 %v3375, %v3374
        %v3396 = vpack.c.bf16 %v3377, %v3376
        %v3397 = vpack.c.bf16 %v3379, %v3378
        %v3399 = vsel %vm286, %v3380, 0
        %v3402 = vsel %vm286, %v3381, 0
        %v3405 = vsel %vm286, %v3382, 0
        %v3408 = vsel %vm286, %v3383, 0
        %v3411 = vsel %vm286, %v3384, 0
        %v3414 = vsel %vm286, %v3385, 0
        %v3417 = vsel %vm286, %v3386, 0
        %v3420 = vsel %vm286, %v3387, 0
        %v3423 = vsel %vm286, %v3388, 0
        %v3426 = vsel %vm286, %v3389, 0
        %v3429 = vsel %vm286, %v3390, 0
        %v3432 = vsel %vm286, %v3391, 0
        %v3435 = vsel %vm286, %v3392, 0
        %v3438 = vsel %vm286, %v3393, 0
        %v3441 = vsel %vm286, %v3394, 0
        %v3444 = vsel %vm286, %v3395, 0
        %v3447 = vsel %vm2813, %v235, 0
        %3449 = vmatprep.subr.bf16.mxu0 0
        %3450 = vmatpush1.bf16.msra.mxu0 %v3447
        %3451 = vmatprep.subr.bf16.mxu0 0
        %3452 = vmatpush1.bf16.msra.mxu0 0
        %3453 = vmatprep.subr.bf16.mxu0 0
        %3454 = vmatpush1.bf16.msra.mxu0 0
        %3455 = vmatprep.subr.bf16.mxu0 0
        %3456 = vmatpush1.bf16.msra.mxu0 0
        %3457 = vmatprep.subr.bf16.mxu0 0
        %3458 = vmatpush1.bf16.msra.mxu0 0
        %3459 = vmatprep.subr.bf16.mxu0 0
        %3460 = vmatpush1.bf16.msra.mxu0 0
        %3461 = vmatprep.subr.bf16.mxu0 0
        %3462 = vmatpush1.bf16.msra.mxu0 0
        %3463 = vmatprep.subr.bf16.mxu0 0
        %3464 = vmatpush1.bf16.msra.mxu0 0
        %3465 = vmatprep.subr.bf16.mxu0 0
        %3466 = vmatpush1.bf16.msra.mxu0 0
        %3467 = vmatprep.subr.bf16.mxu0 0
        %3468 = vmatpush1.bf16.msra.mxu0 0
        %3469 = vmatprep.subr.bf16.mxu0 0
        %3470 = vmatpush1.bf16.msra.mxu0 0
        %3471 = vmatprep.subr.bf16.mxu0 0
        %3472 = vmatpush1.bf16.msra.mxu0 0
        %3473 = vmatprep.subr.bf16.mxu0 0
        %3474 = vmatpush1.bf16.msra.mxu0 0
        %3475 = vmatprep.subr.bf16.mxu0 0
        %3476 = vmatpush1.bf16.msra.mxu0 0
        %3477 = vmatprep.subr.bf16.mxu0 0
        %3478 = vmatpush1.bf16.msra.mxu0 0
        %3479 = vmatprep.subr.bf16.mxu0 0
        %3480 = vmatpush1.bf16.msra.mxu0 0
        %3481 = vmatprep.mubr.bf16.mxu0 0
        %3482 = vmatmul.mubr.bf16.gmra.mrb[0].mxu0 %v3399
        %v3483 = vpop.f32.mrb[0].mxu0
        %v3484 = vadd.f32 0.0, %v3483
        %v3485 = vpop.f32.mrb[0].mxu0
        %v3486 = vpop.f32.mrb[0].mxu0
        %v3487 = vadd.f32 0.0, %v3486
        %v3488 = vpop.f32.mrb[0].mxu0
        %3489 = vmatprep.mubr.bf16.mxu0 0
        %3490 = vmatmul.mubr.bf16.gmra.mrb[0].mxu0 %v3402
        %v3491 = vpop.f32.mrb[0].mxu0
        %v3492 = vadd.f32 0.0, %v3491
        %v3493 = vpop.f32.mrb[0].mxu0
        %v3494 = vpop.f32.mrb[0].mxu0
        %v3495 = vadd.f32 0.0, %v3494
        %v3496 = vpop.f32.mrb[0].mxu0
        %3497 = vmatprep.mubr.bf16.mxu0 0
        %3498 = vmatmul.mubr.bf16.gmra.mrb[0].mxu0 %v3405
        %v3499 = vpop.f32.mrb[0].mxu0
        %v3500 = vadd.f32 0.0, %v3499
        %v3501 = vpop.f32.mrb[0].mxu0
        %v3502 = vpop.f32.mrb[0].mxu0
        %v3503 = vadd.f32 0.0, %v3502
        %v3504 = vpop.f32.mrb[0].mxu0
        %3505 = vmatprep.mubr.bf16.mxu0 0
        %3506 = vmatmul.mubr.bf16.gmra.mrb[0].mxu0 %v3408
        %v3507 = vpop.f32.mrb[0].mxu0
        %v3508 = vadd.f32 0.0, %v3507
        %v3509 = vpop.f32.mrb[0].mxu0
        %v3510 = vpop.f32.mrb[0].mxu0
        %v3511 = vadd.f32 0.0, %v3510
        %v3512 = vpop.f32.mrb[0].mxu0
        %3513 = vmatprep.mubr.bf16.mxu0 0
        %3514 = vmatmul.mubr.bf16.gmra.mrb[0].mxu0 %v3411
        %v3515 = vpop.f32.mrb[0].mxu0
        %v3516 = vadd.f32 0.0, %v3515
        %v3517 = vpop.f32.mrb[0].mxu0
        %v3518 = vpop.f32.mrb[0].mxu0
        %v3519 = vadd.f32 0.0, %v3518
        %v3520 = vpop.f32.mrb[0].mxu0
        %3521 = vmatprep.mubr.bf16.mxu0 0
        %3522 = vmatmul.mubr.bf16.gmra.mrb[0].mxu0 %v3414
        %v3523 = vpop.f32.mrb[0].mxu0
        %v3524 = vadd.f32 0.0, %v3523
        %v3525 = vpop.f32.mrb[0].mxu0
        %v3526 = vpop.f32.mrb[0].mxu0
        %v3527 = vadd.f32 0.0, %v3526
        %v3528 = vpop.f32.mrb[0].mxu0
        %3529 = vmatprep.mubr.bf16.mxu0 0
        %3530 = vmatmul.mubr.bf16.gmra.mrb[0].mxu0 %v3417
        %v3531 = vpop.f32.mrb[0].mxu0
        %v3532 = vadd.f32 0.0, %v3531
        %v3533 = vpop.f32.mrb[0].mxu0
        %v3534 = vpop.f32.mrb[0].mxu0
        %v3535 = vadd.f32 0.0, %v3534
        %v3536 = vpop.f32.mrb[0].mxu0
        %3537 = vmatprep.mubr.bf16.mxu0 0
        %3538 = vmatmul.mubr.bf16.gmra.mrb[0].mxu0 %v3420
        %v3539 = vpop.f32.mrb[0].mxu0
        %v3540 = vadd.f32 0.0, %v3539
        %v3541 = vpop.f32.mrb[0].mxu0
        %v3542 = vpop.f32.mrb[0].mxu0
        %v3543 = vadd.f32 0.0, %v3542
        %v3544 = vpop.f32.mrb[0].mxu0
        %3545 = vmatprep.mubr.bf16.mxu0 0
        %3546 = vmatmul.mubr.bf16.gmra.mrb[0].mxu0 %v3423
        %v3547 = vpop.f32.mrb[0].mxu0
        %v3548 = vadd.f32 0.0, %v3547
        %v3549 = vpop.f32.mrb[0].mxu0
        %v3550 = vpop.f32.mrb[0].mxu0
        %v3551 = vadd.f32 0.0, %v3550
        %v3552 = vpop.f32.mrb[0].mxu0
        %3553 = vmatprep.mubr.bf16.mxu0 0
        %3554 = vmatmul.mubr.bf16.gmra.mrb[0].mxu0 %v3426
        %v3555 = vpop.f32.mrb[0].mxu0
        %v3556 = vadd.f32 0.0, %v3555
        %v3557 = vpop.f32.mrb[0].mxu0
        %v3558 = vpop.f32.mrb[0].mxu0
        %v3559 = vadd.f32 0.0, %v3558
        %v3560 = vpop.f32.mrb[0].mxu0
        %3561 = vmatprep.mubr.bf16.mxu0 0
        %3562 = vmatmul.mubr.bf16.gmra.mrb[0].mxu0 %v3429
        %v3563 = vpop.f32.mrb[0].mxu0
        %v3564 = vadd.f32 0.0, %v3563
        %v3565 = vpop.f32.mrb[0].mxu0
        %v3566 = vpop.f32.mrb[0].mxu0
        %v3567 = vadd.f32 0.0, %v3566
        %v3568 = vpop.f32.mrb[0].mxu0
        %3569 = vmatprep.mubr.bf16.mxu0 0
        %3570 = vmatmul.mubr.bf16.gmra.mrb[0].mxu0 %v3432
        %v3571 = vpop.f32.mrb[0].mxu0
        %v3572 = vadd.f32 0.0, %v3571
        %v3573 = vpop.f32.mrb[0].mxu0
        %v3574 = vpop.f32.mrb[0].mxu0
        %v3575 = vadd.f32 0.0, %v3574
        %v3576 = vpop.f32.mrb[0].mxu0
        %3577 = vmatprep.mubr.bf16.mxu0 0
        %3578 = vmatmul.mubr.bf16.gmra.mrb[0].mxu0 %v3435
        %v3579 = vpop.f32.mrb[0].mxu0
        %v3580 = vadd.f32 0.0, %v3579
        %v3581 = vpop.f32.mrb[0].mxu0
        %v3582 = vpop.f32.mrb[0].mxu0
        %v3583 = vadd.f32 0.0, %v3582
        %v3584 = vpop.f32.mrb[0].mxu0
        %3585 = vmatprep.mubr.bf16.mxu0 0
        %3586 = vmatmul.mubr.bf16.gmra.mrb[0].mxu0 %v3438
        %v3587 = vpop.f32.mrb[0].mxu0
        %v3588 = vadd.f32 0.0, %v3587
        %v3589 = vpop.f32.mrb[0].mxu0
        %v3590 = vpop.f32.mrb[0].mxu0
        %v3591 = vadd.f32 0.0, %v3590
        %v3592 = vpop.f32.mrb[0].mxu0
        %3593 = vmatprep.mubr.bf16.mxu0 0
        %3594 = vmatmul.mubr.bf16.gmra.mrb[0].mxu0 %v3441
        %v3595 = vpop.f32.mrb[0].mxu0
        %v3596 = vadd.f32 0.0, %v3595
        %v3597 = vpop.f32.mrb[0].mxu0
        %v3598 = vpop.f32.mrb[0].mxu0
        %v3599 = vadd.f32 0.0, %v3598
        %v3600 = vpop.f32.mrb[0].mxu0
        %3601 = vmatprep.mubr.bf16.mxu0 0
        %3602 = vmatmul.mubr.bf16.gmra.mrb[0].mxu0 %v3444
        %v3603 = vpop.f32.mrb[0].mxu0
        %v3604 = vadd.f32 0.0, %v3603
        %v3605 = vpop.f32.mrb[0].mxu0
        %v3606 = vpop.f32.mrb[0].mxu0
        %v3607 = vadd.f32 0.0, %v3606
        %v3608 = vpop.f32.mrb[0].mxu0
        %3609 = vdwg.mxu0
        %v3610 = vadd.f32 %v3312, %v3484
        %v3611 = vadd.f32 %v3313, %v3487
        %v3612 = vadd.f32 %v3314, %v3492
        %v3613 = vadd.f32 %v3315, %v3495
        %v3614 = vadd.f32 %v3316, %v3500
        %v3615 = vadd.f32 %v3317, %v3503
        %v3616 = vadd.f32 %v3318, %v3508
        %v3617 = vadd.f32 %v3319, %v3511
        %v3618 = vadd.f32 %v3320, %v3516
        %v3619 = vadd.f32 %v3321, %v3519
        %v3620 = vadd.f32 %v3322, %v3524
        %v3621 = vadd.f32 %v3323, %v3527
        %v3622 = vadd.f32 %v3324, %v3532
        %v3623 = vadd.f32 %v3325, %v3535
        %v3624 = vadd.f32 %v3326, %v3540
        %v3625 = vadd.f32 %v3327, %v3543
        %v3626 = vadd.f32 %v3328, %v3548
        %v3627 = vadd.f32 %v3329, %v3551
        %v3628 = vadd.f32 %v3330, %v3556
        %v3629 = vadd.f32 %v3331, %v3559
        %v3630 = vadd.f32 %v3332, %v3564
        %v3631 = vadd.f32 %v3333, %v3567
        %v3632 = vadd.f32 %v3334, %v3572
        %v3633 = vadd.f32 %v3335, %v3575
        %v3634 = vadd.f32 %v3336, %v3580
        %v3635 = vadd.f32 %v3337, %v3583
        %v3636 = vadd.f32 %v3338, %v3588
        %v3637 = vadd.f32 %v3339, %v3591
        %v3638 = vadd.f32 %v3340, %v3596
        %v3639 = vadd.f32 %v3341, %v3599
        %v3640 = vadd.f32 %v3342, %v3604
        %v3641 = vadd.f32 %v3343, %v3607
        %v3643 = vsel %vm286, %v3396, 0
        %v3646 = vsel %vm2813, %v238, 0
        %3648 = vmatprep.subr.bf16.mxu0 0
        %3649 = vmatpush1.bf16.msra.mxu0 %v3646
        %3650 = vmatprep.subr.bf16.mxu0 0
        %3651 = vmatpush1.bf16.msra.mxu0 0
        %3652 = vmatprep.subr.bf16.mxu0 0
        %3653 = vmatpush1.bf16.msra.mxu0 0
        %3654 = vmatprep.subr.bf16.mxu0 0
        %3655 = vmatpush1.bf16.msra.mxu0 0
        %3656 = vmatprep.subr.bf16.mxu0 0
        %3657 = vmatpush1.bf16.msra.mxu0 0
        %3658 = vmatprep.subr.bf16.mxu0 0
        %3659 = vmatpush1.bf16.msra.mxu0 0
        %3660 = vmatprep.subr.bf16.mxu0 0
        %3661 = vmatpush1.bf16.msra.mxu0 0
        %3662 = vmatprep.subr.bf16.mxu0 0
        %3663 = vmatpush1.bf16.msra.mxu0 0
        %3664 = vmatprep.subr.bf16.mxu0 0
        %3665 = vmatpush1.bf16.msra.mxu0 0
        %3666 = vmatprep.subr.bf16.mxu0 0
        %3667 = vmatpush1.bf16.msra.mxu0 0
        %3668 = vmatprep.subr.bf16.mxu0 0
        %3669 = vmatpush1.bf16.msra.mxu0 0
        %3670 = vmatprep.subr.bf16.mxu0 0
        %3671 = vmatpush1.bf16.msra.mxu0 0
        %3672 = vmatprep.subr.bf16.mxu0 0
        %3673 = vmatpush1.bf16.msra.mxu0 0
        %3674 = vmatprep.subr.bf16.mxu0 0
        %3675 = vmatpush1.bf16.msra.mxu0 0
        %3676 = vmatprep.subr.bf16.mxu0 0
        %3677 = vmatpush1.bf16.msra.mxu0 0
        %3678 = vmatprep.subr.bf16.mxu0 0
        %3679 = vmatpush1.bf16.msra.mxu0 0
        %3680 = vmatprep.mubr.bf16.mxu0 0
        %3681 = vmatmul.mubr.bf16.gmra.mrb[0].mxu0 %v3402
        %v3682 = vpop.f32.mrb[0].mxu0
        %v3683 = vadd.f32 0.0, %v3682
        %v3684 = vpop.f32.mrb[0].mxu0
        %v3685 = vpop.f32.mrb[0].mxu0
        %v3686 = vadd.f32 0.0, %v3685
        %v3687 = vpop.f32.mrb[0].mxu0
        %3688 = vmatprep.mubr.bf16.mxu0 0
        %3689 = vmatmul.mubr.bf16.gmra.mrb[0].mxu0 %v3405
        %v3690 = vpop.f32.mrb[0].mxu0
        %v3691 = vadd.f32 0.0, %v3690
        %v3692 = vpop.f32.mrb[0].mxu0
        %v3693 = vpop.f32.mrb[0].mxu0
        %v3694 = vadd.f32 0.0, %v3693
        %v3695 = vpop.f32.mrb[0].mxu0
        %3696 = vmatprep.mubr.bf16.mxu0 0
        %3697 = vmatmul.mubr.bf16.gmra.mrb[0].mxu0 %v3408
        %v3698 = vpop.f32.mrb[0].mxu0
        %v3699 = vadd.f32 0.0, %v3698
        %v3700 = vpop.f32.mrb[0].mxu0
        %v3701 = vpop.f32.mrb[0].mxu0
        %v3702 = vadd.f32 0.0, %v3701
        %v3703 = vpop.f32.mrb[0].mxu0
        %3704 = vmatprep.mubr.bf16.mxu0 0
        %3705 = vmatmul.mubr.bf16.gmra.mrb[0].mxu0 %v3411
        %v3706 = vpop.f32.mrb[0].mxu0
        %v3707 = vadd.f32 0.0, %v3706
        %v3708 = vpop.f32.mrb[0].mxu0
        %v3709 = vpop.f32.mrb[0].mxu0
        %v3710 = vadd.f32 0.0, %v3709
        %v3711 = vpop.f32.mrb[0].mxu0
        %3712 = vmatprep.mubr.bf16.mxu0 0
        %3713 = vmatmul.mubr.bf16.gmra.mrb[0].mxu0 %v3414
        %v3714 = vpop.f32.mrb[0].mxu0
        %v3715 = vadd.f32 0.0, %v3714
        %v3716 = vpop.f32.mrb[0].mxu0
        %v3717 = vpop.f32.mrb[0].mxu0
        %v3718 = vadd.f32 0.0, %v3717
        %v3719 = vpop.f32.mrb[0].mxu0
        %3720 = vmatprep.mubr.bf16.mxu0 0
        %3721 = vmatmul.mubr.bf16.gmra.mrb[0].mxu0 %v3417
        %v3722 = vpop.f32.mrb[0].mxu0
        %v3723 = vadd.f32 0.0, %v3722
        %v3724 = vpop.f32.mrb[0].mxu0
        %v3725 = vpop.f32.mrb[0].mxu0
        %v3726 = vadd.f32 0.0, %v3725
        %v3727 = vpop.f32.mrb[0].mxu0
        %3728 = vmatprep.mubr.bf16.mxu0 0
        %3729 = vmatmul.mubr.bf16.gmra.mrb[0].mxu0 %v3420
        %v3730 = vpop.f32.mrb[0].mxu0
        %v3731 = vadd.f32 0.0, %v3730
        %v3732 = vpop.f32.mrb[0].mxu0
        %v3733 = vpop.f32.mrb[0].mxu0
        %v3734 = vadd.f32 0.0, %v3733
        %v3735 = vpop.f32.mrb[0].mxu0
        %3736 = vmatprep.mubr.bf16.mxu0 0
        %3737 = vmatmul.mubr.bf16.gmra.mrb[0].mxu0 %v3423
        %v3738 = vpop.f32.mrb[0].mxu0
        %v3739 = vadd.f32 0.0, %v3738
        %v3740 = vpop.f32.mrb[0].mxu0
        %v3741 = vpop.f32.mrb[0].mxu0
        %v3742 = vadd.f32 0.0, %v3741
        %v3743 = vpop.f32.mrb[0].mxu0
        %3744 = vmatprep.mubr.bf16.mxu0 0
        %3745 = vmatmul.mubr.bf16.gmra.mrb[0].mxu0 %v3426
        %v3746 = vpop.f32.mrb[0].mxu0
        %v3747 = vadd.f32 0.0, %v3746
        %v3748 = vpop.f32.mrb[0].mxu0
        %v3749 = vpop.f32.mrb[0].mxu0
        %v3750 = vadd.f32 0.0, %v3749
        %v3751 = vpop.f32.mrb[0].mxu0
        %3752 = vmatprep.mubr.bf16.mxu0 0
        %3753 = vmatmul.mubr.bf16.gmra.mrb[0].mxu0 %v3429
        %v3754 = vpop.f32.mrb[0].mxu0
        %v3755 = vadd.f32 0.0, %v3754
        %v3756 = vpop.f32.mrb[0].mxu0
        %v3757 = vpop.f32.mrb[0].mxu0
        %v3758 = vadd.f32 0.0, %v3757
        %v3759 = vpop.f32.mrb[0].mxu0
        %3760 = vmatprep.mubr.bf16.mxu0 0
        %3761 = vmatmul.mubr.bf16.gmra.mrb[0].mxu0 %v3432
        %v3762 = vpop.f32.mrb[0].mxu0
        %v3763 = vadd.f32 0.0, %v3762
        %v3764 = vpop.f32.mrb[0].mxu0
        %v3765 = vpop.f32.mrb[0].mxu0
        %v3766 = vadd.f32 0.0, %v3765
        %v3767 = vpop.f32.mrb[0].mxu0
        %3768 = vmatprep.mubr.bf16.mxu0 0
        %3769 = vmatmul.mubr.bf16.gmra.mrb[0].mxu0 %v3435
        %v3770 = vpop.f32.mrb[0].mxu0
        %v3771 = vadd.f32 0.0, %v3770
        %v3772 = vpop.f32.mrb[0].mxu0
        %v3773 = vpop.f32.mrb[0].mxu0
        %v3774 = vadd.f32 0.0, %v3773
        %v3775 = vpop.f32.mrb[0].mxu0
        %3776 = vmatprep.mubr.bf16.mxu0 0
        %3777 = vmatmul.mubr.bf16.gmra.mrb[0].mxu0 %v3438
        %v3778 = vpop.f32.mrb[0].mxu0
        %v3779 = vadd.f32 0.0, %v3778
        %v3780 = vpop.f32.mrb[0].mxu0
        %v3781 = vpop.f32.mrb[0].mxu0
        %v3782 = vadd.f32 0.0, %v3781
        %v3783 = vpop.f32.mrb[0].mxu0
        %3784 = vmatprep.mubr.bf16.mxu0 0
        %3785 = vmatmul.mubr.bf16.gmra.mrb[0].mxu0 %v3441
        %v3786 = vpop.f32.mrb[0].mxu0
        %v3787 = vadd.f32 0.0, %v3786
        %v3788 = vpop.f32.mrb[0].mxu0
        %v3789 = vpop.f32.mrb[0].mxu0
        %v3790 = vadd.f32 0.0, %v3789
        %v3791 = vpop.f32.mrb[0].mxu0
        %3792 = vmatprep.mubr.bf16.mxu0 0
        %3793 = vmatmul.mubr.bf16.gmra.mrb[0].mxu0 %v3444
        %v3794 = vpop.f32.mrb[0].mxu0
        %v3795 = vadd.f32 0.0, %v3794
        %v3796 = vpop.f32.mrb[0].mxu0
        %v3797 = vpop.f32.mrb[0].mxu0
        %v3798 = vadd.f32 0.0, %v3797
        %v3799 = vpop.f32.mrb[0].mxu0
        %3800 = vmatprep.mubr.bf16.mxu0 0
        %3801 = vmatmul.mubr.bf16.gmra.mrb[0].mxu0 %v3643
        %v3802 = vpop.f32.mrb[0].mxu0
        %v3803 = vadd.f32 0.0, %v3802
        %v3804 = vpop.f32.mrb[0].mxu0
        %v3805 = vpop.f32.mrb[0].mxu0
        %v3806 = vadd.f32 0.0, %v3805
        %v3807 = vpop.f32.mrb[0].mxu0
        %3808 = vdwg.mxu0
        %v3809 = vadd.f32 %v3610, %v3683
        %v3810 = vadd.f32 %v3611, %v3686
        %v3811 = vadd.f32 %v3612, %v3691
        %v3812 = vadd.f32 %v3613, %v3694
        %v3813 = vadd.f32 %v3614, %v3699
        %v3814 = vadd.f32 %v3615, %v3702
        %v3815 = vadd.f32 %v3616, %v3707
        %v3816 = vadd.f32 %v3617, %v3710
        %v3817 = vadd.f32 %v3618, %v3715
        %v3818 = vadd.f32 %v3619, %v3718
        %v3819 = vadd.f32 %v3620, %v3723
        %v3820 = vadd.f32 %v3621, %v3726
        %v3821 = vadd.f32 %v3622, %v3731
        %v3822 = vadd.f32 %v3623, %v3734
        %v3823 = vadd.f32 %v3624, %v3739
        %v3824 = vadd.f32 %v3625, %v3742
        %v3825 = vadd.f32 %v3626, %v3747
        %v3826 = vadd.f32 %v3627, %v3750
        %v3827 = vadd.f32 %v3628, %v3755
        %v3828 = vadd.f32 %v3629, %v3758
        %v3829 = vadd.f32 %v3630, %v3763
        %v3830 = vadd.f32 %v3631, %v3766
        %v3831 = vadd.f32 %v3632, %v3771
        %v3832 = vadd.f32 %v3633, %v3774
        %v3833 = vadd.f32 %v3634, %v3779
        %v3834 = vadd.f32 %v3635, %v3782
        %v3835 = vadd.f32 %v3636, %v3787
        %v3836 = vadd.f32 %v3637, %v3790
        %v3837 = vadd.f32 %v3638, %v3795
        %v3838 = vadd.f32 %v3639, %v3798
        %v3839 = vadd.f32 %v3640, %v3803
        %v3840 = vadd.f32 %v3641, %v3806
        %v3842 = vsel %vm286, %v3397, 0
        %v3845 = vsel %vm2813, %v241, 0
        %3847 = vmatprep.subr.bf16.mxu0 0
        %3848 = vmatpush1.bf16.msra.mxu0 %v3845
        %3849 = vmatprep.subr.bf16.mxu0 0
        %3850 = vmatpush1.bf16.msra.mxu0 0
        %3851 = vmatprep.subr.bf16.mxu0 0
        %3852 = vmatpush1.bf16.msra.mxu0 0
        %3853 = vmatprep.subr.bf16.mxu0 0
        %3854 = vmatpush1.bf16.msra.mxu0 0
        %3855 = vmatprep.subr.bf16.mxu0 0
        %3856 = vmatpush1.bf16.msra.mxu0 0
        %3857 = vmatprep.subr.bf16.mxu0 0
        %3858 = vmatpush1.bf16.msra.mxu0 0
        %3859 = vmatprep.subr.bf16.mxu0 0
        %3860 = vmatpush1.bf16.msra.mxu0 0
        %3861 = vmatprep.subr.bf16.mxu0 0
        %3862 = vmatpush1.bf16.msra.mxu0 0
        %3863 = vmatprep.subr.bf16.mxu0 0
        %3864 = vmatpush1.bf16.msra.mxu0 0
        %3865 = vmatprep.subr.bf16.mxu0 0
        %3866 = vmatpush1.bf16.msra.mxu0 0
        %3867 = vmatprep.subr.bf16.mxu0 0
        %3868 = vmatpush1.bf16.msra.mxu0 0
        %3869 = vmatprep.subr.bf16.mxu0 0
        %3870 = vmatpush1.bf16.msra.mxu0 0
        %3871 = vmatprep.subr.bf16.mxu0 0
        %3872 = vmatpush1.bf16.msra.mxu0 0
        %3873 = vmatprep.subr.bf16.mxu0 0
        %3874 = vmatpush1.bf16.msra.mxu0 0
        %3875 = vmatprep.subr.bf16.mxu0 0
        %3876 = vmatpush1.bf16.msra.mxu0 0
        %3877 = vmatprep.subr.bf16.mxu0 0
        %3878 = vmatpush1.bf16.msra.mxu0 0
        %3879 = vmatprep.mubr.bf16.mxu0 0
        %3880 = vmatmul.mubr.bf16.gmra.mrb[0].mxu0 %v3405
        %v3881 = vpop.f32.mrb[0].mxu0
        %v3882 = vadd.f32 0.0, %v3881
        %v3883 = vpop.f32.mrb[0].mxu0
        %v3884 = vpop.f32.mrb[0].mxu0
        %v3885 = vadd.f32 0.0, %v3884
        %v3886 = vpop.f32.mrb[0].mxu0
        %3887 = vmatprep.mubr.bf16.mxu0 0
        %3888 = vmatmul.mubr.bf16.gmra.mrb[0].mxu0 %v3408
        %v3889 = vpop.f32.mrb[0].mxu0
        %v3890 = vadd.f32 0.0, %v3889
        %v3891 = vpop.f32.mrb[0].mxu0
        %v3892 = vpop.f32.mrb[0].mxu0
        %v3893 = vadd.f32 0.0, %v3892
        %v3894 = vpop.f32.mrb[0].mxu0
        %3895 = vmatprep.mubr.bf16.mxu0 0
        %3896 = vmatmul.mubr.bf16.gmra.mrb[0].mxu0 %v3411
        %v3897 = vpop.f32.mrb[0].mxu0
        %v3898 = vadd.f32 0.0, %v3897
        %v3899 = vpop.f32.mrb[0].mxu0
        %v3900 = vpop.f32.mrb[0].mxu0
        %v3901 = vadd.f32 0.0, %v3900
        %v3902 = vpop.f32.mrb[0].mxu0
        %3903 = vmatprep.mubr.bf16.mxu0 0
        %3904 = vmatmul.mubr.bf16.gmra.mrb[0].mxu0 %v3414
        %v3905 = vpop.f32.mrb[0].mxu0
        %v3906 = vadd.f32 0.0, %v3905
        %v3907 = vpop.f32.mrb[0].mxu0
        %v3908 = vpop.f32.mrb[0].mxu0
        %v3909 = vadd.f32 0.0, %v3908
        %v3910 = vpop.f32.mrb[0].mxu0
        %3911 = vmatprep.mubr.bf16.mxu0 0
        %3912 = vmatmul.mubr.bf16.gmra.mrb[0].mxu0 %v3417
        %v3913 = vpop.f32.mrb[0].mxu0
        %v3914 = vadd.f32 0.0, %v3913
        %v3915 = vpop.f32.mrb[0].mxu0
        %v3916 = vpop.f32.mrb[0].mxu0
        %v3917 = vadd.f32 0.0, %v3916
        %v3918 = vpop.f32.mrb[0].mxu0
        %3919 = vmatprep.mubr.bf16.mxu0 0
        %3920 = vmatmul.mubr.bf16.gmra.mrb[0].mxu0 %v3420
        %v3921 = vpop.f32.mrb[0].mxu0
        %v3922 = vadd.f32 0.0, %v3921
        %v3923 = vpop.f32.mrb[0].mxu0
        %v3924 = vpop.f32.mrb[0].mxu0
        %v3925 = vadd.f32 0.0, %v3924
        %v3926 = vpop.f32.mrb[0].mxu0
        %3927 = vmatprep.mubr.bf16.mxu0 0
        %3928 = vmatmul.mubr.bf16.gmra.mrb[0].mxu0 %v3423
        %v3929 = vpop.f32.mrb[0].mxu0
        %v3930 = vadd.f32 0.0, %v3929
        %v3931 = vpop.f32.mrb[0].mxu0
        %v3932 = vpop.f32.mrb[0].mxu0
        %v3933 = vadd.f32 0.0, %v3932
        %v3934 = vpop.f32.mrb[0].mxu0
        %3935 = vmatprep.mubr.bf16.mxu0 0
        %3936 = vmatmul.mubr.bf16.gmra.mrb[0].mxu0 %v3426
        %v3937 = vpop.f32.mrb[0].mxu0
        %v3938 = vadd.f32 0.0, %v3937
        %v3939 = vpop.f32.mrb[0].mxu0
        %v3940 = vpop.f32.mrb[0].mxu0
        %v3941 = vadd.f32 0.0, %v3940
        %v3942 = vpop.f32.mrb[0].mxu0
        %3943 = vmatprep.mubr.bf16.mxu0 0
        %3944 = vmatmul.mubr.bf16.gmra.mrb[0].mxu0 %v3429
        %v3945 = vpop.f32.mrb[0].mxu0
        %v3946 = vadd.f32 0.0, %v3945
        %v3947 = vpop.f32.mrb[0].mxu0
        %v3948 = vpop.f32.mrb[0].mxu0
        %v3949 = vadd.f32 0.0, %v3948
        %v3950 = vpop.f32.mrb[0].mxu0
        %3951 = vmatprep.mubr.bf16.mxu0 0
        %3952 = vmatmul.mubr.bf16.gmra.mrb[0].mxu0 %v3432
        %v3953 = vpop.f32.mrb[0].mxu0
        %v3954 = vadd.f32 0.0, %v3953
        %v3955 = vpop.f32.mrb[0].mxu0
        %v3956 = vpop.f32.mrb[0].mxu0
        %v3957 = vadd.f32 0.0, %v3956
        %v3958 = vpop.f32.mrb[0].mxu0
        %3959 = vmatprep.mubr.bf16.mxu0 0
        %3960 = vmatmul.mubr.bf16.gmra.mrb[0].mxu0 %v3435
        %v3961 = vpop.f32.mrb[0].mxu0
        %v3962 = vadd.f32 0.0, %v3961
        %v3963 = vpop.f32.mrb[0].mxu0
        %v3964 = vpop.f32.mrb[0].mxu0
        %v3965 = vadd.f32 0.0, %v3964
        %v3966 = vpop.f32.mrb[0].mxu0
        %3967 = vmatprep.mubr.bf16.mxu0 0
        %3968 = vmatmul.mubr.bf16.gmra.mrb[0].mxu0 %v3438
        %v3969 = vpop.f32.mrb[0].mxu0
        %v3970 = vadd.f32 0.0, %v3969
        %v3971 = vpop.f32.mrb[0].mxu0
        %v3972 = vpop.f32.mrb[0].mxu0
        %v3973 = vadd.f32 0.0, %v3972
        %v3974 = vpop.f32.mrb[0].mxu0
        %3975 = vmatprep.mubr.bf16.mxu0 0
        %3976 = vmatmul.mubr.bf16.gmra.mrb[0].mxu0 %v3441
        %v3977 = vpop.f32.mrb[0].mxu0
        %v3978 = vadd.f32 0.0, %v3977
        %v3979 = vpop.f32.mrb[0].mxu0
        %v3980 = vpop.f32.mrb[0].mxu0
        %v3981 = vadd.f32 0.0, %v3980
        %v3982 = vpop.f32.mrb[0].mxu0
        %3983 = vmatprep.mubr.bf16.mxu0 0
        %3984 = vmatmul.mubr.bf16.gmra.mrb[0].mxu0 %v3444
        %v3985 = vpop.f32.mrb[0].mxu0
        %v3986 = vadd.f32 0.0, %v3985
        %v3987 = vpop.f32.mrb[0].mxu0
        %v3988 = vpop.f32.mrb[0].mxu0
        %v3989 = vadd.f32 0.0, %v3988
        %v3990 = vpop.f32.mrb[0].mxu0
        %3991 = vmatprep.mubr.bf16.mxu0 0
        %3992 = vmatmul.mubr.bf16.gmra.mrb[0].mxu0 %v3643
        %v3993 = vpop.f32.mrb[0].mxu0
        %v3994 = vadd.f32 0.0, %v3993
        %v3995 = vpop.f32.mrb[0].mxu0
        %v3996 = vpop.f32.mrb[0].mxu0
        %v3997 = vadd.f32 0.0, %v3996
        %v3998 = vpop.f32.mrb[0].mxu0
        %3999 = vmatprep.mubr.bf16.mxu0 0
        %4000 = vmatmul.mubr.bf16.gmra.mrb[0].mxu0 %v3842
        %v4001 = vpop.f32.mrb[0].mxu0
        %v4002 = vadd.f32 0.0, %v4001
        %v4003 = vpop.f32.mrb[0].mxu0
        %v4004 = vpop.f32.mrb[0].mxu0
        %v4005 = vadd.f32 0.0, %v4004
        %v4006 = vpop.f32.mrb[0].mxu0
        %4007 = vdwg.mxu0
        %v4008 = vadd.f32 %v3809, %v3882
        %v4009 = vadd.f32 %v3810, %v3885
        %v4010 = vadd.f32 %v3811, %v3890
        %v4011 = vadd.f32 %v3812, %v3893
        %v4012 = vadd.f32 %v3813, %v3898
        %v4013 = vadd.f32 %v3814, %v3901
        %v4014 = vadd.f32 %v3815, %v3906
        %v4015 = vadd.f32 %v3816, %v3909
        %v4016 = vadd.f32 %v3817, %v3914
        %v4017 = vadd.f32 %v3818, %v3917
        %v4018 = vadd.f32 %v3819, %v3922
        %v4019 = vadd.f32 %v3820, %v3925
        %v4020 = vadd.f32 %v3821, %v3930
        %v4021 = vadd.f32 %v3822, %v3933
        %v4022 = vadd.f32 %v3823, %v3938
        %v4023 = vadd.f32 %v3824, %v3941
        %v4024 = vadd.f32 %v3825, %v3946
        %v4025 = vadd.f32 %v3826, %v3949
        %v4026 = vadd.f32 %v3827, %v3954
        %v4027 = vadd.f32 %v3828, %v3957
        %v4028 = vadd.f32 %v3829, %v3962
        %v4029 = vadd.f32 %v3830, %v3965
        %v4030 = vadd.f32 %v3831, %v3970
        %v4031 = vadd.f32 %v3832, %v3973
        %v4032 = vadd.f32 %v3833, %v3978
        %v4033 = vadd.f32 %v3834, %v3981
        %v4034 = vadd.f32 %v3835, %v3986
        %v4035 = vadd.f32 %v3836, %v3989
        %v4036 = vadd.f32 %v3837, %v3994
        %v4037 = vadd.f32 %v3838, %v3997
        %v4038 = vadd.f32 %v3839, %v4002
        %v4039 = vadd.f32 %v3840, %v4005
        %v4040 = vld [vmem:[#allocation3 + $0x2] sm:$0xff]
        %v4041 = vld [vmem:[#allocation3 + $0xa] sm:$0xff]
        %v4042 = vld [vmem:[#allocation3 + $0x1a] sm:$0xff]
        %v4043 = vld [vmem:[#allocation3 + $0x22] sm:$0xff]
        %v4044 = vld [vmem:[#allocation3 + $0x32] sm:$0xff]
        %v4045 = vld [vmem:[#allocation3 + $0x3a] sm:$0xff]
        %v4046 = vld [vmem:[#allocation3 + $0x4a] sm:$0xff]
        %v4047 = vld [vmem:[#allocation3 + $0x52] sm:$0xff]
        %v4048 = vld [vmem:[#allocation3 + $0x62] sm:$0xff]
        %v4049 = vld [vmem:[#allocation3 + $0x6a] sm:$0xff]
        %v4050 = vld [vmem:[#allocation3 + $0x7a] sm:$0xff]
        %v4051 = vld [vmem:[#allocation3 + $0x82] sm:$0xff]
        %v4052 = vld [vmem:[#allocation3 + $0x92] sm:$0xff]
        %v4053 = vld [vmem:[#allocation3 + $0x9a] sm:$0xff]
        %v4054 = vld [vmem:[#allocation3 + $0xaa] sm:$0xff]
        %v4055 = vld [vmem:[#allocation3 + $0xb2] sm:$0xff]
        %v4056 = vld [vmem:[#allocation3 + $0xc2] sm:$0xff]
        %v4057 = vld [vmem:[#allocation3 + $0xca] sm:$0xff]
        %v4058 = vld [vmem:[#allocation3 + $0xda] sm:$0xff]
        %v4059 = vld [vmem:[#allocation3 + $0xe2] sm:$0xff]
        %v4060 = vld [vmem:[#allocation3 + $0xf2] sm:$0xff]
        %v4061 = vld [vmem:[#allocation3 + $0xfa] sm:$0xff]
        %v4062 = vld [vmem:[#allocation3 + $0x10a] sm:$0xff]
        %v4063 = vld [vmem:[#allocation3 + $0x112] sm:$0xff]
        %v4064 = vld [vmem:[#allocation3 + $0x122] sm:$0xff]
        %v4065 = vld [vmem:[#allocation3 + $0x12a] sm:$0xff]
        %v4066 = vld [vmem:[#allocation3 + $0x13a] sm:$0xff]
        %v4067 = vld [vmem:[#allocation3 + $0x142] sm:$0xff]
        %v4068 = vld [vmem:[#allocation3 + $0x152] sm:$0xff]
        %v4069 = vld [vmem:[#allocation3 + $0x15a] sm:$0xff]
        %v4070 = vld [vmem:[#allocation3 + $0x16a] sm:$0xff]
        %v4071 = vld [vmem:[#allocation3 + $0x172] sm:$0xff]
        %v4072 = vld [vmem:[#allocation3 + $0x182] sm:$0xff]
        %v4073 = vld [vmem:[#allocation3 + $0x18a] sm:$0xff]
        %v4074 = vld [vmem:[#allocation3 + $0x19a] sm:$0xff]
        %v4075 = vld [vmem:[#allocation3 + $0x1a2] sm:$0xff]
        %v4076 = vpack.c.bf16 %v4041, %v4040
        %v4077 = vpack.c.bf16 %v4043, %v4042
        %v4078 = vpack.c.bf16 %v4045, %v4044
        %v4079 = vpack.c.bf16 %v4047, %v4046
        %v4080 = vpack.c.bf16 %v4049, %v4048
        %v4081 = vpack.c.bf16 %v4051, %v4050
        %v4082 = vpack.c.bf16 %v4053, %v4052
        %v4083 = vpack.c.bf16 %v4055, %v4054
        %v4084 = vpack.c.bf16 %v4057, %v4056
        %v4085 = vpack.c.bf16 %v4059, %v4058
        %v4086 = vpack.c.bf16 %v4061, %v4060
        %v4087 = vpack.c.bf16 %v4063, %v4062
        %v4088 = vpack.c.bf16 %v4065, %v4064
        %v4089 = vpack.c.bf16 %v4067, %v4066
        %v4090 = vpack.c.bf16 %v4069, %v4068
        %v4091 = vpack.c.bf16 %v4071, %v4070
        %v4092 = vpack.c.bf16 %v4073, %v4072
        %v4093 = vpack.c.bf16 %v4075, %v4074
        %v4095 = vsel %vm286, %v4076, 0
        %v4098 = vsel %vm286, %v4077, 0
        %v4101 = vsel %vm286, %v4078, 0
        %v4104 = vsel %vm286, %v4079, 0
        %v4107 = vsel %vm286, %v4080, 0
        %v4110 = vsel %vm286, %v4081, 0
        %v4113 = vsel %vm286, %v4082, 0
        %v4116 = vsel %vm286, %v4083, 0
        %v4119 = vsel %vm286, %v4084, 0
        %v4122 = vsel %vm286, %v4085, 0
        %v4125 = vsel %vm286, %v4086, 0
        %v4128 = vsel %vm286, %v4087, 0
        %v4131 = vsel %vm286, %v4088, 0
        %v4134 = vsel %vm286, %v4089, 0
        %v4137 = vsel %vm286, %v4090, 0
        %v4140 = vsel %vm286, %v4091, 0
        %v4143 = vsel %vm2813, %v236, 0
        %4145 = vmatprep.subr.bf16.mxu0 0
        %4146 = vmatpush1.bf16.msra.mxu0 %v4143
        %4147 = vmatprep.subr.bf16.mxu0 0
        %4148 = vmatpush1.bf16.msra.mxu0 0
        %4149 = vmatprep.subr.bf16.mxu0 0
        %4150 = vmatpush1.bf16.msra.mxu0 0
        %4151 = vmatprep.subr.bf16.mxu0 0
        %4152 = vmatpush1.bf16.msra.mxu0 0
        %4153 = vmatprep.subr.bf16.mxu0 0
        %4154 = vmatpush1.bf16.msra.mxu0 0
        %4155 = vmatprep.subr.bf16.mxu0 0
        %4156 = vmatpush1.bf16.msra.mxu0 0
        %4157 = vmatprep.subr.bf16.mxu0 0
        %4158 = vmatpush1.bf16.msra.mxu0 0
        %4159 = vmatprep.subr.bf16.mxu0 0
        %4160 = vmatpush1.bf16.msra.mxu0 0
        %4161 = vmatprep.subr.bf16.mxu0 0
        %4162 = vmatpush1.bf16.msra.mxu0 0
        %4163 = vmatprep.subr.bf16.mxu0 0
        %4164 = vmatpush1.bf16.msra.mxu0 0
        %4165 = vmatprep.subr.bf16.mxu0 0
        %4166 = vmatpush1.bf16.msra.mxu0 0
        %4167 = vmatprep.subr.bf16.mxu0 0
        %4168 = vmatpush1.bf16.msra.mxu0 0
        %4169 = vmatprep.subr.bf16.mxu0 0
        %4170 = vmatpush1.bf16.msra.mxu0 0
        %4171 = vmatprep.subr.bf16.mxu0 0
        %4172 = vmatpush1.bf16.msra.mxu0 0
        %4173 = vmatprep.subr.bf16.mxu0 0
        %4174 = vmatpush1.bf16.msra.mxu0 0
        %4175 = vmatprep.subr.bf16.mxu0 0
        %4176 = vmatpush1.bf16.msra.mxu0 0
        %4177 = vmatprep.mubr.bf16.mxu0 0
        %4178 = vmatmul.mubr.bf16.gmra.mrb[0].mxu0 %v4095
        %v4179 = vpop.f32.mrb[0].mxu0
        %v4180 = vadd.f32 0.0, %v4179
        %v4181 = vpop.f32.mrb[0].mxu0
        %v4182 = vpop.f32.mrb[0].mxu0
        %v4183 = vadd.f32 0.0, %v4182
        %v4184 = vpop.f32.mrb[0].mxu0
        %4185 = vmatprep.mubr.bf16.mxu0 0
        %4186 = vmatmul.mubr.bf16.gmra.mrb[0].mxu0 %v4098
        %v4187 = vpop.f32.mrb[0].mxu0
        %v4188 = vadd.f32 0.0, %v4187
        %v4189 = vpop.f32.mrb[0].mxu0
        %v4190 = vpop.f32.mrb[0].mxu0
        %v4191 = vadd.f32 0.0, %v4190
        %v4192 = vpop.f32.mrb[0].mxu0
        %4193 = vmatprep.mubr.bf16.mxu0 0
        %4194 = vmatmul.mubr.bf16.gmra.mrb[0].mxu0 %v4101
        %v4195 = vpop.f32.mrb[0].mxu0
        %v4196 = vadd.f32 0.0, %v4195
        %v4197 = vpop.f32.mrb[0].mxu0
        %v4198 = vpop.f32.mrb[0].mxu0
        %v4199 = vadd.f32 0.0, %v4198
        %v4200 = vpop.f32.mrb[0].mxu0
        %4201 = vmatprep.mubr.bf16.mxu0 0
        %4202 = vmatmul.mubr.bf16.gmra.mrb[0].mxu0 %v4104
        %v4203 = vpop.f32.mrb[0].mxu0
        %v4204 = vadd.f32 0.0, %v4203
        %v4205 = vpop.f32.mrb[0].mxu0
        %v4206 = vpop.f32.mrb[0].mxu0
        %v4207 = vadd.f32 0.0, %v4206
        %v4208 = vpop.f32.mrb[0].mxu0
        %4209 = vmatprep.mubr.bf16.mxu0 0
        %4210 = vmatmul.mubr.bf16.gmra.mrb[0].mxu0 %v4107
        %v4211 = vpop.f32.mrb[0].mxu0
        %v4212 = vadd.f32 0.0, %v4211
        %v4213 = vpop.f32.mrb[0].mxu0
        %v4214 = vpop.f32.mrb[0].mxu0
        %v4215 = vadd.f32 0.0, %v4214
        %v4216 = vpop.f32.mrb[0].mxu0
        %4217 = vmatprep.mubr.bf16.mxu0 0
        %4218 = vmatmul.mubr.bf16.gmra.mrb[0].mxu0 %v4110
        %v4219 = vpop.f32.mrb[0].mxu0
        %v4220 = vadd.f32 0.0, %v4219
        %v4221 = vpop.f32.mrb[0].mxu0
        %v4222 = vpop.f32.mrb[0].mxu0
        %v4223 = vadd.f32 0.0, %v4222
        %v4224 = vpop.f32.mrb[0].mxu0
        %4225 = vmatprep.mubr.bf16.mxu0 0
        %4226 = vmatmul.mubr.bf16.gmra.mrb[0].mxu0 %v4113
        %v4227 = vpop.f32.mrb[0].mxu0
        %v4228 = vadd.f32 0.0, %v4227
        %v4229 = vpop.f32.mrb[0].mxu0
        %v4230 = vpop.f32.mrb[0].mxu0
        %v4231 = vadd.f32 0.0, %v4230
        %v4232 = vpop.f32.mrb[0].mxu0
        %4233 = vmatprep.mubr.bf16.mxu0 0
        %4234 = vmatmul.mubr.bf16.gmra.mrb[0].mxu0 %v4116
        %v4235 = vpop.f32.mrb[0].mxu0
        %v4236 = vadd.f32 0.0, %v4235
        %v4237 = vpop.f32.mrb[0].mxu0
        %v4238 = vpop.f32.mrb[0].mxu0
        %v4239 = vadd.f32 0.0, %v4238
        %v4240 = vpop.f32.mrb[0].mxu0
        %4241 = vmatprep.mubr.bf16.mxu0 0
        %4242 = vmatmul.mubr.bf16.gmra.mrb[0].mxu0 %v4119
        %v4243 = vpop.f32.mrb[0].mxu0
        %v4244 = vadd.f32 0.0, %v4243
        %v4245 = vpop.f32.mrb[0].mxu0
        %v4246 = vpop.f32.mrb[0].mxu0
        %v4247 = vadd.f32 0.0, %v4246
        %v4248 = vpop.f32.mrb[0].mxu0
        %4249 = vmatprep.mubr.bf16.mxu0 0
        %4250 = vmatmul.mubr.bf16.gmra.mrb[0].mxu0 %v4122
        %v4251 = vpop.f32.mrb[0].mxu0
        %v4252 = vadd.f32 0.0, %v4251
        %v4253 = vpop.f32.mrb[0].mxu0
        %v4254 = vpop.f32.mrb[0].mxu0
        %v4255 = vadd.f32 0.0, %v4254
        %v4256 = vpop.f32.mrb[0].mxu0
        %4257 = vmatprep.mubr.bf16.mxu0 0
        %4258 = vmatmul.mubr.bf16.gmra.mrb[0].mxu0 %v4125
        %v4259 = vpop.f32.mrb[0].mxu0
        %v4260 = vadd.f32 0.0, %v4259
        %v4261 = vpop.f32.mrb[0].mxu0
        %v4262 = vpop.f32.mrb[0].mxu0
        %v4263 = vadd.f32 0.0, %v4262
        %v4264 = vpop.f32.mrb[0].mxu0
        %4265 = vmatprep.mubr.bf16.mxu0 0
        %4266 = vmatmul.mubr.bf16.gmra.mrb[0].mxu0 %v4128
        %v4267 = vpop.f32.mrb[0].mxu0
        %v4268 = vadd.f32 0.0, %v4267
        %v4269 = vpop.f32.mrb[0].mxu0
        %v4270 = vpop.f32.mrb[0].mxu0
        %v4271 = vadd.f32 0.0, %v4270
        %v4272 = vpop.f32.mrb[0].mxu0
        %4273 = vmatprep.mubr.bf16.mxu0 0
        %4274 = vmatmul.mubr.bf16.gmra.mrb[0].mxu0 %v4131
        %v4275 = vpop.f32.mrb[0].mxu0
        %v4276 = vadd.f32 0.0, %v4275
        %v4277 = vpop.f32.mrb[0].mxu0
        %v4278 = vpop.f32.mrb[0].mxu0
        %v4279 = vadd.f32 0.0, %v4278
        %v4280 = vpop.f32.mrb[0].mxu0
        %4281 = vmatprep.mubr.bf16.mxu0 0
        %4282 = vmatmul.mubr.bf16.gmra.mrb[0].mxu0 %v4134
        %v4283 = vpop.f32.mrb[0].mxu0
        %v4284 = vadd.f32 0.0, %v4283
        %v4285 = vpop.f32.mrb[0].mxu0
        %v4286 = vpop.f32.mrb[0].mxu0
        %v4287 = vadd.f32 0.0, %v4286
        %v4288 = vpop.f32.mrb[0].mxu0
        %4289 = vmatprep.mubr.bf16.mxu0 0
        %4290 = vmatmul.mubr.bf16.gmra.mrb[0].mxu0 %v4137
        %v4291 = vpop.f32.mrb[0].mxu0
        %v4292 = vadd.f32 0.0, %v4291
        %v4293 = vpop.f32.mrb[0].mxu0
        %v4294 = vpop.f32.mrb[0].mxu0
        %v4295 = vadd.f32 0.0, %v4294
        %v4296 = vpop.f32.mrb[0].mxu0
        %4297 = vmatprep.mubr.bf16.mxu0 0
        %4298 = vmatmul.mubr.bf16.gmra.mrb[0].mxu0 %v4140
        %v4299 = vpop.f32.mrb[0].mxu0
        %v4300 = vadd.f32 0.0, %v4299
        %v4301 = vpop.f32.mrb[0].mxu0
        %v4302 = vpop.f32.mrb[0].mxu0
        %v4303 = vadd.f32 0.0, %v4302
        %v4304 = vpop.f32.mrb[0].mxu0
        %4305 = vdwg.mxu0
        %v4306 = vadd.f32 %v4008, %v4180
        %v4307 = vadd.f32 %v4009, %v4183
        %v4308 = vadd.f32 %v4010, %v4188
        %v4309 = vadd.f32 %v4011, %v4191
        %v4310 = vadd.f32 %v4012, %v4196
        %v4311 = vadd.f32 %v4013, %v4199
        %v4312 = vadd.f32 %v4014, %v4204
        %v4313 = vadd.f32 %v4015, %v4207
        %v4314 = vadd.f32 %v4016, %v4212
        %v4315 = vadd.f32 %v4017, %v4215
        %v4316 = vadd.f32 %v4018, %v4220
        %v4317 = vadd.f32 %v4019, %v4223
        %v4318 = vadd.f32 %v4020, %v4228
        %v4319 = vadd.f32 %v4021, %v4231
        %v4320 = vadd.f32 %v4022, %v4236
        %v4321 = vadd.f32 %v4023, %v4239
        %v4322 = vadd.f32 %v4024, %v4244
        %v4323 = vadd.f32 %v4025, %v4247
        %v4324 = vadd.f32 %v4026, %v4252
        %v4325 = vadd.f32 %v4027, %v4255
        %v4326 = vadd.f32 %v4028, %v4260
        %v4327 = vadd.f32 %v4029, %v4263
        %v4328 = vadd.f32 %v4030, %v4268
        %v4329 = vadd.f32 %v4031, %v4271
        %v4330 = vadd.f32 %v4032, %v4276
        %v4331 = vadd.f32 %v4033, %v4279
        %v4332 = vadd.f32 %v4034, %v4284
        %v4333 = vadd.f32 %v4035, %v4287
        %v4334 = vadd.f32 %v4036, %v4292
        %v4335 = vadd.f32 %v4037, %v4295
        %v4336 = vadd.f32 %v4038, %v4300
        %v4337 = vadd.f32 %v4039, %v4303
        %v4339 = vsel %vm286, %v4092, 0
        %v4342 = vsel %vm2813, %v239, 0
        %4344 = vmatprep.subr.bf16.mxu0 0
        %4345 = vmatpush1.bf16.msra.mxu0 %v4342
        %4346 = vmatprep.subr.bf16.mxu0 0
        %4347 = vmatpush1.bf16.msra.mxu0 0
        %4348 = vmatprep.subr.bf16.mxu0 0
        %4349 = vmatpush1.bf16.msra.mxu0 0
        %4350 = vmatprep.subr.bf16.mxu0 0
        %4351 = vmatpush1.bf16.msra.mxu0 0
        %4352 = vmatprep.subr.bf16.mxu0 0
        %4353 = vmatpush1.bf16.msra.mxu0 0
        %4354 = vmatprep.subr.bf16.mxu0 0
        %4355 = vmatpush1.bf16.msra.mxu0 0
        %4356 = vmatprep.subr.bf16.mxu0 0
        %4357 = vmatpush1.bf16.msra.mxu0 0
        %4358 = vmatprep.subr.bf16.mxu0 0
        %4359 = vmatpush1.bf16.msra.mxu0 0
        %4360 = vmatprep.subr.bf16.mxu0 0
        %4361 = vmatpush1.bf16.msra.mxu0 0
        %4362 = vmatprep.subr.bf16.mxu0 0
        %4363 = vmatpush1.bf16.msra.mxu0 0
        %4364 = vmatprep.subr.bf16.mxu0 0
        %4365 = vmatpush1.bf16.msra.mxu0 0
        %4366 = vmatprep.subr.bf16.mxu0 0
        %4367 = vmatpush1.bf16.msra.mxu0 0
        %4368 = vmatprep.subr.bf16.mxu0 0
        %4369 = vmatpush1.bf16.msra.mxu0 0
        %4370 = vmatprep.subr.bf16.mxu0 0
        %4371 = vmatpush1.bf16.msra.mxu0 0
        %4372 = vmatprep.subr.bf16.mxu0 0
        %4373 = vmatpush1.bf16.msra.mxu0 0
        %4374 = vmatprep.subr.bf16.mxu0 0
        %4375 = vmatpush1.bf16.msra.mxu0 0
        %4376 = vmatprep.mubr.bf16.mxu0 0
        %4377 = vmatmul.mubr.bf16.gmra.mrb[0].mxu0 %v4098
        %v4378 = vpop.f32.mrb[0].mxu0
        %v4379 = vadd.f32 0.0, %v4378
        %v4380 = vpop.f32.mrb[0].mxu0
        %v4381 = vpop.f32.mrb[0].mxu0
        %v4382 = vadd.f32 0.0, %v4381
        %v4383 = vpop.f32.mrb[0].mxu0
        %4384 = vmatprep.mubr.bf16.mxu0 0
        %4385 = vmatmul.mubr.bf16.gmra.mrb[0].mxu0 %v4101
        %v4386 = vpop.f32.mrb[0].mxu0
        %v4387 = vadd.f32 0.0, %v4386
        %v4388 = vpop.f32.mrb[0].mxu0
        %v4389 = vpop.f32.mrb[0].mxu0
        %v4390 = vadd.f32 0.0, %v4389
        %v4391 = vpop.f32.mrb[0].mxu0
        %4392 = vmatprep.mubr.bf16.mxu0 0
        %4393 = vmatmul.mubr.bf16.gmra.mrb[0].mxu0 %v4104
        %v4394 = vpop.f32.mrb[0].mxu0
        %v4395 = vadd.f32 0.0, %v4394
        %v4396 = vpop.f32.mrb[0].mxu0
        %v4397 = vpop.f32.mrb[0].mxu0
        %v4398 = vadd.f32 0.0, %v4397
        %v4399 = vpop.f32.mrb[0].mxu0
        %4400 = vmatprep.mubr.bf16.mxu0 0
        %4401 = vmatmul.mubr.bf16.gmra.mrb[0].mxu0 %v4107
        %v4402 = vpop.f32.mrb[0].mxu0
        %v4403 = vadd.f32 0.0, %v4402
        %v4404 = vpop.f32.mrb[0].mxu0
        %v4405 = vpop.f32.mrb[0].mxu0
        %v4406 = vadd.f32 0.0, %v4405
        %v4407 = vpop.f32.mrb[0].mxu0
        %4408 = vmatprep.mubr.bf16.mxu0 0
        %4409 = vmatmul.mubr.bf16.gmra.mrb[0].mxu0 %v4110
        %v4410 = vpop.f32.mrb[0].mxu0
        %v4411 = vadd.f32 0.0, %v4410
        %v4412 = vpop.f32.mrb[0].mxu0
        %v4413 = vpop.f32.mrb[0].mxu0
        %v4414 = vadd.f32 0.0, %v4413
        %v4415 = vpop.f32.mrb[0].mxu0
        %4416 = vmatprep.mubr.bf16.mxu0 0
        %4417 = vmatmul.mubr.bf16.gmra.mrb[0].mxu0 %v4113
        %v4418 = vpop.f32.mrb[0].mxu0
        %v4419 = vadd.f32 0.0, %v4418
        %v4420 = vpop.f32.mrb[0].mxu0
        %v4421 = vpop.f32.mrb[0].mxu0
        %v4422 = vadd.f32 0.0, %v4421
        %v4423 = vpop.f32.mrb[0].mxu0
        %4424 = vmatprep.mubr.bf16.mxu0 0
        %4425 = vmatmul.mubr.bf16.gmra.mrb[0].mxu0 %v4116
        %v4426 = vpop.f32.mrb[0].mxu0
        %v4427 = vadd.f32 0.0, %v4426
        %v4428 = vpop.f32.mrb[0].mxu0
        %v4429 = vpop.f32.mrb[0].mxu0
        %v4430 = vadd.f32 0.0, %v4429
        %v4431 = vpop.f32.mrb[0].mxu0
        %4432 = vmatprep.mubr.bf16.mxu0 0
        %4433 = vmatmul.mubr.bf16.gmra.mrb[0].mxu0 %v4119
        %v4434 = vpop.f32.mrb[0].mxu0
        %v4435 = vadd.f32 0.0, %v4434
        %v4436 = vpop.f32.mrb[0].mxu0
        %v4437 = vpop.f32.mrb[0].mxu0
        %v4438 = vadd.f32 0.0, %v4437
        %v4439 = vpop.f32.mrb[0].mxu0
        %4440 = vmatprep.mubr.bf16.mxu0 0
        %4441 = vmatmul.mubr.bf16.gmra.mrb[0].mxu0 %v4122
        %v4442 = vpop.f32.mrb[0].mxu0
        %v4443 = vadd.f32 0.0, %v4442
        %v4444 = vpop.f32.mrb[0].mxu0
        %v4445 = vpop.f32.mrb[0].mxu0
        %v4446 = vadd.f32 0.0, %v4445
        %v4447 = vpop.f32.mrb[0].mxu0
        %4448 = vmatprep.mubr.bf16.mxu0 0
        %4449 = vmatmul.mubr.bf16.gmra.mrb[0].mxu0 %v4125
        %v4450 = vpop.f32.mrb[0].mxu0
        %v4451 = vadd.f32 0.0, %v4450
        %v4452 = vpop.f32.mrb[0].mxu0
        %v4453 = vpop.f32.mrb[0].mxu0
        %v4454 = vadd.f32 0.0, %v4453
        %v4455 = vpop.f32.mrb[0].mxu0
        %4456 = vmatprep.mubr.bf16.mxu0 0
        %4457 = vmatmul.mubr.bf16.gmra.mrb[0].mxu0 %v4128
        %v4458 = vpop.f32.mrb[0].mxu0
        %v4459 = vadd.f32 0.0, %v4458
        %v4460 = vpop.f32.mrb[0].mxu0
        %v4461 = vpop.f32.mrb[0].mxu0
        %v4462 = vadd.f32 0.0, %v4461
        %v4463 = vpop.f32.mrb[0].mxu0
        %4464 = vmatprep.mubr.bf16.mxu0 0
        %4465 = vmatmul.mubr.bf16.gmra.mrb[0].mxu0 %v4131
        %v4466 = vpop.f32.mrb[0].mxu0
        %v4467 = vadd.f32 0.0, %v4466
        %v4468 = vpop.f32.mrb[0].mxu0
        %v4469 = vpop.f32.mrb[0].mxu0
        %v4470 = vadd.f32 0.0, %v4469
        %v4471 = vpop.f32.mrb[0].mxu0
        %4472 = vmatprep.mubr.bf16.mxu0 0
        %4473 = vmatmul.mubr.bf16.gmra.mrb[0].mxu0 %v4134
        %v4474 = vpop.f32.mrb[0].mxu0
        %v4475 = vadd.f32 0.0, %v4474
        %v4476 = vpop.f32.mrb[0].mxu0
        %v4477 = vpop.f32.mrb[0].mxu0
        %v4478 = vadd.f32 0.0, %v4477
        %v4479 = vpop.f32.mrb[0].mxu0
        %4480 = vmatprep.mubr.bf16.mxu0 0
        %4481 = vmatmul.mubr.bf16.gmra.mrb[0].mxu0 %v4137
        %v4482 = vpop.f32.mrb[0].mxu0
        %v4483 = vadd.f32 0.0, %v4482
        %v4484 = vpop.f32.mrb[0].mxu0
        %v4485 = vpop.f32.mrb[0].mxu0
        %v4486 = vadd.f32 0.0, %v4485
        %v4487 = vpop.f32.mrb[0].mxu0
        %4488 = vmatprep.mubr.bf16.mxu0 0
        %4489 = vmatmul.mubr.bf16.gmra.mrb[0].mxu0 %v4140
        %v4490 = vpop.f32.mrb[0].mxu0
        %v4491 = vadd.f32 0.0, %v4490
        %v4492 = vpop.f32.mrb[0].mxu0
        %v4493 = vpop.f32.mrb[0].mxu0
        %v4494 = vadd.f32 0.0, %v4493
        %v4495 = vpop.f32.mrb[0].mxu0
        %4496 = vmatprep.mubr.bf16.mxu0 0
        %4497 = vmatmul.mubr.bf16.gmra.mrb[0].mxu0 %v4339
        %v4498 = vpop.f32.mrb[0].mxu0
        %v4499 = vadd.f32 0.0, %v4498
        %v4500 = vpop.f32.mrb[0].mxu0
        %v4501 = vpop.f32.mrb[0].mxu0
        %v4502 = vadd.f32 0.0, %v4501
        %v4503 = vpop.f32.mrb[0].mxu0
        %4504 = vdwg.mxu0
        %v4505 = vadd.f32 %v4306, %v4379
        %v4506 = vadd.f32 %v4307, %v4382
        %v4507 = vadd.f32 %v4308, %v4387
        %v4508 = vadd.f32 %v4309, %v4390
        %v4509 = vadd.f32 %v4310, %v4395
        %v4510 = vadd.f32 %v4311, %v4398
        %v4511 = vadd.f32 %v4312, %v4403
        %v4512 = vadd.f32 %v4313, %v4406
        %v4513 = vadd.f32 %v4314, %v4411
        %v4514 = vadd.f32 %v4315, %v4414
        %v4515 = vadd.f32 %v4316, %v4419
        %v4516 = vadd.f32 %v4317, %v4422
        %v4517 = vadd.f32 %v4318, %v4427
        %v4518 = vadd.f32 %v4319, %v4430
        %v4519 = vadd.f32 %v4320, %v4435
        %v4520 = vadd.f32 %v4321, %v4438
        %v4521 = vadd.f32 %v4322, %v4443
        %v4522 = vadd.f32 %v4323, %v4446
        %v4523 = vadd.f32 %v4324, %v4451
        %v4524 = vadd.f32 %v4325, %v4454
        %v4525 = vadd.f32 %v4326, %v4459
        %v4526 = vadd.f32 %v4327, %v4462
        %v4527 = vadd.f32 %v4328, %v4467
        %v4528 = vadd.f32 %v4329, %v4470
        %v4529 = vadd.f32 %v4330, %v4475
        %v4530 = vadd.f32 %v4331, %v4478
        %v4531 = vadd.f32 %v4332, %v4483
        %v4532 = vadd.f32 %v4333, %v4486
        %v4533 = vadd.f32 %v4334, %v4491
        %v4534 = vadd.f32 %v4335, %v4494
        %v4535 = vadd.f32 %v4336, %v4499
        %v4536 = vadd.f32 %v4337, %v4502
        %v4538 = vsel %vm286, %v4093, 0
        %v4541 = vsel %vm2813, %v242, 0
        %4543 = vmatprep.subr.bf16.mxu0 0
        %4544 = vmatpush1.bf16.msra.mxu0 %v4541
        %4545 = vmatprep.subr.bf16.mxu0 0
        %4546 = vmatpush1.bf16.msra.mxu0 0
        %4547 = vmatprep.subr.bf16.mxu0 0
        %4548 = vmatpush1.bf16.msra.mxu0 0
        %4549 = vmatprep.subr.bf16.mxu0 0
        %4550 = vmatpush1.bf16.msra.mxu0 0
        %4551 = vmatprep.subr.bf16.mxu0 0
        %4552 = vmatpush1.bf16.msra.mxu0 0
        %4553 = vmatprep.subr.bf16.mxu0 0
        %4554 = vmatpush1.bf16.msra.mxu0 0
        %4555 = vmatprep.subr.bf16.mxu0 0
        %4556 = vmatpush1.bf16.msra.mxu0 0
        %4557 = vmatprep.subr.bf16.mxu0 0
        %4558 = vmatpush1.bf16.msra.mxu0 0
        %4559 = vmatprep.subr.bf16.mxu0 0
        %4560 = vmatpush1.bf16.msra.mxu0 0
        %4561 = vmatprep.subr.bf16.mxu0 0
        %4562 = vmatpush1.bf16.msra.mxu0 0
        %4563 = vmatprep.subr.bf16.mxu0 0
        %4564 = vmatpush1.bf16.msra.mxu0 0
        %4565 = vmatprep.subr.bf16.mxu0 0
        %4566 = vmatpush1.bf16.msra.mxu0 0
        %4567 = vmatprep.subr.bf16.mxu0 0
        %4568 = vmatpush1.bf16.msra.mxu0 0
        %4569 = vmatprep.subr.bf16.mxu0 0
        %4570 = vmatpush1.bf16.msra.mxu0 0
        %4571 = vmatprep.subr.bf16.mxu0 0
        %4572 = vmatpush1.bf16.msra.mxu0 0
        %4573 = vmatprep.subr.bf16.mxu0 0
        %4574 = vmatpush1.bf16.msra.mxu0 0
        %4575 = vmatprep.mubr.bf16.mxu0 0
        %4576 = vmatmul.mubr.bf16.gmra.mrb[0].mxu0 %v4101
        %v4577 = vpop.f32.mrb[0].mxu0
        %v4578 = vadd.f32 0.0, %v4577
        %v4579 = vpop.f32.mrb[0].mxu0
        %v4580 = vpop.f32.mrb[0].mxu0
        %v4581 = vadd.f32 0.0, %v4580
        %v4582 = vpop.f32.mrb[0].mxu0
        %4583 = vmatprep.mubr.bf16.mxu0 0
        %4584 = vmatmul.mubr.bf16.gmra.mrb[0].mxu0 %v4104
        %v4585 = vpop.f32.mrb[0].mxu0
        %v4586 = vadd.f32 0.0, %v4585
        %v4587 = vpop.f32.mrb[0].mxu0
        %v4588 = vpop.f32.mrb[0].mxu0
        %v4589 = vadd.f32 0.0, %v4588
        %v4590 = vpop.f32.mrb[0].mxu0
        %4591 = vmatprep.mubr.bf16.mxu0 0
        %4592 = vmatmul.mubr.bf16.gmra.mrb[0].mxu0 %v4107
        %v4593 = vpop.f32.mrb[0].mxu0
        %v4594 = vadd.f32 0.0, %v4593
        %v4595 = vpop.f32.mrb[0].mxu0
        %v4596 = vpop.f32.mrb[0].mxu0
        %v4597 = vadd.f32 0.0, %v4596
        %v4598 = vpop.f32.mrb[0].mxu0
        %4599 = vmatprep.mubr.bf16.mxu0 0
        %4600 = vmatmul.mubr.bf16.gmra.mrb[0].mxu0 %v4110
        %v4601 = vpop.f32.mrb[0].mxu0
        %v4602 = vadd.f32 0.0, %v4601
        %v4603 = vpop.f32.mrb[0].mxu0
        %v4604 = vpop.f32.mrb[0].mxu0
        %v4605 = vadd.f32 0.0, %v4604
        %v4606 = vpop.f32.mrb[0].mxu0
        %4607 = vmatprep.mubr.bf16.mxu0 0
        %4608 = vmatmul.mubr.bf16.gmra.mrb[0].mxu0 %v4113
        %v4609 = vpop.f32.mrb[0].mxu0
        %v4610 = vadd.f32 0.0, %v4609
        %v4611 = vpop.f32.mrb[0].mxu0
        %v4612 = vpop.f32.mrb[0].mxu0
        %v4613 = vadd.f32 0.0, %v4612
        %v4614 = vpop.f32.mrb[0].mxu0
        %4615 = vmatprep.mubr.bf16.mxu0 0
        %4616 = vmatmul.mubr.bf16.gmra.mrb[0].mxu0 %v4116
        %v4617 = vpop.f32.mrb[0].mxu0
        %v4618 = vadd.f32 0.0, %v4617
        %v4619 = vpop.f32.mrb[0].mxu0
        %v4620 = vpop.f32.mrb[0].mxu0
        %v4621 = vadd.f32 0.0, %v4620
        %v4622 = vpop.f32.mrb[0].mxu0
        %4623 = vmatprep.mubr.bf16.mxu0 0
        %4624 = vmatmul.mubr.bf16.gmra.mrb[0].mxu0 %v4119
        %v4625 = vpop.f32.mrb[0].mxu0
        %v4626 = vadd.f32 0.0, %v4625
        %v4627 = vpop.f32.mrb[0].mxu0
        %v4628 = vpop.f32.mrb[0].mxu0
        %v4629 = vadd.f32 0.0, %v4628
        %v4630 = vpop.f32.mrb[0].mxu0
        %4631 = vmatprep.mubr.bf16.mxu0 0
        %4632 = vmatmul.mubr.bf16.gmra.mrb[0].mxu0 %v4122
        %v4633 = vpop.f32.mrb[0].mxu0
        %v4634 = vadd.f32 0.0, %v4633
        %v4635 = vpop.f32.mrb[0].mxu0
        %v4636 = vpop.f32.mrb[0].mxu0
        %v4637 = vadd.f32 0.0, %v4636
        %v4638 = vpop.f32.mrb[0].mxu0
        %4639 = vmatprep.mubr.bf16.mxu0 0
        %4640 = vmatmul.mubr.bf16.gmra.mrb[0].mxu0 %v4125
        %v4641 = vpop.f32.mrb[0].mxu0
        %v4642 = vadd.f32 0.0, %v4641
        %v4643 = vpop.f32.mrb[0].mxu0
        %v4644 = vpop.f32.mrb[0].mxu0
        %v4645 = vadd.f32 0.0, %v4644
        %v4646 = vpop.f32.mrb[0].mxu0
        %4647 = vmatprep.mubr.bf16.mxu0 0
        %4648 = vmatmul.mubr.bf16.gmra.mrb[0].mxu0 %v4128
        %v4649 = vpop.f32.mrb[0].mxu0
        %v4650 = vadd.f32 0.0, %v4649
        %v4651 = vpop.f32.mrb[0].mxu0
        %v4652 = vpop.f32.mrb[0].mxu0
        %v4653 = vadd.f32 0.0, %v4652
        %v4654 = vpop.f32.mrb[0].mxu0
        %4655 = vmatprep.mubr.bf16.mxu0 0
        %4656 = vmatmul.mubr.bf16.gmra.mrb[0].mxu0 %v4131
        %v4657 = vpop.f32.mrb[0].mxu0
        %v4658 = vadd.f32 0.0, %v4657
        %v4659 = vpop.f32.mrb[0].mxu0
        %v4660 = vpop.f32.mrb[0].mxu0
        %v4661 = vadd.f32 0.0, %v4660
        %v4662 = vpop.f32.mrb[0].mxu0
        %4663 = vmatprep.mubr.bf16.mxu0 0
        %4664 = vmatmul.mubr.bf16.gmra.mrb[0].mxu0 %v4134
        %v4665 = vpop.f32.mrb[0].mxu0
        %v4666 = vadd.f32 0.0, %v4665
        %v4667 = vpop.f32.mrb[0].mxu0
        %v4668 = vpop.f32.mrb[0].mxu0
        %v4669 = vadd.f32 0.0, %v4668
        %v4670 = vpop.f32.mrb[0].mxu0
        %4671 = vmatprep.mubr.bf16.mxu0 0
        %4672 = vmatmul.mubr.bf16.gmra.mrb[0].mxu0 %v4137
        %v4673 = vpop.f32.mrb[0].mxu0
        %v4674 = vadd.f32 0.0, %v4673
        %v4675 = vpop.f32.mrb[0].mxu0
        %v4676 = vpop.f32.mrb[0].mxu0
        %v4677 = vadd.f32 0.0, %v4676
        %v4678 = vpop.f32.mrb[0].mxu0
        %4679 = vmatprep.mubr.bf16.mxu0 0
        %4680 = vmatmul.mubr.bf16.gmra.mrb[0].mxu0 %v4140
        %v4681 = vpop.f32.mrb[0].mxu0
        %v4682 = vadd.f32 0.0, %v4681
        %v4683 = vpop.f32.mrb[0].mxu0
        %v4684 = vpop.f32.mrb[0].mxu0
        %v4685 = vadd.f32 0.0, %v4684
        %v4686 = vpop.f32.mrb[0].mxu0
        %4687 = vmatprep.mubr.bf16.mxu0 0
        %4688 = vmatmul.mubr.bf16.gmra.mrb[0].mxu0 %v4339
        %v4689 = vpop.f32.mrb[0].mxu0
        %v4690 = vadd.f32 0.0, %v4689
        %v4691 = vpop.f32.mrb[0].mxu0
        %v4692 = vpop.f32.mrb[0].mxu0
        %v4693 = vadd.f32 0.0, %v4692
        %v4694 = vpop.f32.mrb[0].mxu0
        %4695 = vmatprep.mubr.bf16.mxu0 0
        %4696 = vmatmul.mubr.bf16.gmra.mrb[0].mxu0 %v4538
        %v4697 = vpop.f32.mrb[0].mxu0
        %v4698 = vadd.f32 0.0, %v4697
        %v4699 = vpop.f32.mrb[0].mxu0
        %v4700 = vpop.f32.mrb[0].mxu0
        %v4701 = vadd.f32 0.0, %v4700
        %v4702 = vpop.f32.mrb[0].mxu0
        %4703 = vdwg.mxu0
        %v4704 = vadd.f32 %v4505, %v4578
        %v4705 = vadd.f32 %v4506, %v4581
        %v4706 = vadd.f32 %v4507, %v4586
        %v4707 = vadd.f32 %v4508, %v4589
        %v4708 = vadd.f32 %v4509, %v4594
        %v4709 = vadd.f32 %v4510, %v4597
        %v4710 = vadd.f32 %v4511, %v4602
        %v4711 = vadd.f32 %v4512, %v4605
        %v4712 = vadd.f32 %v4513, %v4610
        %v4713 = vadd.f32 %v4514, %v4613
        %v4714 = vadd.f32 %v4515, %v4618
        %v4715 = vadd.f32 %v4516, %v4621
        %v4716 = vadd.f32 %v4517, %v4626
        %v4717 = vadd.f32 %v4518, %v4629
        %v4718 = vadd.f32 %v4519, %v4634
        %v4719 = vadd.f32 %v4520, %v4637
        %v4720 = vadd.f32 %v4521, %v4642
        %v4721 = vadd.f32 %v4522, %v4645
        %v4722 = vadd.f32 %v4523, %v4650
        %v4723 = vadd.f32 %v4524, %v4653
        %v4724 = vadd.f32 %v4525, %v4658
        %v4725 = vadd.f32 %v4526, %v4661
        %v4726 = vadd.f32 %v4527, %v4666
        %v4727 = vadd.f32 %v4528, %v4669
        %v4728 = vadd.f32 %v4529, %v4674
        %v4729 = vadd.f32 %v4530, %v4677
        %v4730 = vadd.f32 %v4531, %v4682
        %v4731 = vadd.f32 %v4532, %v4685
        %v4732 = vadd.f32 %v4533, %v4690
        %v4733 = vadd.f32 %v4534, %v4693
        %v4734 = vadd.f32 %v4535, %v4698
        %v4735 = vadd.f32 %v4536, %v4701
        %v4736 = vlaneseq
        %v4737 = vshrl.u32 %v4736, 7
        %v4738 = vsub.s32 2, %v4737
        %v4739 = vrot.slane %v224, %v4738
        %v4740 = vmul.f32 %v4704, %v4739
        %v4741 = vmul.f32 %v4705, %v4739
        %v4742 = vmul.f32 %v4706, %v4739
        %v4743 = vmul.f32 %v4707, %v4739
        %v4744 = vmul.f32 %v4708, %v4739
        %v4745 = vmul.f32 %v4709, %v4739
        %v4746 = vmul.f32 %v4710, %v4739
        %v4747 = vmul.f32 %v4711, %v4739
        %v4748 = vmul.f32 %v4712, %v4739
        %v4749 = vmul.f32 %v4713, %v4739
        %v4750 = vmul.f32 %v4714, %v4739
        %v4751 = vmul.f32 %v4715, %v4739
        %v4752 = vmul.f32 %v4716, %v4739
        %v4753 = vmul.f32 %v4717, %v4739
        %v4754 = vmul.f32 %v4718, %v4739
        %v4755 = vmul.f32 %v4719, %v4739
        %v4756 = vmul.f32 %v4720, %v4739
        %v4757 = vmul.f32 %v4721, %v4739
        %v4758 = vmul.f32 %v4722, %v4739
        %v4759 = vmul.f32 %v4723, %v4739
        %v4760 = vmul.f32 %v4724, %v4739
        %v4761 = vmul.f32 %v4725, %v4739
        %v4762 = vmul.f32 %v4726, %v4739
        %v4763 = vmul.f32 %v4727, %v4739
        %v4764 = vmul.f32 %v4728, %v4739
        %v4765 = vmul.f32 %v4729, %v4739
        %v4766 = vmul.f32 %v4730, %v4739
        %v4767 = vmul.f32 %v4731, %v4739
        %v4768 = vmul.f32 %v4732, %v4739
        %v4769 = vmul.f32 %v4733, %v4739
        %v4770 = vmul.f32 %v4734, %v4739
        %v4771 = vmul.f32 %v4735, %v4739
        %v4772 = vlaneseq
        %v4773 = vshrl.u32 %v4772, 7
        %v4774 = vsub.s32 3, %v4773
        %v4775 = vrot.slane %v224, %v4774
        %v4776 = vadd.f32 %v4740, %v4775
        %v4777 = vadd.f32 %v4741, %v4775
        %v4778 = vadd.f32 %v4742, %v4775
        %v4779 = vadd.f32 %v4743, %v4775
        %v4780 = vadd.f32 %v4744, %v4775
        %v4781 = vadd.f32 %v4745, %v4775
        %v4782 = vadd.f32 %v4746, %v4775
        %v4783 = vadd.f32 %v4747, %v4775
        %v4784 = vadd.f32 %v4748, %v4775
        %v4785 = vadd.f32 %v4749, %v4775
        %v4786 = vadd.f32 %v4750, %v4775
        %v4787 = vadd.f32 %v4751, %v4775
        %v4788 = vadd.f32 %v4752, %v4775
        %v4789 = vadd.f32 %v4753, %v4775
        %v4790 = vadd.f32 %v4754, %v4775
        %v4791 = vadd.f32 %v4755, %v4775
        %v4792 = vadd.f32 %v4756, %v4775
        %v4793 = vadd.f32 %v4757, %v4775
        %v4794 = vadd.f32 %v4758, %v4775
        %v4795 = vadd.f32 %v4759, %v4775
        %v4796 = vadd.f32 %v4760, %v4775
        %v4797 = vadd.f32 %v4761, %v4775
        %v4798 = vadd.f32 %v4762, %v4775
        %v4799 = vadd.f32 %v4763, %v4775
        %v4800 = vadd.f32 %v4764, %v4775
        %v4801 = vadd.f32 %v4765, %v4775
        %v4802 = vadd.f32 %v4766, %v4775
        %v4803 = vadd.f32 %v4767, %v4775
        %v4804 = vadd.f32 %v4768, %v4775
        %v4805 = vadd.f32 %v4769, %v4775
        %v4806 = vadd.f32 %v4770, %v4775
        %v4807 = vadd.f32 %v4771, %v4775
        %4808 = vst.msk [vmem:[%s295 + $0x1] sm:$0xff] %vm286, %v4776
        %4809 = vst.msk [vmem:[%s295 + $0x9] sm:$0xff] %vm286, %v4777
        %4810 = vst.msk [vmem:[%s295 + $0x19] sm:$0xff] %vm286, %v4778
        %4811 = vst.msk [vmem:[%s295 + $0x21] sm:$0xff] %vm286, %v4779
        %4812 = vst.msk [vmem:[%s295 + $0x31] sm:$0xff] %vm286, %v4780
        %4813 = vst.msk [vmem:[%s295 + $0x39] sm:$0xff] %vm286, %v4781
        %4814 = vst.msk [vmem:[%s295 + $0x49] sm:$0xff] %vm286, %v4782
        %4815 = vst.msk [vmem:[%s295 + $0x51] sm:$0xff] %vm286, %v4783
        %4816 = vst.msk [vmem:[%s295 + $0x61] sm:$0xff] %vm286, %v4784
        %4817 = vst.msk [vmem:[%s295 + $0x69] sm:$0xff] %vm286, %v4785
        %4818 = vst.msk [vmem:[%s295 + $0x79] sm:$0xff] %vm286, %v4786
        %4819 = vst.msk [vmem:[%s295 + $0x81] sm:$0xff] %vm286, %v4787
        %4820 = vst.msk [vmem:[%s295 + $0x91] sm:$0xff] %vm286, %v4788
        %4821 = vst.msk [vmem:[%s295 + $0x99] sm:$0xff] %vm286, %v4789
        %4822 = vst.msk [vmem:[%s295 + $0xa9] sm:$0xff] %vm286, %v4790
        %4823 = vst.msk [vmem:[%s295 + $0xb1] sm:$0xff] %vm286, %v4791
        %4824 = vst.msk [vmem:[%s295 + $0xc1] sm:$0xff] %vm286, %v4792
        %4825 = vst.msk [vmem:[%s295 + $0xc9] sm:$0xff] %vm286, %v4793
        %4826 = vst.msk [vmem:[%s295 + $0xd9] sm:$0xff] %vm286, %v4794
        %4827 = vst.msk [vmem:[%s295 + $0xe1] sm:$0xff] %vm286, %v4795
        %4828 = vst.msk [vmem:[%s295 + $0xf1] sm:$0xff] %vm286, %v4796
        %4829 = vst.msk [vmem:[%s295 + $0xf9] sm:$0xff] %vm286, %v4797
        %4830 = vst.msk [vmem:[%s295 + $0x109] sm:$0xff] %vm286, %v4798
        %4831 = vst.msk [vmem:[%s295 + $0x111] sm:$0xff] %vm286, %v4799
        %4832 = vst.msk [vmem:[%s295 + $0x121] sm:$0xff] %vm286, %v4800
        %4833 = vst.msk [vmem:[%s295 + $0x129] sm:$0xff] %vm286, %v4801
        %4834 = vst.msk [vmem:[%s295 + $0x139] sm:$0xff] %vm286, %v4802
        %4835 = vst.msk [vmem:[%s295 + $0x141] sm:$0xff] %vm286, %v4803
        %4836 = vst.msk [vmem:[%s295 + $0x151] sm:$0xff] %vm286, %v4804
        %4837 = vst.msk [vmem:[%s295 + $0x159] sm:$0xff] %vm286, %v4805
        %4838 = vst.msk [vmem:[%s295 + $0x169] sm:$0xff] %vm286, %v4806
        %4839 = vst.msk [vmem:[%s295 + $0x171] sm:$0xff] %vm286, %v4807
        %s4840 = scalar_lea.vmem %s295, 1 [#allocation3]
        %v4841 = vld [vmem:[%s4840] ss:$2 sm:$0xff]
        %s4842 = scalar_lea.vmem %s295, 25 [#allocation3]
        %v4843 = vld [vmem:[%s4842] ss:$2 sm:$0xff]
        %s4844 = scalar_lea.vmem %s295, 49 [#allocation3]
        %v4845 = vld [vmem:[%s4844] ss:$2 sm:$0xff]
        %s4846 = scalar_lea.vmem %s295, 73 [#allocation3]
        %v4847 = vld [vmem:[%s4846] ss:$2 sm:$0xff]
        %s4848 = scalar_lea.vmem %s295, 97 [#allocation3]
        %v4849 = vld [vmem:[%s4848] ss:$2 sm:$0xff]
        %s4850 = scalar_lea.vmem %s295, 121 [#allocation3]
        %v4851 = vld [vmem:[%s4850] ss:$2 sm:$0xff]
        %s4852 = scalar_lea.vmem %s295, 145 [#allocation3]
        %v4853 = vld [vmem:[%s4852] ss:$2 sm:$0xff]
        %s4854 = scalar_lea.vmem %s295, 169 [#allocation3]
        %v4855 = vld [vmem:[%s4854] ss:$2 sm:$0xff]
        %s4856 = scalar_lea.vmem %s295, 193 [#allocation3]
        %v4857 = vld [vmem:[%s4856] ss:$2 sm:$0xff]
        %s4858 = scalar_lea.vmem %s295, 217 [#allocation3]
        %v4859 = vld [vmem:[%s4858] ss:$2 sm:$0xff]
        %s4860 = scalar_lea.vmem %s295, 241 [#allocation3]
        %v4861 = vld [vmem:[%s4860] ss:$2 sm:$0xff]
        %s4862 = scalar_lea.vmem %s295, 265 [#allocation3]
        %v4863 = vld [vmem:[%s4862] ss:$2 sm:$0xff]
        %s4864 = scalar_lea.vmem %s295, 289 [#allocation3]
        %v4865 = vld [vmem:[%s4864] ss:$2 sm:$0xff]
        %s4866 = scalar_lea.vmem %s295, 313 [#allocation3]
        %v4867 = vld [vmem:[%s4866] ss:$2 sm:$0xff]
        %s4868 = scalar_lea.vmem %s295, 337 [#allocation3]
        %v4869 = vld [vmem:[%s4868] ss:$2 sm:$0xff]
        %s4870 = scalar_lea.vmem %s295, 361 [#allocation3]
        %v4871 = vld [vmem:[%s4870] ss:$2 sm:$0xff]
        %s4872 = scalar_lea.vmem %s295, 2 [#allocation3]
        %v4873 = vld [vmem:[%s4872] ss:$2 sm:$0xff]
        %s4874 = scalar_lea.vmem %s295, 26 [#allocation3]
        %v4875 = vld [vmem:[%s4874] ss:$2 sm:$0xff]
        %s4876 = scalar_lea.vmem %s295, 50 [#allocation3]
        %v4877 = vld [vmem:[%s4876] ss:$2 sm:$0xff]
        %s4878 = scalar_lea.vmem %s295, 74 [#allocation3]
        %v4879 = vld [vmem:[%s4878] ss:$2 sm:$0xff]
        %s4880 = scalar_lea.vmem %s295, 98 [#allocation3]
        %v4881 = vld [vmem:[%s4880] ss:$2 sm:$0xff]
        %s4882 = scalar_lea.vmem %s295, 122 [#allocation3]
        %v4883 = vld [vmem:[%s4882] ss:$2 sm:$0xff]
        %s4884 = scalar_lea.vmem %s295, 146 [#allocation3]
        %v4885 = vld [vmem:[%s4884] ss:$2 sm:$0xff]
        %s4886 = scalar_lea.vmem %s295, 170 [#allocation3]
        %v4887 = vld [vmem:[%s4886] ss:$2 sm:$0xff]
        %s4888 = scalar_lea.vmem %s295, 194 [#allocation3]
        %v4889 = vld [vmem:[%s4888] ss:$2 sm:$0xff]
        %s4890 = scalar_lea.vmem %s295, 218 [#allocation3]
        %v4891 = vld [vmem:[%s4890] ss:$2 sm:$0xff]
        %s4892 = scalar_lea.vmem %s295, 242 [#allocation3]
        %v4893 = vld [vmem:[%s4892] ss:$2 sm:$0xff]
        %s4894 = scalar_lea.vmem %s295, 266 [#allocation3]
        %v4895 = vld [vmem:[%s4894] ss:$2 sm:$0xff]
        %s4896 = scalar_lea.vmem %s295, 290 [#allocation3]
        %v4897 = vld [vmem:[%s4896] ss:$2 sm:$0xff]
        %s4898 = scalar_lea.vmem %s295, 314 [#allocation3]
        %v4899 = vld [vmem:[%s4898] ss:$2 sm:$0xff]
        %s4900 = scalar_lea.vmem %s295, 338 [#allocation3]
        %v4901 = vld [vmem:[%s4900] ss:$2 sm:$0xff]
        %s4902 = scalar_lea.vmem %s295, 362 [#allocation3]
        %v4903 = vld [vmem:[%s4902] ss:$2 sm:$0xff]
        %v4904 = vmax.f32 %v4841, %v4873
        %v4905 = vmax.f32 %v4843, %v4875
        %v4906 = vmax.f32 %v4845, %v4877
        %v4907 = vmax.f32 %v4847, %v4879
        %v4908 = vmax.f32 %v4849, %v4881
        %v4909 = vmax.f32 %v4851, %v4883
        %v4910 = vmax.f32 %v4853, %v4885
        %v4911 = vmax.f32 %v4855, %v4887
        %v4912 = vmax.f32 %v4857, %v4889
        %v4913 = vmax.f32 %v4859, %v4891
        %v4914 = vmax.f32 %v4861, %v4893
        %v4915 = vmax.f32 %v4863, %v4895
        %v4916 = vmax.f32 %v4865, %v4897
        %v4917 = vmax.f32 %v4867, %v4899
        %v4918 = vmax.f32 %v4869, %v4901
        %v4919 = vmax.f32 %v4871, %v4903
        %4920 = vst.msk [vmem:[#allocation4] sm:$0x1] %vm296, %v4904
        %4921 = vst.msk [vmem:[#allocation4 + $0x8] sm:$0x1] %vm296, %v4905
        %4922 = vst.msk [vmem:[#allocation4 + $0x10] sm:$0x1] %vm296, %v4906
        %4923 = vst.msk [vmem:[#allocation4 + $0x18] sm:$0x1] %vm296, %v4907
        %4924 = vst.msk [vmem:[#allocation4 + $0x20] sm:$0x1] %vm296, %v4908
        %4925 = vst.msk [vmem:[#allocation4 + $0x28] sm:$0x1] %vm296, %v4909
        %4926 = vst.msk [vmem:[#allocation4 + $0x30] sm:$0x1] %vm296, %v4910
        %4927 = vst.msk [vmem:[#allocation4 + $0x38] sm:$0x1] %vm296, %v4911
        %4928 = vst.msk [vmem:[#allocation4 + $0x40] sm:$0x1] %vm296, %v4912
        %4929 = vst.msk [vmem:[#allocation4 + $0x48] sm:$0x1] %vm296, %v4913
        %4930 = vst.msk [vmem:[#allocation4 + $0x50] sm:$0x1] %vm296, %v4914
        %4931 = vst.msk [vmem:[#allocation4 + $0x58] sm:$0x1] %vm296, %v4915
        %4932 = vst.msk [vmem:[#allocation4 + $0x60] sm:$0x1] %vm296, %v4916
        %4933 = vst.msk [vmem:[#allocation4 + $0x68] sm:$0x1] %vm296, %v4917
        %4934 = vst.msk [vmem:[#allocation4 + $0x70] sm:$0x1] %vm296, %v4918
        %4935 = vst.msk [vmem:[#allocation4 + $0x78] sm:$0x1] %vm296, %v4919
        %v4952 = vrot.slane %v4873, 7
        %v4953 = vrot.slane %v4875, 7
        %v4954 = vrot.slane %v4877, 7
        %v4955 = vrot.slane %v4879, 7
        %v4956 = vrot.slane %v4881, 7
        %v4957 = vrot.slane %v4883, 7
        %v4958 = vrot.slane %v4885, 7
        %v4959 = vrot.slane %v4887, 7
        %v4960 = vrot.slane %v4889, 7
        %v4961 = vrot.slane %v4891, 7
        %v4962 = vrot.slane %v4893, 7
        %v4963 = vrot.slane %v4895, 7
        %v4964 = vrot.slane %v4897, 7
        %v4965 = vrot.slane %v4899, 7
        %v4966 = vrot.slane %v4901, 7
        %v4967 = vrot.slane %v4903, 7
        %v4984 = vmax.f32 %v4904, %v4952
        %v4985 = vmax.f32 %v4905, %v4953
        %v4986 = vmax.f32 %v4906, %v4954
        %v4987 = vmax.f32 %v4907, %v4955
        %v4988 = vmax.f32 %v4908, %v4956
        %v4989 = vmax.f32 %v4909, %v4957
        %v4990 = vmax.f32 %v4910, %v4958
        %v4991 = vmax.f32 %v4911, %v4959
        %v4992 = vmax.f32 %v4912, %v4960
        %v4993 = vmax.f32 %v4913, %v4961
        %v4994 = vmax.f32 %v4914, %v4962
        %v4995 = vmax.f32 %v4915, %v4963
        %v4996 = vmax.f32 %v4916, %v4964
        %v4997 = vmax.f32 %v4917, %v4965
        %v4998 = vmax.f32 %v4918, %v4966
        %v4999 = vmax.f32 %v4919, %v4967
        %vm5000 = vcmask 64513
        %5001 = vst.msk [vmem:[#allocation4] sm:$0xfe] %vm5000, %v4984
        %5002 = vst.msk [vmem:[#allocation4 + $0x8] sm:$0xfe] %vm5000, %v4985
        %5003 = vst.msk [vmem:[#allocation4 + $0x10] sm:$0xfe] %vm5000, %v4986
        %5004 = vst.msk [vmem:[#allocation4 + $0x18] sm:$0xfe] %vm5000, %v4987
        %5005 = vst.msk [vmem:[#allocation4 + $0x20] sm:$0xfe] %vm5000, %v4988
        %5006 = vst.msk [vmem:[#allocation4 + $0x28] sm:$0xfe] %vm5000, %v4989
        %5007 = vst.msk [vmem:[#allocation4 + $0x30] sm:$0xfe] %vm5000, %v4990
        %5008 = vst.msk [vmem:[#allocation4 + $0x38] sm:$0xfe] %vm5000, %v4991
        %5009 = vst.msk [vmem:[#allocation4 + $0x40] sm:$0xfe] %vm5000, %v4992
        %5010 = vst.msk [vmem:[#allocation4 + $0x48] sm:$0xfe] %vm5000, %v4993
        %5011 = vst.msk [vmem:[#allocation4 + $0x50] sm:$0xfe] %vm5000, %v4994
        %5012 = vst.msk [vmem:[#allocation4 + $0x58] sm:$0xfe] %vm5000, %v4995
        %5013 = vst.msk [vmem:[#allocation4 + $0x60] sm:$0xfe] %vm5000, %v4996
        %5014 = vst.msk [vmem:[#allocation4 + $0x68] sm:$0xfe] %vm5000, %v4997
        %5015 = vst.msk [vmem:[#allocation4 + $0x70] sm:$0xfe] %vm5000, %v4998
        %5016 = vst.msk [vmem:[#allocation4 + $0x78] sm:$0xfe] %vm5000, %v4999
        %v5017 = vld [vmem:[#allocation4] sm:$0xff]
        %v5018 = vld [vmem:[#allocation4 + $0x10] sm:$0xff]
        %v5019 = vld [vmem:[#allocation4 + $0x20] sm:$0xff]
        %v5020 = vld [vmem:[#allocation4 + $0x30] sm:$0xff]
        %v5021 = vld [vmem:[#allocation4 + $0x40] sm:$0xff]
        %v5022 = vld [vmem:[#allocation4 + $0x50] sm:$0xff]
        %v5023 = vld [vmem:[#allocation4 + $0x60] sm:$0xff]
        %v5024 = vld [vmem:[#allocation4 + $0x70] sm:$0xff]
        %s5025 = scalar_lea.vmem [#allocation4], 8
        %v5026 = vld [vmem:[%s5025] sm:$0xff]
        %v5027 = vld [vmem:[%s5025 + $0x10] sm:$0xff]
        %v5028 = vld [vmem:[%s5025 + $0x20] sm:$0xff]
        %v5029 = vld [vmem:[%s5025 + $0x30] sm:$0xff]
        %v5030 = vld [vmem:[%s5025 + $0x40] sm:$0xff]
        %v5031 = vld [vmem:[%s5025 + $0x50] sm:$0xff]
        %v5032 = vld [vmem:[%s5025 + $0x60] sm:$0xff]
        %v5033 = vld [vmem:[%s5025 + $0x70] sm:$0xff]
        %v5034 = vmax.f32 %v5017, %v5026
        %v5035 = vmax.f32 %v5018, %v5027
        %v5036 = vmax.f32 %v5019, %v5028
        %v5037 = vmax.f32 %v5020, %v5029
        %v5038 = vmax.f32 %v5021, %v5030
        %v5039 = vmax.f32 %v5022, %v5031
        %v5040 = vmax.f32 %v5023, %v5032
        %v5041 = vmax.f32 %v5024, %v5033
        %v5042 = vadd.f32 %v5034, %v2567
        %5043 = vst.msk [vmem:[%s217] sm:$0xff] %vm286, %v5042
        %v5044 = vmax.f32 %v5035, %v5026
        %v5045 = vmax.f32 %v5036, %v5027
        %v5046 = vmax.f32 %v5037, %v5028
        %v5047 = vmax.f32 %v5038, %v5029
        %v5048 = vmax.f32 %v5039, %v5030
        %v5049 = vmax.f32 %v5040, %v5031
        %v5050 = vmax.f32 %v5041, %v5032
        %v5051 = vadd.f32 %v5044, %v2568
        %v5052 = vadd.f32 %v5045, %v2569
        %v5053 = vadd.f32 %v5046, %v2570
        %v5054 = vadd.f32 %v5047, %v2571
        %v5055 = vadd.f32 %v5048, %v2572
        %v5056 = vadd.f32 %v5049, %v2573
        %v5057 = vadd.f32 %v5050, %v2574
        %s5058 = scalar_lea.vmem %s217, 8 [#allocation5]
        %5059 = vst.msk [vmem:[%s5058] sm:$0xff] %vm286, %v5051
        %5060 = vst.msk [vmem:[%s5058 + $0x8] sm:$0xff] %vm286, %v5052
        %5061 = vst.msk [vmem:[%s5058 + $0x10] sm:$0xff] %vm286, %v5053
        %5062 = vst.msk [vmem:[%s5058 + $0x18] sm:$0xff] %vm286, %v5054
        %5063 = vst.msk [vmem:[%s5058 + $0x20] sm:$0xff] %vm286, %v5055
        %5064 = vst.msk [vmem:[%s5058 + $0x28] sm:$0xff] %vm286, %v5056
        %5065 = vst.msk [vmem:[%s5058 + $0x30] sm:$0xff] %vm286, %v5057
        %s5066 = sand.u32 %s137, 1
        %s5067 = scalar_lea.sflag [#allocation6], %s5066
        %s5068 = sand.u32 %s137, 1
        %s5069 = smul.addr %s5068, 64
        %s5070 = scalar_lea.vmem [#allocation5], %s5069
        // Predicated region
        $region41: #{tpu_custom_call.1} parent=39 // pred_check
          %p5071 = pneg %p147
        $region42: #{tpu_custom_call.1} parent=39 // pred_check_branch
          %5073 = sbr.rel (%p5071) target = $region44
        $region43: #{tpu_custom_call.1} parent=39 // pred_region
          %s5075 = ssub.s32 1024, 1024
          %5076 = vsyncadd %s5067, %s5075
          %s5077 = smul.addr %s19, 8
          %s5078 = smul.addr %s5077, 128
          %s5079 = scalar_lea.hbm %s5, %s5078
          %s5080 = sshll.u32 %s5070, 4
          %s5081 = int_to_ptr.vmem [resolvable:$true] %s5080
          %5086 = dma.vmem_to_hbm [thread:$0]  %s5081, 1024, %s5079, %s5067, 128, 128, 8
        $region44: #{tpu_custom_call.1} parent=39 // pred_fallthru
          _
      $region40: #{tpu_custom_call.1} parent=5 // pred_fallthru
        _
      %p5087 = scmp.le.s32.totalorder 2, %s14
      // Predicated region
      $region45: #{tpu_custom_call.1} parent=5 // pred_check
        %p5088 = pneg %p5087
      $region46: #{tpu_custom_call.1} parent=5 // pred_check_branch
        %5090 = sbr.rel (%p5088) target = $region48
      $region47: #{tpu_custom_call.1} parent=5 // pred_region
        %s5091 = ssub.s32 %s14, 2
        // Predicated region
        $region49: #{tpu_custom_call.1} parent=47 // pred_check
          %p5092 = pneg %p153
        $region50: #{tpu_custom_call.1} parent=47 // pred_check_branch
          %5094 = sbr.rel (%p5092) target = $region52
        $region51: #{tpu_custom_call.1} parent=47 // pred_region
          %s5095 = sand.u32 %s138, 1
          %s5096 = scalar_lea.sflag [#allocation6], %s5095
          %s5097 = sand.u32 %s138, 1
          %s5098 = smul.addr %s5097, 64
          %s5099 = scalar_lea.vmem [#allocation5], %s5098
          %5100 = dma.done %s5096, 1024
        $region52: #{tpu_custom_call.1} parent=47 // pred_fallthru
          _
      $region48: #{tpu_custom_call.1} parent=5 // pred_fallthru
        _
    $region6: #{tpu_custom_call.1} parent=1 // loop_footer
      %s18 = sadd.s32 1, %s14
    $region7: #{tpu_custom_call.1} parent=1 // loop_footer_branch
      %13 = sbr.rel target = $region3
    $region8: #{tpu_custom_call.1} parent=1 // loop_exit
      _
    %5101 = vsyncpa [#allocation6], 1
    %s5102 = scalar_lea.sflag [#allocation6], 1
    %5103 = vsyncpa %s5102, 1

</llo_original>
